<compile_context>
chip_gen: v6e
topology: v6e:2x2x1
jax: 0.10.0
libtpu: 0.0.40
codegen_flags: <defaults>
</compile_context>

<pallas_src>
import numpy as np
import jax
import jax.numpy as jnp
from jax.experimental import pallas as pl
from jax.experimental.pallas import tpu as pltpu

K_TEMPORAL = 5   # (1, 5) temporal conv kernels
K_POOL = 7
S_POOL = 3
BN_EPS = 1e-5
F1 = 25
N_FILTS = (25, 50, 50, 100)


# ------------------------------ shape helpers ------------------------------

def _pad16(n):
    """Pad a channel count to the bf16 sublane tile (16 rows)."""
    return ((n + 15) // 16) * 16


def _conv_widths(T):
    """Time-axis widths through the 4 blocks: (conv_out, pool_out) per block."""
    widths = []
    w = T
    for _ in range(4):
        wc = w - K_TEMPORAL + 1
        p = (wc - K_POOL) // S_POOL + 1
        widths.append((wc, p))
        w = p
    return widths


def _pool_mask_np(wc):
    """(wc, P) 0/1 mask: y @ mask == 7 * AvgPool1d(kernel=7, stride=3)(y)."""
    p = (wc - K_POOL) // S_POOL + 1
    rows = np.arange(wc)[:, None]
    cols = np.arange(p)[None, :]
    m = (rows >= S_POOL * cols) & (rows < S_POOL * cols + K_POOL)
    return m.astype(np.float32)


# ------------------------------- fused kernel -------------------------------

def _conv_elu(x_bf16, w, b, wc):
    """conv(1,K) as one im2col MXU dot (conv/BN/pool-divisor fold) + bias -> ELU.

    x_bf16: (Cin_pad, Win) bf16, w: (Cout_pad, K*Cin_pad) bf16, b: (Cout_pad, 1) f32.
    Returns (Cout_pad, wc) f32.  Channel pads are zero rows/cols -> outputs 0.
    """
    # (K*Cin_pad, wc): row dw*Cin_pad + c holds x[c, t+dw] (matches weight packing).
    # Cin_pad is a multiple of 16, so the axis-0 concat is bf16 tile-aligned.
    xs = jnp.concatenate(
        [x_bf16[:, dw:dw + wc] for dw in range(K_TEMPORAL)], axis=0)
    y = jnp.dot(w, xs, preferred_element_type=jnp.float32) + b      # (Cout_pad, wc) f32
    # ELU(alpha=1); exp-1 kept (instead of expm1) for robust Mosaic lowering —
    # the tiny cancellation near 0- is far below the bf16 noise floor.
    return jnp.where(y > 0.0, y, jnp.exp(y) - 1.0)


def _dcn_fused_kernel(x_ref,
                      w1_ref, b1_ref, p1_ref,
                      w2_ref, b2_ref, p2_ref,
                      w3_ref, b3_ref, p3_ref,
                      w4_ref, b4_ref, p4_ref,
                      mask_ref, o_ref):
    """Whole DCN forward for one batch element; intermediates never touch HBM."""
    x = x_ref[0]                                                     # (C0_pad, T) bf16

    # blocks 1-3: conv+ELU, then sum-pool as a 0/1 bf16 mask matmul (1/7 is
    # folded into the next block's conv weights).
    a = _conv_elu(x, w1_ref[...], b1_ref[...], p1_ref.shape[0])
    y = jnp.dot(a.astype(jnp.bfloat16), p1_ref[...], preferred_element_type=jnp.float32)
    a = _conv_elu(y.astype(jnp.bfloat16), w2_ref[...], b2_ref[...], p2_ref.shape[0])
    y = jnp.dot(a.astype(jnp.bfloat16), p2_ref[...], preferred_element_type=jnp.float32)
    a = _conv_elu(y.astype(jnp.bfloat16), w3_ref[...], b3_ref[...], p3_ref.shape[0])
    y = jnp.dot(a.astype(jnp.bfloat16), p3_ref[...], preferred_element_type=jnp.float32)

    # block 4: conv+ELU, then pool + nn.Flatten fused into one lane-dense row:
    #   acol[c, j] = sum_w a4[c, w] * pool4[w, j % P4]  (pool columns tiled)
    #   flat[j]    = acol[j // P4, j] / 7               (mask-select + reduce)
    a = _conv_elu(y.astype(jnp.bfloat16), w4_ref[...], b4_ref[...], p4_ref.shape[0])
    acol = jnp.dot(a.astype(jnp.bfloat16), p4_ref[...],
                   preferred_element_type=jnp.float32)               # (C4_pad, nflat)
    flat = jnp.sum(acol * mask_ref[...], axis=0, keepdims=True) * (1.0 / K_POOL)
    o_ref[0] = flat                                                  # (1, nflat) f32


def _full_spec(arr):
    nd = arr.ndim
    return pl.BlockSpec(arr.shape, lambda b: (0,) * nd)   # grid-resident constant


def _dcn_forward(x, params):
    B, nchans, T = x.shape
    c0 = _pad16(nchans)
    x = x.astype(jnp.bfloat16)                 # MXU operand; halves the input DMA
    if c0 != nchans:
        x = jnp.pad(x, ((0, 0), (0, c0 - nchans), (0, 0)))

    widths = _conv_widths(T)
    cout4 = N_FILTS[-1]
    p4 = widths[-1][1]
    nflat = cout4 * p4
    c4p = _pad16(cout4)

    # Host-side (numpy) constants: constant-fold under jit, DMA'd once per launch.
    pools = []
    for i, (wc, _) in enumerate(widths):
        m = _pool_mask_np(wc)                          # 0/1 sum-pool mask
        if i == 3:
            m = np.tile(m, (1, cout4))                 # (wc4, nflat): col c*P4+t -> pool[:, t]
        pools.append(jnp.asarray(m, jnp.bfloat16))
    fm = np.zeros((c4p, nflat), np.float32)
    fm[:cout4, :] = np.repeat(np.eye(cout4, dtype=np.float32), p4, axis=1)  # [c == j//P4]
    flat_mask = jnp.asarray(fm)

    operands = [x]
    in_specs = [pl.BlockSpec((1, c0, T), lambda b: (b, 0, 0))]
    for i in range(4):
        for arr in (params[f"w{i + 1}"], params[f"b{i + 1}"], pools[i]):
            operands.append(arr)
            in_specs.append(_full_spec(arr))
    operands.append(flat_mask)
    in_specs.append(_full_spec(flat_mask))

    out = pl.pallas_call(
        _dcn_fused_kernel,
        out_shape=jax.ShapeDtypeStruct((B, 1, nflat), jnp.float32),
        grid=(B,),
        in_specs=in_specs,
        out_specs=pl.BlockSpec((1, 1, nflat), lambda b: (b, 0, 0)),   # lane-dense store
        compiler_params=pltpu.CompilerParams(dimension_semantics=("parallel",)),
    )(*operands)
    return out.reshape(B, nflat)        # unit-dim squeeze only (metadata, no relayout)


dcn_forward = jax.jit(_dcn_forward)


# --------------------------- parameter preparation --------------------------

def renorm_max_l2(w, max_norm=2.0):
    """torch.renorm(w, p=2, dim=0, maxnorm=max_norm) — per output filter."""
    flat = w.reshape(w.shape[0], -1)
    norms = jnp.sqrt(jnp.sum(flat * flat, axis=1, keepdims=True))
    factor = jnp.where(norms > max_norm, max_norm / jnp.maximum(norms, 1e-30), 1.0)
    return (flat * factor).reshape(w.shape)


def _bn_eval_affine(c):
    """BatchNorm2d eval-mode defaults: gamma=1, beta=0, mean=0, var=1."""
    gamma = np.ones((c,), np.float32)
    beta = np.zeros((c,), np.float32)
    mean = np.zeros((c,), np.float32)
    var = np.ones((c,), np.float32)
    scale = gamma / np.sqrt(var + BN_EPS)
    shift = beta - mean * scale
    return scale, shift


def _pack_conv(w_fold, b_fold, cin, cin_pad, cout, cout_pad):
    """(Cout, Cin, K) folded weight -> (Cout_pad, K*Cin_pad) bf16, row = dw*Cin_pad + c."""
    w = np.zeros((cout_pad, K_TEMPORAL * cin_pad), np.float32)
    for dw in range(K_TEMPORAL):
        w[:cout, dw * cin_pad:dw * cin_pad + cin] = w_fold[:, :, dw]
    b = np.zeros((cout_pad, 1), np.float32)
    b[:cout, 0] = b_fold
    return jnp.asarray(w, jnp.bfloat16), jnp.asarray(b)


def init_params(key, nchans):
    ks = jax.random.split(key, 6)
    # PyTorch param shapes, deterministic init, then the max_norm=2 renorm
    # (Conv2dWithConstraint renorms at forward; applying once to fixed weights
    # is identical).
    w1a = np.asarray(renorm_max_l2(0.3 * jax.random.normal(ks[0], (F1, 1, 1, K_TEMPORAL), jnp.float32)))
    b1a = np.asarray(0.1 * jax.random.normal(ks[1], (F1,), jnp.float32))
    w1b = np.asarray(renorm_max_l2(0.3 * jax.random.normal(ks[2], (F1, F1, nchans, 1), jnp.float32)))
    mids = [np.asarray(renorm_max_l2(
                0.3 * jax.random.normal(ks[3 + j], (cout, cin, 1, K_TEMPORAL), jnp.float32)))
            for j, (cin, cout) in enumerate(zip(N_FILTS, N_FILTS[1:]))]

    bn = [_bn_eval_affine(c) for c in N_FILTS]
    params = {}

    # ---- block 1: fold conv1 (1->25,(1,5)) + bias into the (nchans,1) spatial conv,
    #      then fold BN1 (no 1/7 here: block-1 input is not pooled).
    #   Weff[f,h,k] = sum_ci w1b[f,ci,h] * w1a[ci,k] ;  beff[f] = sum_{ci,h} w1b[f,ci,h]*b1a[ci]
    w1b2 = w1b[:, :, :, 0]                               # (F1, F1_in, nchans)
    w1a2 = w1a[:, 0, 0, :]                               # (F1_in, K)
    weff = np.einsum('fch,ck->fhk', w1b2, w1a2)          # (F1, nchans, K)
    beff = np.einsum('fch,c->f', w1b2, b1a)              # (F1,)
    s1, sh1 = bn[0]
    params["w1"], params["b1"] = _pack_conv(s1[:, None, None] * weff, s1 * beff + sh1,
                                            nchans, _pad16(nchans), F1, _pad16(F1))

    # ---- blocks 2-4: BN scale and the previous block's 1/7 pool divisor folded
    #      into the weights; BN shift becomes the bias (unaffected by the 1/7).
    prev_pad = _pad16(F1)
    for i, (w, (s, sh), cin, cout) in enumerate(
            zip(mids, bn[1:], N_FILTS[:-1], N_FILTS[1:]), start=2):
        wf = (s[:, None, None] * w[:, :, 0, :]) * (1.0 / K_POOL)     # (Cout, Cin, K)
        params[f"w{i}"], params[f"b{i}"] = _pack_conv(wf, sh, cin, prev_pad,
                                                      cout, _pad16(cout))
        prev_pad = _pad16(cout)
    return params


# ----------------------------------- main -----------------------------------

if __name__ == "__main__":
    B, nchans, ntimes = 2, 8, 500       # small shapes; 500 time steps survive all 4 blocks
    key = jax.random.PRNGKey(0)
    kx, kp = jax.random.split(key)
    x = jax.random.normal(kx, (B, nchans, ntimes), jnp.float32)
    params = init_params(kp, nchans)

    out = dcn_forward(x, params)
    out = jax.block_until_ready(out)

    # widths: 500 ->(conv)496 ->(pool)164 ->160->52 ->48->14 ->10->2 ; 100 ch * 2 = 200
    assert out.shape == (B, 200), out.shape
    assert bool(jnp.all(jnp.isfinite(out)))
    print("KERNEL_OK")
</pallas_src>

<mosaic_0001>
module attributes {stable_mosaic.version = 11 : i64} {
  func.func @_dcn_fused_kernel(%arg0: i32, %arg1: memref<1x16x500xbf16, #tpu.memory_space<vmem>>, %arg2: memref<32x80xbf16, #tpu.memory_space<vmem>>, %arg3: memref<32x1xf32, #tpu.memory_space<vmem>>, %arg4: memref<496x164xbf16, #tpu.memory_space<vmem>>, %arg5: memref<64x160xbf16, #tpu.memory_space<vmem>>, %arg6: memref<64x1xf32, #tpu.memory_space<vmem>>, %arg7: memref<160x52xbf16, #tpu.memory_space<vmem>>, %arg8: memref<64x320xbf16, #tpu.memory_space<vmem>>, %arg9: memref<64x1xf32, #tpu.memory_space<vmem>>, %arg10: memref<48x14xbf16, #tpu.memory_space<vmem>>, %arg11: memref<112x320xbf16, #tpu.memory_space<vmem>>, %arg12: memref<112x1xf32, #tpu.memory_space<vmem>>, %arg13: memref<10x200xbf16, #tpu.memory_space<vmem>>, %arg14: memref<112x200xf32, #tpu.memory_space<vmem>>, %arg15: memref<1x1x200xf32, #tpu.memory_space<vmem>>) attributes {dimension_semantics = [#tpu.dimension_semantics<parallel>], iteration_bounds = array<i64: 2>, scalar_prefetch = 0 : i64, scratch_operands = 0 : i64, tpu.core_type = #tpu.core_type<tc>, window_params = [{transform_indices = @transform_0, window_bounds = array<i64: 1, 16, 500>}, {pipeline_mode = #tpu.pipeline_mode<synchronous>, transform_indices = @transform_1, window_bounds = array<i64: 32, 80>}, {pipeline_mode = #tpu.pipeline_mode<synchronous>, transform_indices = @transform_2, window_bounds = array<i64: 32, 1>}, {pipeline_mode = #tpu.pipeline_mode<synchronous>, transform_indices = @transform_3, window_bounds = array<i64: 496, 164>}, {pipeline_mode = #tpu.pipeline_mode<synchronous>, transform_indices = @transform_4, window_bounds = array<i64: 64, 160>}, {pipeline_mode = #tpu.pipeline_mode<synchronous>, transform_indices = @transform_5, window_bounds = array<i64: 64, 1>}, {pipeline_mode = #tpu.pipeline_mode<synchronous>, transform_indices = @transform_6, window_bounds = array<i64: 160, 52>}, {pipeline_mode = #tpu.pipeline_mode<synchronous>, transform_indices = @transform_7, window_bounds = array<i64: 64, 320>}, {pipeline_mode = #tpu.pipeline_mode<synchronous>, transform_indices = @transform_8, window_bounds = array<i64: 64, 1>}, {pipeline_mode = #tpu.pipeline_mode<synchronous>, transform_indices = @transform_9, window_bounds = array<i64: 48, 14>}, {pipeline_mode = #tpu.pipeline_mode<synchronous>, transform_indices = @transform_10, window_bounds = array<i64: 112, 320>}, {pipeline_mode = #tpu.pipeline_mode<synchronous>, transform_indices = @transform_11, window_bounds = array<i64: 112, 1>}, {pipeline_mode = #tpu.pipeline_mode<synchronous>, transform_indices = @transform_12, window_bounds = array<i64: 10, 200>}, {pipeline_mode = #tpu.pipeline_mode<synchronous>, transform_indices = @transform_13, window_bounds = array<i64: 112, 200>}, {transform_indices = @transform_14, window_bounds = array<i64: 1, 1, 200>}]} {
    %c0 = arith.constant 0 : index
    %c0_0 = arith.constant 0 : index
    %c0_1 = arith.constant 0 : index
    %0 = vector.load %arg1[%c0, %c0_0, %c0_1] : memref<1x16x500xbf16, #tpu.memory_space<vmem>>, vector<1x16x500xbf16>
    %1 = vector.shape_cast %0 : vector<1x16x500xbf16> to vector<16x500xbf16>
    %c0_2 = arith.constant 0 : index
    %c0_3 = arith.constant 0 : index
    %2 = vector.load %arg2[%c0_2, %c0_3] : memref<32x80xbf16, #tpu.memory_space<vmem>>, vector<32x80xbf16>
    %c0_4 = arith.constant 0 : index
    %c0_5 = arith.constant 0 : index
    %3 = vector.load %arg3[%c0_4, %c0_5] : memref<32x1xf32, #tpu.memory_space<vmem>>, vector<32x1xf32>
    %4 = vector.extract_strided_slice %1 {offsets = [0, 0], sizes = [16, 496], strides = [1, 1]} : vector<16x500xbf16> to vector<16x496xbf16>
    %5 = vector.extract_strided_slice %1 {offsets = [0, 1], sizes = [16, 496], strides = [1, 1]} : vector<16x500xbf16> to vector<16x496xbf16>
    %6 = vector.extract_strided_slice %1 {offsets = [0, 2], sizes = [16, 496], strides = [1, 1]} : vector<16x500xbf16> to vector<16x496xbf16>
    %7 = vector.extract_strided_slice %1 {offsets = [0, 3], sizes = [16, 496], strides = [1, 1]} : vector<16x500xbf16> to vector<16x496xbf16>
    %8 = vector.extract_strided_slice %1 {offsets = [0, 4], sizes = [16, 496], strides = [1, 1]} : vector<16x500xbf16> to vector<16x496xbf16>
    %9 = tpu.concatenate %4, %5, %6, %7, %8 in 0 : vector<16x496xbf16>, vector<16x496xbf16>, vector<16x496xbf16>, vector<16x496xbf16>, vector<16x496xbf16> -> vector<80x496xbf16>
    %cst = arith.constant dense<0.000000e+00> : vector<32x496xf32>
    %10 = tpu.matmul %2, %9, %cst {dimension_numbers = #tpu.dot_dimension_numbers<[1], [0], [0], [1], [0, 0, 1, 1], [], []>} : vector<32x80xbf16>, vector<80x496xbf16>, vector<32x496xf32> -> vector<32x496xf32>
    %11 = vector.broadcast %3 : vector<32x1xf32> to vector<32x496xf32>
    %12 = arith.addf %10, %11 : vector<32x496xf32>
    %cst_6 = arith.constant 0.000000e+00 : f32
    %13 = vector.broadcast %cst_6 : f32 to vector<32x496xf32>
    %14 = arith.cmpf ogt, %12, %13 : vector<32x496xf32>
    %15 = math.exp %12 : vector<32x496xf32>
    %cst_7 = arith.constant 1.000000e+00 : f32
    %16 = vector.broadcast %cst_7 : f32 to vector<32x496xf32>
    %17 = arith.subf %15, %16 : vector<32x496xf32>
    %18 = arith.select %14, %12, %17 : vector<32x496xi1>, vector<32x496xf32>
    %19 = arith.truncf %18 : vector<32x496xf32> to vector<32x496xbf16>
    %c0_8 = arith.constant 0 : index
    %c0_9 = arith.constant 0 : index
    %20 = vector.load %arg4[%c0_8, %c0_9] : memref<496x164xbf16, #tpu.memory_space<vmem>>, vector<496x164xbf16>
    %cst_10 = arith.constant dense<0.000000e+00> : vector<32x164xf32>
    %21 = tpu.matmul %19, %20, %cst_10 {dimension_numbers = #tpu.dot_dimension_numbers<[1], [0], [0], [1], [0, 0, 1, 1], [], []>} : vector<32x496xbf16>, vector<496x164xbf16>, vector<32x164xf32> -> vector<32x164xf32>
    %22 = arith.truncf %21 : vector<32x164xf32> to vector<32x164xbf16>
    %c0_11 = arith.constant 0 : index
    %c0_12 = arith.constant 0 : index
    %23 = vector.load %arg5[%c0_11, %c0_12] : memref<64x160xbf16, #tpu.memory_space<vmem>>, vector<64x160xbf16>
    %c0_13 = arith.constant 0 : index
    %c0_14 = arith.constant 0 : index
    %24 = vector.load %arg6[%c0_13, %c0_14] : memref<64x1xf32, #tpu.memory_space<vmem>>, vector<64x1xf32>
    %25 = vector.extract_strided_slice %22 {offsets = [0, 0], sizes = [32, 160], strides = [1, 1]} : vector<32x164xbf16> to vector<32x160xbf16>
    %26 = vector.extract_strided_slice %22 {offsets = [0, 1], sizes = [32, 160], strides = [1, 1]} : vector<32x164xbf16> to vector<32x160xbf16>
    %27 = vector.extract_strided_slice %22 {offsets = [0, 2], sizes = [32, 160], strides = [1, 1]} : vector<32x164xbf16> to vector<32x160xbf16>
    %28 = vector.extract_strided_slice %22 {offsets = [0, 3], sizes = [32, 160], strides = [1, 1]} : vector<32x164xbf16> to vector<32x160xbf16>
    %29 = vector.extract_strided_slice %22 {offsets = [0, 4], sizes = [32, 160], strides = [1, 1]} : vector<32x164xbf16> to vector<32x160xbf16>
    %30 = tpu.concatenate %25, %26, %27, %28, %29 in 0 : vector<32x160xbf16>, vector<32x160xbf16>, vector<32x160xbf16>, vector<32x160xbf16>, vector<32x160xbf16> -> vector<160x160xbf16>
    %cst_15 = arith.constant dense<0.000000e+00> : vector<64x160xf32>
    %31 = tpu.matmul %23, %30, %cst_15 {dimension_numbers = #tpu.dot_dimension_numbers<[1], [0], [0], [1], [0, 0, 1, 1], [], []>} : vector<64x160xbf16>, vector<160x160xbf16>, vector<64x160xf32> -> vector<64x160xf32>
    %32 = vector.broadcast %24 : vector<64x1xf32> to vector<64x160xf32>
    %33 = arith.addf %31, %32 : vector<64x160xf32>
    %cst_16 = arith.constant 0.000000e+00 : f32
    %34 = vector.broadcast %cst_16 : f32 to vector<64x160xf32>
    %35 = arith.cmpf ogt, %33, %34 : vector<64x160xf32>
    %36 = math.exp %33 : vector<64x160xf32>
    %cst_17 = arith.constant 1.000000e+00 : f32
    %37 = vector.broadcast %cst_17 : f32 to vector<64x160xf32>
    %38 = arith.subf %36, %37 : vector<64x160xf32>
    %39 = arith.select %35, %33, %38 : vector<64x160xi1>, vector<64x160xf32>
    %40 = arith.truncf %39 : vector<64x160xf32> to vector<64x160xbf16>
    %c0_18 = arith.constant 0 : index
    %c0_19 = arith.constant 0 : index
    %41 = vector.load %arg7[%c0_18, %c0_19] : memref<160x52xbf16, #tpu.memory_space<vmem>>, vector<160x52xbf16>
    %cst_20 = arith.constant dense<0.000000e+00> : vector<64x52xf32>
    %42 = tpu.matmul %40, %41, %cst_20 {dimension_numbers = #tpu.dot_dimension_numbers<[1], [0], [0], [1], [0, 0, 1, 1], [], []>} : vector<64x160xbf16>, vector<160x52xbf16>, vector<64x52xf32> -> vector<64x52xf32>
    %43 = arith.truncf %42 : vector<64x52xf32> to vector<64x52xbf16>
    %c0_21 = arith.constant 0 : index
    %c0_22 = arith.constant 0 : index
    %44 = vector.load %arg8[%c0_21, %c0_22] : memref<64x320xbf16, #tpu.memory_space<vmem>>, vector<64x320xbf16>
    %c0_23 = arith.constant 0 : index
    %c0_24 = arith.constant 0 : index
    %45 = vector.load %arg9[%c0_23, %c0_24] : memref<64x1xf32, #tpu.memory_space<vmem>>, vector<64x1xf32>
    %46 = vector.extract_strided_slice %43 {offsets = [0, 0], sizes = [64, 48], strides = [1, 1]} : vector<64x52xbf16> to vector<64x48xbf16>
    %47 = vector.extract_strided_slice %43 {offsets = [0, 1], sizes = [64, 48], strides = [1, 1]} : vector<64x52xbf16> to vector<64x48xbf16>
    %48 = vector.extract_strided_slice %43 {offsets = [0, 2], sizes = [64, 48], strides = [1, 1]} : vector<64x52xbf16> to vector<64x48xbf16>
    %49 = vector.extract_strided_slice %43 {offsets = [0, 3], sizes = [64, 48], strides = [1, 1]} : vector<64x52xbf16> to vector<64x48xbf16>
    %50 = vector.extract_strided_slice %43 {offsets = [0, 4], sizes = [64, 48], strides = [1, 1]} : vector<64x52xbf16> to vector<64x48xbf16>
    %51 = tpu.concatenate %46, %47, %48, %49, %50 in 0 : vector<64x48xbf16>, vector<64x48xbf16>, vector<64x48xbf16>, vector<64x48xbf16>, vector<64x48xbf16> -> vector<320x48xbf16>
    %cst_25 = arith.constant dense<0.000000e+00> : vector<64x48xf32>
    %52 = tpu.matmul %44, %51, %cst_25 {dimension_numbers = #tpu.dot_dimension_numbers<[1], [0], [0], [1], [0, 0, 1, 1], [], []>} : vector<64x320xbf16>, vector<320x48xbf16>, vector<64x48xf32> -> vector<64x48xf32>
    %53 = vector.broadcast %45 : vector<64x1xf32> to vector<64x48xf32>
    %54 = arith.addf %52, %53 : vector<64x48xf32>
    %cst_26 = arith.constant 0.000000e+00 : f32
    %55 = vector.broadcast %cst_26 : f32 to vector<64x48xf32>
    %56 = arith.cmpf ogt, %54, %55 : vector<64x48xf32>
    %57 = math.exp %54 : vector<64x48xf32>
    %cst_27 = arith.constant 1.000000e+00 : f32
    %58 = vector.broadcast %cst_27 : f32 to vector<64x48xf32>
    %59 = arith.subf %57, %58 : vector<64x48xf32>
    %60 = arith.select %56, %54, %59 : vector<64x48xi1>, vector<64x48xf32>
    %61 = arith.truncf %60 : vector<64x48xf32> to vector<64x48xbf16>
    %c0_28 = arith.constant 0 : index
    %c0_29 = arith.constant 0 : index
    %62 = vector.load %arg10[%c0_28, %c0_29] : memref<48x14xbf16, #tpu.memory_space<vmem>>, vector<48x14xbf16>
    %cst_30 = arith.constant dense<0.000000e+00> : vector<64x14xf32>
    %63 = tpu.matmul %61, %62, %cst_30 {dimension_numbers = #tpu.dot_dimension_numbers<[1], [0], [0], [1], [0, 0, 1, 1], [], []>} : vector<64x48xbf16>, vector<48x14xbf16>, vector<64x14xf32> -> vector<64x14xf32>
    %64 = arith.truncf %63 : vector<64x14xf32> to vector<64x14xbf16>
    %c0_31 = arith.constant 0 : index
    %c0_32 = arith.constant 0 : index
    %65 = vector.load %arg11[%c0_31, %c0_32] : memref<112x320xbf16, #tpu.memory_space<vmem>>, vector<112x320xbf16>
    %c0_33 = arith.constant 0 : index
    %c0_34 = arith.constant 0 : index
    %66 = vector.load %arg12[%c0_33, %c0_34] : memref<112x1xf32, #tpu.memory_space<vmem>>, vector<112x1xf32>
    %67 = vector.extract_strided_slice %64 {offsets = [0, 0], sizes = [64, 10], strides = [1, 1]} : vector<64x14xbf16> to vector<64x10xbf16>
    %68 = vector.extract_strided_slice %64 {offsets = [0, 1], sizes = [64, 10], strides = [1, 1]} : vector<64x14xbf16> to vector<64x10xbf16>
    %69 = vector.extract_strided_slice %64 {offsets = [0, 2], sizes = [64, 10], strides = [1, 1]} : vector<64x14xbf16> to vector<64x10xbf16>
    %70 = vector.extract_strided_slice %64 {offsets = [0, 3], sizes = [64, 10], strides = [1, 1]} : vector<64x14xbf16> to vector<64x10xbf16>
    %71 = vector.extract_strided_slice %64 {offsets = [0, 4], sizes = [64, 10], strides = [1, 1]} : vector<64x14xbf16> to vector<64x10xbf16>
    %72 = tpu.concatenate %67, %68, %69, %70, %71 in 0 : vector<64x10xbf16>, vector<64x10xbf16>, vector<64x10xbf16>, vector<64x10xbf16>, vector<64x10xbf16> -> vector<320x10xbf16>
    %cst_35 = arith.constant dense<0.000000e+00> : vector<112x10xf32>
    %73 = tpu.matmul %65, %72, %cst_35 {dimension_numbers = #tpu.dot_dimension_numbers<[1], [0], [0], [1], [0, 0, 1, 1], [], []>} : vector<112x320xbf16>, vector<320x10xbf16>, vector<112x10xf32> -> vector<112x10xf32>
    %74 = vector.broadcast %66 : vector<112x1xf32> to vector<112x10xf32>
    %75 = arith.addf %73, %74 : vector<112x10xf32>
    %cst_36 = arith.constant 0.000000e+00 : f32
    %76 = vector.broadcast %cst_36 : f32 to vector<112x10xf32>
    %77 = arith.cmpf ogt, %75, %76 : vector<112x10xf32>
    %78 = math.exp %75 : vector<112x10xf32>
    %cst_37 = arith.constant 1.000000e+00 : f32
    %79 = vector.broadcast %cst_37 : f32 to vector<112x10xf32>
    %80 = arith.subf %78, %79 : vector<112x10xf32>
    %81 = arith.select %77, %75, %80 : vector<112x10xi1>, vector<112x10xf32>
    %82 = arith.truncf %81 : vector<112x10xf32> to vector<112x10xbf16>
    %c0_38 = arith.constant 0 : index
    %c0_39 = arith.constant 0 : index
    %83 = vector.load %arg13[%c0_38, %c0_39] : memref<10x200xbf16, #tpu.memory_space<vmem>>, vector<10x200xbf16>
    %cst_40 = arith.constant dense<0.000000e+00> : vector<112x200xf32>
    %84 = tpu.matmul %82, %83, %cst_40 {dimension_numbers = #tpu.dot_dimension_numbers<[1], [0], [0], [1], [0, 0, 1, 1], [], []>} : vector<112x10xbf16>, vector<10x200xbf16>, vector<112x200xf32> -> vector<112x200xf32>
    %c0_41 = arith.constant 0 : index
    %c0_42 = arith.constant 0 : index
    %85 = vector.load %arg14[%c0_41, %c0_42] : memref<112x200xf32, #tpu.memory_space<vmem>>, vector<112x200xf32>
    %86 = arith.mulf %84, %85 : vector<112x200xf32>
    %cst_43 = arith.constant dense<0.000000e+00> : vector<200xf32>
    %87 = vector.multi_reduction <add>, %86, %cst_43 [0] : vector<112x200xf32> to vector<200xf32>
    %88 = vector.shape_cast %87 : vector<200xf32> to vector<1x200xf32>
    %cst_44 = arith.constant 0.142857149 : f32
    %89 = vector.broadcast %cst_44 : f32 to vector<1x200xf32>
    %90 = arith.mulf %88, %89 : vector<1x200xf32>
    %c0_45 = arith.constant 0 : index
    %c0_46 = arith.constant 0 : index
    %c0_47 = arith.constant 0 : index
    %91 = vector.load %arg15[%c0_45, %c0_46, %c0_47] : memref<1x1x200xf32, #tpu.memory_space<vmem>>, vector<1x1x200xf32>
    %92 = vector.shape_cast %91 : vector<1x1x200xf32> to vector<1x200xf32>
    %93 = vector.shape_cast %90 : vector<1x200xf32> to vector<1x1x200xf32>
    tpu.vector_store %arg15[%c0_45, %c0_46, %c0_47], %93 {strides = array<i32>} : memref<1x1x200xf32, #tpu.memory_space<vmem>>, vector<1x1x200xf32>,
    return
  }
  func.func @transform_0(%arg0: i32) -> (i32, i32, i32) {
    %c0_i32 = arith.constant 0 : i32
    %c0_i32_0 = arith.constant 0 : i32
    %c0_i32_1 = arith.constant 0 : i32
    return %arg0, %c0_i32, %c0_i32_0 : i32, i32, i32
  }
  func.func @transform_1(%arg0: i32) -> (i32, i32) {
    %c0_i32 = arith.constant 0 : i32
    %c0_i32_0 = arith.constant 0 : i32
    %c0_i32_1 = arith.constant 0 : i32
    return %c0_i32, %c0_i32_0 : i32, i32
  }
  func.func @transform_2(%arg0: i32) -> (i32, i32) {
    %c0_i32 = arith.constant 0 : i32
    %c0_i32_0 = arith.constant 0 : i32
    %c0_i32_1 = arith.constant 0 : i32
    return %c0_i32, %c0_i32_0 : i32, i32
  }
  func.func @transform_3(%arg0: i32) -> (i32, i32) {
    %c0_i32 = arith.constant 0 : i32
    %c0_i32_0 = arith.constant 0 : i32
    %c0_i32_1 = arith.constant 0 : i32
    return %c0_i32, %c0_i32_0 : i32, i32
  }
  func.func @transform_4(%arg0: i32) -> (i32, i32) {
    %c0_i32 = arith.constant 0 : i32
    %c0_i32_0 = arith.constant 0 : i32
    %c0_i32_1 = arith.constant 0 : i32
    return %c0_i32, %c0_i32_0 : i32, i32
  }
  func.func @transform_5(%arg0: i32) -> (i32, i32) {
    %c0_i32 = arith.constant 0 : i32
    %c0_i32_0 = arith.constant 0 : i32
    %c0_i32_1 = arith.constant 0 : i32
    return %c0_i32, %c0_i32_0 : i32, i32
  }
  func.func @transform_6(%arg0: i32) -> (i32, i32) {
    %c0_i32 = arith.constant 0 : i32
    %c0_i32_0 = arith.constant 0 : i32
    %c0_i32_1 = arith.constant 0 : i32
    return %c0_i32, %c0_i32_0 : i32, i32
  }
  func.func @transform_7(%arg0: i32) -> (i32, i32) {
    %c0_i32 = arith.constant 0 : i32
    %c0_i32_0 = arith.constant 0 : i32
    %c0_i32_1 = arith.constant 0 : i32
    return %c0_i32, %c0_i32_0 : i32, i32
  }
  func.func @transform_8(%arg0: i32) -> (i32, i32) {
    %c0_i32 = arith.constant 0 : i32
    %c0_i32_0 = arith.constant 0 : i32
    %c0_i32_1 = arith.constant 0 : i32
    return %c0_i32, %c0_i32_0 : i32, i32
  }
  func.func @transform_9(%arg0: i32) -> (i32, i32) {
    %c0_i32 = arith.constant 0 : i32
    %c0_i32_0 = arith.constant 0 : i32
    %c0_i32_1 = arith.constant 0 : i32
    return %c0_i32, %c0_i32_0 : i32, i32
  }
  func.func @transform_10(%arg0: i32) -> (i32, i32) {
    %c0_i32 = arith.constant 0 : i32
    %c0_i32_0 = arith.constant 0 : i32
    %c0_i32_1 = arith.constant 0 : i32
    return %c0_i32, %c0_i32_0 : i32, i32
  }
  func.func @transform_11(%arg0: i32) -> (i32, i32) {
    %c0_i32 = arith.constant 0 : i32
    %c0_i32_0 = arith.constant 0 : i32
    %c0_i32_1 = arith.constant 0 : i32
    return %c0_i32, %c0_i32_0 : i32, i32
  }
  func.func @transform_12(%arg0: i32) -> (i32, i32) {
    %c0_i32 = arith.constant 0 : i32
    %c0_i32_0 = arith.constant 0 : i32
    %c0_i32_1 = arith.constant 0 : i32
    return %c0_i32, %c0_i32_0 : i32, i32
  }
  func.func @transform_13(%arg0: i32) -> (i32, i32) {
    %c0_i32 = arith.constant 0 : i32
    %c0_i32_0 = arith.constant 0 : i32
    %c0_i32_1 = arith.constant 0 : i32
    return %c0_i32, %c0_i32_0 : i32, i32
  }
  func.func @transform_14(%arg0: i32) -> (i32, i32, i32) {
    %c0_i32 = arith.constant 0 : i32
    %c0_i32_0 = arith.constant 0 : i32
    %c0_i32_1 = arith.constant 0 : i32
    return %arg0, %c0_i32, %c0_i32_0 : i32, i32, i32
  }
}

</mosaic_0001>

<llo_original>
// kernel: _dcn_forward.1
$region0: #{_dcn_forward.1}
  #allocation0 [shape = 'u32[]', space=smem, size = 0x4, offset = 0x4, fixed_abs, tag = 'smem constant byte address 0x4 - core index']
  #allocation1 [shape = 'u32[144,128]{1,0:T(1,128)}', space=vmem, size = 0x12000, scoped, tag = 'internal scratch']
  %s0 = inlined_call_operand.vmem [shape: bf16[2,16,500], index: 0, kind: input, shape index: {}]
  %s1 = inlined_call_operand.hbm [shape: bf16[32,80], index: 1, kind: input, shape index: {}]
  %s2 = inlined_call_operand.vmem [shape: f32[32,1], index: 2, kind: input, shape index: {}]
  %s3 = inlined_call_operand.vmem [shape: bf16[496,164], index: 3, kind: input, shape index: {}]
  %s4 = inlined_call_operand.hbm [shape: bf16[64,160], index: 4, kind: input, shape index: {}]
  %s5 = inlined_call_operand.vmem [shape: f32[64,1], index: 5, kind: input, shape index: {}]
  %s6 = inlined_call_operand.vmem [shape: bf16[160,52], index: 6, kind: input, shape index: {}]
  %s7 = inlined_call_operand.hbm [shape: bf16[64,320], index: 7, kind: input, shape index: {}]
  %s8 = inlined_call_operand.vmem [shape: f32[64,1], index: 8, kind: input, shape index: {}]
  %s9 = inlined_call_operand.hbm [shape: bf16[48,14], index: 9, kind: input, shape index: {}]
  %s10 = inlined_call_operand.vmem [shape: bf16[112,320], index: 10, kind: input, shape index: {}]
  %s11 = inlined_call_operand.vmem [shape: f32[112,1], index: 11, kind: input, shape index: {}]
  %s12 = inlined_call_operand.hbm [shape: bf16[10,200], index: 12, kind: input, shape index: {}]
  %s13 = inlined_call_operand.vmem [shape: f32[112,200], index: 13, kind: input, shape index: {}]
  %s14 = inlined_call_operand.vmem [shape: f32[2,1,200], index: 14, kind: output, shape index: {}]
  %s15 = sld [smem:[#allocation0]]
  $region109: #{_dcn_forward.1} parent=0
    _
  %s17 = ssub.s32 1, %s15
  %s18 = scalar_select 0, %s17, %s15
  $region1: #{_dcn_forward.1} parent=0
    #allocation2 [shape = 'u8[8192]{0}', space=vmem, size = 0x2000, scoped, tag = 'input window, operand 1, single buffered']
    #allocation3 [shape = 's32[2]{0}', space=sflag, size = 0x8, scoped, tag = 'scoped memory for _dcn_forward.1']
    #allocation4 [shape = 'u8[32768]{0}', space=vmem, size = 0x8000, scoped, tag = 'input window, operand 4, single buffered']
    #allocation5 [shape = 's32[1]{0}', space=sflag, size = 0x4, scoped, tag = 'scoped memory for _dcn_forward.1']
    #allocation6 [shape = 'u8[49152]{0}', space=vmem, size = 0xc000, scoped, tag = 'input window, operand 7, single buffered']
    #allocation7 [shape = 'u8[12288]{0}', space=vmem, size = 0x3000, scoped, tag = 'input window, operand 9, single buffered']
    #allocation8 [shape = 's32[1]{0}', space=sflag, size = 0x4, scoped, tag = 'scoped memory for _dcn_forward.1']
    #allocation9 [shape = 'u8[8192]{0}', space=vmem, size = 0x2000, scoped, tag = 'input window, operand 12, single buffered']
    %19 = vsyncpa [#allocation3], 0
    %20 = vsyncpa [#allocation5], 0
    %21 = vsyncpa [#allocation8], 0
    loop: start=0, step=1, limit=4
    $region2: #{_dcn_forward.1} parent=1 // loop_pre_header
      _
    $region3: #{_dcn_forward.1} parent=1 // loop_header
      %s23 = sphi 0, %s27
      %p24 = scmp.ge.s32.totalorder %s23, 4
      %s33 = sphi 0, %s35
      %s36 = sphi 0, %s33
      %s37 = sphi 0, %s36
      %s53 = sphi 0, %s37
      %s57 = sphi 0, %s57
      %s59 = sphi 0, %s57
      %s60 = sphi 0, %s59
      %s74 = sphi 0, %s60
      %s78 = sphi 0, %s78
      %s80 = sphi 0, %s78
      %s81 = sphi 0, %s80
      %s95 = sphi 0, %s81
      %s99 = sphi 0, %s99
      %s101 = sphi 0, %s99
      %s102 = sphi 0, %s101
      %s116 = sphi 0, %s102
      %s120 = sphi 0, %s120
      %s122 = sphi 0, %s120
      %s123 = sphi 0, %s122
      %s137 = sphi 0, %s123
      %s141 = sphi 0, %s141
      %s143 = sphi 0, %s141
      %s144 = sphi 0, %s143
      %s158 = sphi 0, %s144
      %s162 = sphi 0, %s162
      %s164 = sphi 0, %s162
      %s165 = sphi 0, %s164
      %s179 = sphi 0, %s165
      %s183 = sphi 0, %s183
      %s185 = sphi 0, %s183
      %s186 = sphi 0, %s185
      %s200 = sphi 0, %s186
      %s204 = sphi 0, %s204
      %s206 = sphi 0, %s204
      %s207 = sphi 0, %s206
      %s221 = sphi 0, %s207
      %s225 = sphi 0, %s225
      %s227 = sphi 0, %s225
      %s228 = sphi 0, %s227
      %s242 = sphi 0, %s228
      %s246 = sphi 0, %s246
      %s248 = sphi 0, %s246
      %s249 = sphi 0, %s248
      %s263 = sphi 0, %s249
      %s267 = sphi 0, %s267
      %s269 = sphi 0, %s267
      %s270 = sphi 0, %s269
      %s284 = sphi 0, %s270
      %s288 = sphi 0, %s288
      %s290 = sphi 0, %s288
      %s291 = sphi 0, %s290
      %s305 = sphi 0, %s291
      %s309 = sphi 0, %s309
      %s311 = sphi 0, %s309
      %s312 = sphi 0, %s311
      %s326 = sphi 0, %s312
      %s332 = sphi 0, %s334
      %s335 = sphi 0, %s332
      %s336 = sphi 0, %s335
      %s352 = sphi 0, %s336
    $region4: #{_dcn_forward.1} parent=1 // loop_header_branch
      %26 = sbr.rel (%p24) target = $region8
    $region5: #{_dcn_forward.1} parent=1 // loop_body
      %s28 = ssub.s32 %s23, 1
      %s29 = ssub.s32 %s23, 2
      %s30 = sadd.s32 %s23, 1
      %s31 = ssub.s32 %s23, %s30
      %p32 = scmp.eq.s32.totalorder %s31, 0
      %s34 = sadd.s32 %s33, 1
      %s35 = scalar_select %p32, %s33, %s34
      %p38 = pneg %p32
      %p39 = scmp.eq.s32.totalorder %s23, 1
      %p40 = por %p38, %p39
      %p41 = scmp.ne.s32.totalorder %s33, %s36
      %p42 = scmp.eq.s32.totalorder %s23, 0
      %p43 = por %p41, %p42
      %p44 = scmp.ne.s32.totalorder %s33, %s36
      %p45 = scmp.eq.s32.totalorder %s28, 1
      %p46 = por %p44, %p45
      %p47 = scmp.ne.s32.totalorder %s36, %s37
      %p48 = scmp.eq.s32.totalorder %s28, 0
      %p49 = por %p47, %p48
      %p50 = scmp.ne.s32.totalorder %s36, %s37
      %p51 = scmp.eq.s32.totalorder %s29, 1
      %p52 = por %p50, %p51
      %p54 = scmp.ne.s32.totalorder %s37, %s53
      %p55 = scmp.eq.s32.totalorder %s29, 0
      %p56 = por %p54, %p55
      %s58 = sadd.s32 %s57, 1
      %p61 = scmp.eq.s32.totalorder %s23, 1
      %p62 = scmp.ne.s32.totalorder %s57, %s59
      %p63 = scmp.eq.s32.totalorder %s23, 0
      %p64 = por %p62, %p63
      %p65 = scmp.ne.s32.totalorder %s57, %s59
      %p66 = scmp.eq.s32.totalorder %s28, 1
      %p67 = por %p65, %p66
      %p68 = scmp.ne.s32.totalorder %s59, %s60
      %p69 = scmp.eq.s32.totalorder %s28, 0
      %p70 = por %p68, %p69
      %p71 = scmp.ne.s32.totalorder %s59, %s60
      %p72 = scmp.eq.s32.totalorder %s29, 1
      %p73 = por %p71, %p72
      %p75 = scmp.ne.s32.totalorder %s60, %s74
      %p76 = scmp.eq.s32.totalorder %s29, 0
      %p77 = por %p75, %p76
      %s79 = sadd.s32 %s78, 1
      %p82 = scmp.eq.s32.totalorder %s23, 1
      %p83 = scmp.ne.s32.totalorder %s78, %s80
      %p84 = scmp.eq.s32.totalorder %s23, 0
      %p85 = por %p83, %p84
      %p86 = scmp.ne.s32.totalorder %s78, %s80
      %p87 = scmp.eq.s32.totalorder %s28, 1
      %p88 = por %p86, %p87
      %p89 = scmp.ne.s32.totalorder %s80, %s81
      %p90 = scmp.eq.s32.totalorder %s28, 0
      %p91 = por %p89, %p90
      %p92 = scmp.ne.s32.totalorder %s80, %s81
      %p93 = scmp.eq.s32.totalorder %s29, 1
      %p94 = por %p92, %p93
      %p96 = scmp.ne.s32.totalorder %s81, %s95
      %p97 = scmp.eq.s32.totalorder %s29, 0
      %p98 = por %p96, %p97
      %s100 = sadd.s32 %s99, 1
      %p103 = scmp.eq.s32.totalorder %s23, 1
      %p104 = scmp.ne.s32.totalorder %s99, %s101
      %p105 = scmp.eq.s32.totalorder %s23, 0
      %p106 = por %p104, %p105
      %p107 = scmp.ne.s32.totalorder %s99, %s101
      %p108 = scmp.eq.s32.totalorder %s28, 1
      %p109 = por %p107, %p108
      %p110 = scmp.ne.s32.totalorder %s101, %s102
      %p111 = scmp.eq.s32.totalorder %s28, 0
      %p112 = por %p110, %p111
      %p113 = scmp.ne.s32.totalorder %s101, %s102
      %p114 = scmp.eq.s32.totalorder %s29, 1
      %p115 = por %p113, %p114
      %p117 = scmp.ne.s32.totalorder %s102, %s116
      %p118 = scmp.eq.s32.totalorder %s29, 0
      %p119 = por %p117, %p118
      %s121 = sadd.s32 %s120, 1
      %p124 = scmp.eq.s32.totalorder %s23, 1
      %p125 = scmp.ne.s32.totalorder %s120, %s122
      %p126 = scmp.eq.s32.totalorder %s23, 0
      %p127 = por %p125, %p126
      %p128 = scmp.ne.s32.totalorder %s120, %s122
      %p129 = scmp.eq.s32.totalorder %s28, 1
      %p130 = por %p128, %p129
      %p131 = scmp.ne.s32.totalorder %s122, %s123
      %p132 = scmp.eq.s32.totalorder %s28, 0
      %p133 = por %p131, %p132
      %p134 = scmp.ne.s32.totalorder %s122, %s123
      %p135 = scmp.eq.s32.totalorder %s29, 1
      %p136 = por %p134, %p135
      %p138 = scmp.ne.s32.totalorder %s123, %s137
      %p139 = scmp.eq.s32.totalorder %s29, 0
      %p140 = por %p138, %p139
      %s142 = sadd.s32 %s141, 1
      %p145 = scmp.eq.s32.totalorder %s23, 1
      %p146 = scmp.ne.s32.totalorder %s141, %s143
      %p147 = scmp.eq.s32.totalorder %s23, 0
      %p148 = por %p146, %p147
      %p149 = scmp.ne.s32.totalorder %s141, %s143
      %p150 = scmp.eq.s32.totalorder %s28, 1
      %p151 = por %p149, %p150
      %p152 = scmp.ne.s32.totalorder %s143, %s144
      %p153 = scmp.eq.s32.totalorder %s28, 0
      %p154 = por %p152, %p153
      %p155 = scmp.ne.s32.totalorder %s143, %s144
      %p156 = scmp.eq.s32.totalorder %s29, 1
      %p157 = por %p155, %p156
      %p159 = scmp.ne.s32.totalorder %s144, %s158
      %p160 = scmp.eq.s32.totalorder %s29, 0
      %p161 = por %p159, %p160
      %s163 = sadd.s32 %s162, 1
      %p166 = scmp.eq.s32.totalorder %s23, 1
      %p167 = scmp.ne.s32.totalorder %s162, %s164
      %p168 = scmp.eq.s32.totalorder %s23, 0
      %p169 = por %p167, %p168
      %p170 = scmp.ne.s32.totalorder %s162, %s164
      %p171 = scmp.eq.s32.totalorder %s28, 1
      %p172 = por %p170, %p171
      %p173 = scmp.ne.s32.totalorder %s164, %s165
      %p174 = scmp.eq.s32.totalorder %s28, 0
      %p175 = por %p173, %p174
      %p176 = scmp.ne.s32.totalorder %s164, %s165
      %p177 = scmp.eq.s32.totalorder %s29, 1
      %p178 = por %p176, %p177
      %p180 = scmp.ne.s32.totalorder %s165, %s179
      %p181 = scmp.eq.s32.totalorder %s29, 0
      %p182 = por %p180, %p181
      %s184 = sadd.s32 %s183, 1
      %p187 = scmp.eq.s32.totalorder %s23, 1
      %p188 = scmp.ne.s32.totalorder %s183, %s185
      %p189 = scmp.eq.s32.totalorder %s23, 0
      %p190 = por %p188, %p189
      %p191 = scmp.ne.s32.totalorder %s183, %s185
      %p192 = scmp.eq.s32.totalorder %s28, 1
      %p193 = por %p191, %p192
      %p194 = scmp.ne.s32.totalorder %s185, %s186
      %p195 = scmp.eq.s32.totalorder %s28, 0
      %p196 = por %p194, %p195
      %p197 = scmp.ne.s32.totalorder %s185, %s186
      %p198 = scmp.eq.s32.totalorder %s29, 1
      %p199 = por %p197, %p198
      %p201 = scmp.ne.s32.totalorder %s186, %s200
      %p202 = scmp.eq.s32.totalorder %s29, 0
      %p203 = por %p201, %p202
      %s205 = sadd.s32 %s204, 1
      %p208 = scmp.eq.s32.totalorder %s23, 1
      %p209 = scmp.ne.s32.totalorder %s204, %s206
      %p210 = scmp.eq.s32.totalorder %s23, 0
      %p211 = por %p209, %p210
      %p212 = scmp.ne.s32.totalorder %s204, %s206
      %p213 = scmp.eq.s32.totalorder %s28, 1
      %p214 = por %p212, %p213
      %p215 = scmp.ne.s32.totalorder %s206, %s207
      %p216 = scmp.eq.s32.totalorder %s28, 0
      %p217 = por %p215, %p216
      %p218 = scmp.ne.s32.totalorder %s206, %s207
      %p219 = scmp.eq.s32.totalorder %s29, 1
      %p220 = por %p218, %p219
      %p222 = scmp.ne.s32.totalorder %s207, %s221
      %p223 = scmp.eq.s32.totalorder %s29, 0
      %p224 = por %p222, %p223
      %s226 = sadd.s32 %s225, 1
      %p229 = scmp.eq.s32.totalorder %s23, 1
      %p230 = scmp.ne.s32.totalorder %s225, %s227
      %p231 = scmp.eq.s32.totalorder %s23, 0
      %p232 = por %p230, %p231
      %p233 = scmp.ne.s32.totalorder %s225, %s227
      %p234 = scmp.eq.s32.totalorder %s28, 1
      %p235 = por %p233, %p234
      %p236 = scmp.ne.s32.totalorder %s227, %s228
      %p237 = scmp.eq.s32.totalorder %s28, 0
      %p238 = por %p236, %p237
      %p239 = scmp.ne.s32.totalorder %s227, %s228
      %p240 = scmp.eq.s32.totalorder %s29, 1
      %p241 = por %p239, %p240
      %p243 = scmp.ne.s32.totalorder %s228, %s242
      %p244 = scmp.eq.s32.totalorder %s29, 0
      %p245 = por %p243, %p244
      %s247 = sadd.s32 %s246, 1
      %p250 = scmp.eq.s32.totalorder %s23, 1
      %p251 = scmp.ne.s32.totalorder %s246, %s248
      %p252 = scmp.eq.s32.totalorder %s23, 0
      %p253 = por %p251, %p252
      %p254 = scmp.ne.s32.totalorder %s246, %s248
      %p255 = scmp.eq.s32.totalorder %s28, 1
      %p256 = por %p254, %p255
      %p257 = scmp.ne.s32.totalorder %s248, %s249
      %p258 = scmp.eq.s32.totalorder %s28, 0
      %p259 = por %p257, %p258
      %p260 = scmp.ne.s32.totalorder %s248, %s249
      %p261 = scmp.eq.s32.totalorder %s29, 1
      %p262 = por %p260, %p261
      %p264 = scmp.ne.s32.totalorder %s249, %s263
      %p265 = scmp.eq.s32.totalorder %s29, 0
      %p266 = por %p264, %p265
      %s268 = sadd.s32 %s267, 1
      %p271 = scmp.eq.s32.totalorder %s23, 1
      %p272 = scmp.ne.s32.totalorder %s267, %s269
      %p273 = scmp.eq.s32.totalorder %s23, 0
      %p274 = por %p272, %p273
      %p275 = scmp.ne.s32.totalorder %s267, %s269
      %p276 = scmp.eq.s32.totalorder %s28, 1
      %p277 = por %p275, %p276
      %p278 = scmp.ne.s32.totalorder %s269, %s270
      %p279 = scmp.eq.s32.totalorder %s28, 0
      %p280 = por %p278, %p279
      %p281 = scmp.ne.s32.totalorder %s269, %s270
      %p282 = scmp.eq.s32.totalorder %s29, 1
      %p283 = por %p281, %p282
      %p285 = scmp.ne.s32.totalorder %s270, %s284
      %p286 = scmp.eq.s32.totalorder %s29, 0
      %p287 = por %p285, %p286
      %s289 = sadd.s32 %s288, 1
      %p292 = scmp.eq.s32.totalorder %s23, 1
      %p293 = scmp.ne.s32.totalorder %s288, %s290
      %p294 = scmp.eq.s32.totalorder %s23, 0
      %p295 = por %p293, %p294
      %p296 = scmp.ne.s32.totalorder %s288, %s290
      %p297 = scmp.eq.s32.totalorder %s28, 1
      %p298 = por %p296, %p297
      %p299 = scmp.ne.s32.totalorder %s290, %s291
      %p300 = scmp.eq.s32.totalorder %s28, 0
      %p301 = por %p299, %p300
      %p302 = scmp.ne.s32.totalorder %s290, %s291
      %p303 = scmp.eq.s32.totalorder %s29, 1
      %p304 = por %p302, %p303
      %p306 = scmp.ne.s32.totalorder %s291, %s305
      %p307 = scmp.eq.s32.totalorder %s29, 0
      %p308 = por %p306, %p307
      %s310 = sadd.s32 %s309, 1
      %p313 = scmp.eq.s32.totalorder %s23, 1
      %p314 = scmp.ne.s32.totalorder %s309, %s311
      %p315 = scmp.eq.s32.totalorder %s23, 0
      %p316 = por %p314, %p315
      %p317 = scmp.ne.s32.totalorder %s309, %s311
      %p318 = scmp.eq.s32.totalorder %s28, 1
      %p319 = por %p317, %p318
      %p320 = scmp.ne.s32.totalorder %s311, %s312
      %p321 = scmp.eq.s32.totalorder %s28, 0
      %p322 = por %p320, %p321
      %p323 = scmp.ne.s32.totalorder %s311, %s312
      %p324 = scmp.eq.s32.totalorder %s29, 1
      %p325 = por %p323, %p324
      %p327 = scmp.ne.s32.totalorder %s312, %s326
      %p328 = scmp.eq.s32.totalorder %s29, 0
      %p329 = por %p327, %p328
      %s330 = ssub.s32 %s23, %s30
      %p331 = scmp.eq.s32.totalorder %s330, 0
      %s333 = sadd.s32 %s332, 1
      %s334 = scalar_select %p331, %s332, %s333
      %p337 = pneg %p331
      %p338 = scmp.eq.s32.totalorder %s23, 1
      %p339 = por %p337, %p338
      %p340 = scmp.ne.s32.totalorder %s332, %s335
      %p341 = scmp.eq.s32.totalorder %s23, 0
      %p342 = por %p340, %p341
      %p343 = scmp.ne.s32.totalorder %s332, %s335
      %p344 = scmp.eq.s32.totalorder %s28, 1
      %p345 = por %p343, %p344
      %p346 = scmp.ne.s32.totalorder %s335, %s336
      %p347 = scmp.eq.s32.totalorder %s28, 0
      %p348 = por %p346, %p347
      %p349 = scmp.ne.s32.totalorder %s335, %s336
      %p350 = scmp.eq.s32.totalorder %s29, 1
      %p351 = por %p349, %p350
      %p353 = scmp.ne.s32.totalorder %s336, %s352
      %p354 = scmp.eq.s32.totalorder %s29, 0
      %p355 = por %p353, %p354
      %p356 = scmp.le.s32.totalorder 1, %s23
      %p357 = scmp.lt.s32.totalorder %s23, 3
      %p358 = pnand %p356, %p357
      %p359 = pneg %p358
      // Predicated region
      $region9: #{_dcn_forward.1} parent=5 // pred_check
        _
      $region10: #{_dcn_forward.1} parent=5 // pred_check_branch
        %361 = sbr.rel (%p358) target = $region12
      $region11: #{_dcn_forward.1} parent=5 // pred_region
        %s362 = ssub.s32 %s23, 1
        // Predicated region
        $region13: #{_dcn_forward.1} parent=11 // pred_check
          %p363 = pneg %p70
        $region14: #{_dcn_forward.1} parent=11 // pred_check_branch
          %365 = sbr.rel (%p363) target = $region16
        $region15: #{_dcn_forward.1} parent=11 // pred_region
          %s367 = ssub.s32 256, 256
          %368 = vsyncadd [#allocation3], %s367
          %s369 = sshll.u32 [#allocation2], 4
          %s370 = int_to_ptr.vmem [resolvable:$true] %s369
          %375 = dma.hbm_to_vmem [thread:$0]  %s1, 256, %s370, [#allocation3], 64, 64, 4
        $region16: #{_dcn_forward.1} parent=11 // pred_fallthru
          _
        // Predicated region
        $region17: #{_dcn_forward.1} parent=11 // pred_check
          %p376 = pneg %p91
        $region18: #{_dcn_forward.1} parent=11 // pred_check_branch
          %378 = sbr.rel (%p376) target = $region20
        $region19: #{_dcn_forward.1} parent=11 // pred_region
          _
        $region20: #{_dcn_forward.1} parent=11 // pred_fallthru
          _
        // Predicated region
        $region21: #{_dcn_forward.1} parent=11 // pred_check
          %p379 = pneg %p112
        $region22: #{_dcn_forward.1} parent=11 // pred_check_branch
          %381 = sbr.rel (%p379) target = $region24
        $region23: #{_dcn_forward.1} parent=11 // pred_region
          _
        $region24: #{_dcn_forward.1} parent=11 // pred_fallthru
          _
        // Predicated region
        $region25: #{_dcn_forward.1} parent=11 // pred_check
          %p382 = pneg %p133
        $region26: #{_dcn_forward.1} parent=11 // pred_check_branch
          %384 = sbr.rel (%p382) target = $region28
        $region27: #{_dcn_forward.1} parent=11 // pred_region
          %s386 = ssub.s32 1024, 1024
          %387 = vsyncadd [#allocation5], %s386
          %s388 = sshll.u32 [#allocation4], 4
          %s389 = int_to_ptr.vmem [resolvable:$true] %s388
          %394 = dma.hbm_to_vmem [thread:$0]  %s4, 1024, %s389, [#allocation5], 128, 128, 8
        $region28: #{_dcn_forward.1} parent=11 // pred_fallthru
          _
        // Predicated region
        $region29: #{_dcn_forward.1} parent=11 // pred_check
          %p395 = pneg %p154
        $region30: #{_dcn_forward.1} parent=11 // pred_check_branch
          %397 = sbr.rel (%p395) target = $region32
        $region31: #{_dcn_forward.1} parent=11 // pred_region
          _
        $region32: #{_dcn_forward.1} parent=11 // pred_fallthru
          _
        // Predicated region
        $region33: #{_dcn_forward.1} parent=11 // pred_check
          %p398 = pneg %p175
        $region34: #{_dcn_forward.1} parent=11 // pred_check_branch
          %400 = sbr.rel (%p398) target = $region36
        $region35: #{_dcn_forward.1} parent=11 // pred_region
          _
        $region36: #{_dcn_forward.1} parent=11 // pred_fallthru
          _
        // Predicated region
        $region37: #{_dcn_forward.1} parent=11 // pred_check
          %p401 = pneg %p196
        $region38: #{_dcn_forward.1} parent=11 // pred_check_branch
          %403 = sbr.rel (%p401) target = $region40
        $region39: #{_dcn_forward.1} parent=11 // pred_region
          %s405 = ssub.s32 1536, 1536
          %406 = vsyncadd [#allocation5], %s405
          %s407 = sshll.u32 [#allocation6], 4
          %s408 = int_to_ptr.vmem [resolvable:$true] %s407
          %413 = dma.hbm_to_vmem [thread:$0]  %s7, 1536, %s408, [#allocation5], 192, 192, 12
        $region40: #{_dcn_forward.1} parent=11 // pred_fallthru
          _
        // Predicated region
        $region41: #{_dcn_forward.1} parent=11 // pred_check
          %p414 = pneg %p217
        $region42: #{_dcn_forward.1} parent=11 // pred_check_branch
          %416 = sbr.rel (%p414) target = $region44
        $region43: #{_dcn_forward.1} parent=11 // pred_region
          _
        $region44: #{_dcn_forward.1} parent=11 // pred_fallthru
          _
        // Predicated region
        $region45: #{_dcn_forward.1} parent=11 // pred_check
          %p417 = pneg %p238
        $region46: #{_dcn_forward.1} parent=11 // pred_check_branch
          %419 = sbr.rel (%p417) target = $region48
        $region47: #{_dcn_forward.1} parent=11 // pred_region
          %s421 = ssub.s32 384, 384
          %422 = vsyncadd [#allocation8], %s421
          %s423 = sshll.u32 [#allocation7], 4
          %s424 = int_to_ptr.vmem [resolvable:$true] %s423
          %429 = dma.hbm_to_vmem [thread:$0]  %s9, 384, %s424, [#allocation8], 64, 64, 4
        $region48: #{_dcn_forward.1} parent=11 // pred_fallthru
          _
        // Predicated region
        $region49: #{_dcn_forward.1} parent=11 // pred_check
          %p430 = pneg %p259
        $region50: #{_dcn_forward.1} parent=11 // pred_check_branch
          %432 = sbr.rel (%p430) target = $region52
        $region51: #{_dcn_forward.1} parent=11 // pred_region
          _
        $region52: #{_dcn_forward.1} parent=11 // pred_fallthru
          _
        // Predicated region
        $region53: #{_dcn_forward.1} parent=11 // pred_check
          %p433 = pneg %p280
        $region54: #{_dcn_forward.1} parent=11 // pred_check_branch
          %435 = sbr.rel (%p433) target = $region56
        $region55: #{_dcn_forward.1} parent=11 // pred_region
          _
        $region56: #{_dcn_forward.1} parent=11 // pred_fallthru
          _
        // Predicated region
        $region57: #{_dcn_forward.1} parent=11 // pred_check
          %p436 = pneg %p301
        $region58: #{_dcn_forward.1} parent=11 // pred_check_branch
          %438 = sbr.rel (%p436) target = $region60
        $region59: #{_dcn_forward.1} parent=11 // pred_region
          %s440 = ssub.s32 256, 256
          %441 = vsyncadd [#allocation8], %s440
          %s442 = sshll.u32 [#allocation9], 4
          %s443 = int_to_ptr.vmem [resolvable:$true] %s442
          %448 = dma.hbm_to_vmem [thread:$0]  %s12, 256, %s443, [#allocation8], 128, 128, 8
        $region60: #{_dcn_forward.1} parent=11 // pred_fallthru
          _
        // Predicated region
        $region61: #{_dcn_forward.1} parent=11 // pred_check
          %p449 = pneg %p322
        $region62: #{_dcn_forward.1} parent=11 // pred_check_branch
          %451 = sbr.rel (%p449) target = $region64
        $region63: #{_dcn_forward.1} parent=11 // pred_region
          _
        $region64: #{_dcn_forward.1} parent=11 // pred_fallthru
          _
      $region12: #{_dcn_forward.1} parent=5 // pred_fallthru
        _
      %p452 = scmp.lt.s32.totalorder %s23, 2
      // Predicated region
      $region65: #{_dcn_forward.1} parent=5 // pred_check
        %p453 = pneg %p452
      $region66: #{_dcn_forward.1} parent=5 // pred_check_branch
        %455 = sbr.rel (%p453) target = $region68
      $region67: #{_dcn_forward.1} parent=5 // pred_region
        // Predicated region
        $region69: #{_dcn_forward.1} parent=67 // pred_check
          %p456 = pneg %p43
        $region70: #{_dcn_forward.1} parent=67 // pred_check_branch
          %458 = sbr.rel (%p456) target = $region72
        $region71: #{_dcn_forward.1} parent=67 // pred_region
          %p459 = scmp.lt.s32.totalorder %s23, 1
          %s460 = scalar_select %p459, %s23, 1
          %s461 = smul.addr %s460, 8
          %s462 = smul.addr %s461, 4
          %s463 = scalar_lea.vmem %s0, %s462
        $region72: #{_dcn_forward.1} parent=67 // pred_fallthru
          _
      $region68: #{_dcn_forward.1} parent=5 // pred_fallthru
        _
      %p464 = scmp.le.s32.totalorder 1, %s23
      %p465 = scmp.lt.s32.totalorder %s23, 3
      %p466 = pnand %p464, %p465
      %p467 = pneg %p466
      // Predicated region
      $region73: #{_dcn_forward.1} parent=5 // pred_check
        _
      $region74: #{_dcn_forward.1} parent=5 // pred_check_branch
        %469 = sbr.rel (%p466) target = $region76
      $region75: #{_dcn_forward.1} parent=5 // pred_region
        %s470 = ssub.s32 %s23, 1
        // Predicated region
        $region77: #{_dcn_forward.1} parent=75 // pred_check
          %p471 = pneg %p70
        $region78: #{_dcn_forward.1} parent=75 // pred_check_branch
          %473 = sbr.rel (%p471) target = $region80
        $region79: #{_dcn_forward.1} parent=75 // pred_region
          %474 = dma.done [#allocation3], 256
        $region80: #{_dcn_forward.1} parent=75 // pred_fallthru
          _
        // Predicated region
        $region81: #{_dcn_forward.1} parent=75 // pred_check
          %p475 = pneg %p133
        $region82: #{_dcn_forward.1} parent=75 // pred_check_branch
          %477 = sbr.rel (%p475) target = $region84
        $region83: #{_dcn_forward.1} parent=75 // pred_region
          %478 = dma.done [#allocation5], 1024
        $region84: #{_dcn_forward.1} parent=75 // pred_fallthru
          _
        // Predicated region
        $region85: #{_dcn_forward.1} parent=75 // pred_check
          %p479 = pneg %p196
        $region86: #{_dcn_forward.1} parent=75 // pred_check_branch
          %481 = sbr.rel (%p479) target = $region88
        $region87: #{_dcn_forward.1} parent=75 // pred_region
          %482 = dma.done [#allocation5], 1536
        $region88: #{_dcn_forward.1} parent=75 // pred_fallthru
          _
        // Predicated region
        $region89: #{_dcn_forward.1} parent=75 // pred_check
          %p483 = pneg %p238
        $region90: #{_dcn_forward.1} parent=75 // pred_check_branch
          %485 = sbr.rel (%p483) target = $region92
        $region91: #{_dcn_forward.1} parent=75 // pred_region
          %486 = dma.done [#allocation8], 384
        $region92: #{_dcn_forward.1} parent=75 // pred_fallthru
          _
        // Predicated region
        $region93: #{_dcn_forward.1} parent=75 // pred_check
          %p487 = pneg %p301
        $region94: #{_dcn_forward.1} parent=75 // pred_check_branch
          %489 = sbr.rel (%p487) target = $region96
        $region95: #{_dcn_forward.1} parent=75 // pred_region
          %490 = dma.done [#allocation8], 256
        $region96: #{_dcn_forward.1} parent=75 // pred_fallthru
          _
        %p491 = scmp.lt.s32.totalorder %s28, 1
        %s492 = scalar_select %p491, %s28, 1
        %s493 = smul.addr %s492, 8
        %s494 = smul.addr %s493, 4
        %s495 = scalar_lea.vmem %s0, %s494
        %p496 = pneg %p49
        %p497 = pneg %p46
        %p498 = pneg %p70
        %p499 = pneg %p67
        %p500 = pneg %p91
        %p501 = pneg %p88
        %p502 = pneg %p112
        %p503 = pneg %p109
        %p504 = pneg %p133
        %p505 = pneg %p130
        %p506 = pneg %p154
        %p507 = pneg %p151
        %p508 = pneg %p175
        %p509 = pneg %p172
        %p510 = pneg %p196
        %p511 = pneg %p193
        %p512 = pneg %p217
        %p513 = pneg %p214
        %p514 = pneg %p238
        %p515 = pneg %p235
        %p516 = pneg %p259
        %p517 = pneg %p256
        %p518 = pneg %p280
        %p519 = pneg %p277
        %p520 = pneg %p301
        %p521 = pneg %p298
        %p522 = pneg %p322
        %p523 = pneg %p319
        %p524 = pneg %p348
        %p525 = pneg %p345
        %p526 = scmp.lt.s32.totalorder %s28, 1
        %s527 = scalar_select %p526, %s28, 1
        %s528 = smul.addr %s527, 2
        %s529 = scalar_lea.vmem %s14, %s528
        %p530 = scmp.lt.s32.totalorder %s28, 1
        %s531 = scalar_select %p530, %s28, 1
        %s532 = smul.addr %s531, 8
        %s533 = smul.addr %s532, 4
        %s534 = scalar_lea.vmem %s0, %s533
        %p535 = scmp.lt.s32.totalorder %s28, 1
        %s536 = scalar_select %p535, %s28, 1
        %s537 = smul.addr %s536, 2
        %s538 = scalar_lea.vmem %s14, %s537
        %v540 = vld [vmem:[%s534] sm:$0xff]
        %v541 = vld [vmem:[%s534 + $0x8] sm:$0xff]
        %v542 = vld [vmem:[%s534 + $0x10] sm:$0xff]
        %v543 = vld [vmem:[%s534 + $0x18] sm:$0xff]
        %v544 = vld [vmem:[#allocation2] sm:$0xf]
        %v545 = vld [vmem:[#allocation2 + $0x4] sm:$0xf]
        %v546 = vld [vmem:[#allocation2 + $0x8] sm:$0xf]
        %v547 = vld [vmem:[#allocation2 + $0xc] sm:$0xf]
        %v548 = vld [vmem:[%s2] sm:$0xff]
        %v549 = vld [vmem:[%s2 + $0x8] sm:$0xff]
        %v550 = vld [vmem:[%s2 + $0x10] sm:$0xff]
        %v551 = vld [vmem:[%s2 + $0x18] sm:$0xff]
        %v556 = vunpack.c.l.b16 %v540
        %v557 = vunpack.c.h.b16 %v540
        %v558 = vunpack.c.l.b16 %v541
        %v559 = vunpack.c.h.b16 %v541
        %v560 = vunpack.c.l.b16 %v542
        %v561 = vunpack.c.h.b16 %v542
        %v562 = vunpack.c.l.b16 %v543
        %v563 = vunpack.c.h.b16 %v543
        %v564 = vpack.c.b16 %v560, %v556
        %v565 = vpack.c.b16 %v561, %v557
        %v566 = vpack.c.b16 %v562, %v558
        %v567 = vpack.c.b16 %v563, %v559
        %572 = vrot.lane.b32.xlu0 %v564, 127
        %v573 = vpop.permute.xlu0 %572
        %574 = vrot.lane.b32.xlu0 %v565, 127
        %v575 = vpop.permute.xlu0 %574
        %576 = vrot.lane.b32.xlu0 %v566, 127
        %v577 = vpop.permute.xlu0 %576
        %578 = vrot.lane.b32.xlu0 %v567, 127
        %v579 = vpop.permute.xlu0 %578
        %vm580 = vcmask 1039360
        %v581 = vsel %vm580, %v573, %v575
        %v582 = vsel %vm580, %v575, %v577
        %v583 = vsel %vm580, %v577, %v579
        %588 = vrot.lane.b32.xlu0 %v564, 126
        %v589 = vpop.permute.xlu0 %588
        %590 = vrot.lane.b32.xlu0 %v565, 126
        %v591 = vpop.permute.xlu0 %590
        %592 = vrot.lane.b32.xlu0 %v566, 126
        %v593 = vpop.permute.xlu0 %592
        %594 = vrot.lane.b32.xlu0 %v567, 126
        %v595 = vpop.permute.xlu0 %594
        %vm596 = vcmask 1031168
        %v597 = vsel %vm596, %v589, %v591
        %v598 = vsel %vm596, %v591, %v593
        %v599 = vsel %vm596, %v593, %v595
        %604 = vrot.lane.b32.xlu0 %v564, 125
        %v605 = vpop.permute.xlu0 %604
        %606 = vrot.lane.b32.xlu0 %v565, 125
        %v607 = vpop.permute.xlu0 %606
        %608 = vrot.lane.b32.xlu0 %v566, 125
        %v609 = vpop.permute.xlu0 %608
        %610 = vrot.lane.b32.xlu0 %v567, 125
        %v611 = vpop.permute.xlu0 %610
        %vm612 = vcmask 1022976
        %v613 = vsel %vm612, %v605, %v607
        %v614 = vsel %vm612, %v607, %v609
        %v615 = vsel %vm612, %v609, %v611
        %620 = vrot.lane.b32.xlu0 %v564, 124
        %v621 = vpop.permute.xlu0 %620
        %622 = vrot.lane.b32.xlu0 %v565, 124
        %v623 = vpop.permute.xlu0 %622
        %624 = vrot.lane.b32.xlu0 %v566, 124
        %v625 = vpop.permute.xlu0 %624
        %626 = vrot.lane.b32.xlu0 %v567, 124
        %v627 = vpop.permute.xlu0 %626
        %vm628 = vcmask 1014784
        %v629 = vsel %vm628, %v621, %v623
        %v630 = vsel %vm628, %v623, %v625
        %v631 = vsel %vm628, %v625, %v627
        %637 = vset.pattern.permute.xlu0 0
        %638 = vperm.xlu0 %637, %v548
        %v639 = vpop.permute.xlu0 %638
        %642 = vset.pattern.permute.xlu0 0
        %643 = vperm.xlu0 %642, %v549
        %v644 = vpop.permute.xlu0 %643
        %647 = vset.pattern.permute.xlu0 0
        %648 = vperm.xlu0 %647, %v550
        %v649 = vpop.permute.xlu0 %648
        %652 = vset.pattern.permute.xlu0 0
        %653 = vperm.xlu0 %652, %v551
        %v654 = vpop.permute.xlu0 %653
        %v660 = vunpack.c.l.b16 %v544
        %v661 = vunpack.c.l.b16 %v545
        %v662 = vunpack.c.l.b16 %v546
        %v663 = vunpack.c.l.b16 %v547
        %v664 = vpack.c.b16 %v661, %v660
        %v665 = vpack.c.b16 %v663, %v662
        %vm666 = vcmask 654336
        %v668 = vsel %vm666, %v664, 0
        %v671 = vsel %vm666, %v665, 0
        %673 = vmatprep.subr.bf16.mxu0 0
        %674 = vmatpush1.bf16.msra.mxu0 0
        %675 = vmatprep.subr.bf16.mxu0 0
        %676 = vmatpush1.bf16.msra.mxu0 0
        %677 = vmatprep.subr.bf16.mxu0 0
        %678 = vmatpush1.bf16.msra.mxu0 0
        %679 = vmatprep.subr.bf16.mxu0 %v630
        %680 = vmatpush1.bf16.msra.mxu0 %v629
        %681 = vmatprep.subr.bf16.mxu0 %v614
        %682 = vmatpush1.bf16.msra.mxu0 %v613
        %683 = vmatprep.subr.bf16.mxu0 %v598
        %684 = vmatpush1.bf16.msra.mxu0 %v597
        %685 = vmatprep.subr.bf16.mxu0 %v582
        %686 = vmatpush1.bf16.msra.mxu0 %v581
        %687 = vmatprep.subr.bf16.mxu0 %v565
        %688 = vmatpush1.bf16.msra.mxu0 %v564
        %689 = vmatprep.subr.bf16.mxu0 0
        %690 = vmatpush2.bf16.msra.mxu0 0
        %691 = vmatprep.subr.bf16.mxu0 0
        %692 = vmatpush2.bf16.msra.mxu0 0
        %693 = vmatprep.subr.bf16.mxu0 0
        %694 = vmatpush2.bf16.msra.mxu0 0
        %695 = vmatprep.subr.bf16.mxu0 0
        %696 = vmatpush2.bf16.msra.mxu0 0
        %697 = vmatprep.subr.bf16.mxu0 0
        %698 = vmatpush2.bf16.msra.mxu0 0
        %699 = vmatprep.subr.bf16.mxu0 0
        %700 = vmatpush2.bf16.msra.mxu0 0
        %701 = vmatprep.subr.bf16.mxu0 0
        %702 = vmatpush2.bf16.msra.mxu0 0
        %703 = vmatprep.subr.bf16.mxu0 0
        %704 = vmatpush2.bf16.msra.mxu0 0
        %705 = vmatprep.mubr.bf16.mxu0 0
        %706 = vmatmul.mubr.bf16.gmra.mxu0 %v668
        %v707 = vpop.f32.mrf.mxu0
        %v708 = vadd.f32 %v639, %v707
        %v709 = vpop.f32.mrf.mxu0
        %v710 = vadd.f32 %v639, %v709
        %v711 = vpop.f32.mrf.mxu0
        %v712 = vadd.f32 %v644, %v711
        %v713 = vpop.f32.mrf.mxu0
        %v714 = vadd.f32 %v644, %v713
        %715 = vmatprep.mubr.bf16.mxu0 0
        %716 = vmatmul.mubr.bf16.gmra.mxu0 %v671
        %v717 = vpop.f32.mrf.mxu0
        %v718 = vadd.f32 %v649, %v717
        %v719 = vpop.f32.mrf.mxu0
        %v720 = vadd.f32 %v649, %v719
        %v721 = vpop.f32.mrf.mxu0
        %v722 = vadd.f32 %v654, %v721
        %v723 = vpop.f32.mrf.mxu0
        %v724 = vadd.f32 %v654, %v723
        %725 = vdwg.mxu0
        %726 = vmatprep.subr.bf16.mxu0 0
        %727 = vmatpush1.bf16.msra.mxu0 0
        %728 = vmatprep.subr.bf16.mxu0 0
        %729 = vmatpush1.bf16.msra.mxu0 0
        %730 = vmatprep.subr.bf16.mxu0 0
        %731 = vmatpush1.bf16.msra.mxu0 0
        %732 = vmatprep.subr.bf16.mxu0 %v627
        %733 = vmatpush1.bf16.msra.mxu0 %v631
        %734 = vmatprep.subr.bf16.mxu0 %v611
        %735 = vmatpush1.bf16.msra.mxu0 %v615
        %736 = vmatprep.subr.bf16.mxu0 %v595
        %737 = vmatpush1.bf16.msra.mxu0 %v599
        %738 = vmatprep.subr.bf16.mxu0 %v579
        %739 = vmatpush1.bf16.msra.mxu0 %v583
        %740 = vmatprep.subr.bf16.mxu0 %v567
        %741 = vmatpush1.bf16.msra.mxu0 %v566
        %742 = vmatprep.subr.bf16.mxu0 0
        %743 = vmatpush2.bf16.msra.mxu0 0
        %744 = vmatprep.subr.bf16.mxu0 0
        %745 = vmatpush2.bf16.msra.mxu0 0
        %746 = vmatprep.subr.bf16.mxu0 0
        %747 = vmatpush2.bf16.msra.mxu0 0
        %748 = vmatprep.subr.bf16.mxu0 0
        %749 = vmatpush2.bf16.msra.mxu0 0
        %750 = vmatprep.subr.bf16.mxu0 0
        %751 = vmatpush2.bf16.msra.mxu0 0
        %752 = vmatprep.subr.bf16.mxu0 0
        %753 = vmatpush2.bf16.msra.mxu0 0
        %754 = vmatprep.subr.bf16.mxu0 0
        %755 = vmatpush2.bf16.msra.mxu0 0
        %756 = vmatprep.subr.bf16.mxu0 0
        %757 = vmatpush2.bf16.msra.mxu0 0
        %758 = vmatprep.mubr.bf16.mxu0 0
        %759 = vmatmul.mubr.bf16.gmra.mxu0 %v668
        %v760 = vpop.f32.mrf.mxu0
        %v761 = vadd.f32 %v639, %v760
        %v762 = vpop.f32.mrf.mxu0
        %v763 = vadd.f32 %v639, %v762
        %v764 = vpop.f32.mrf.mxu0
        %v765 = vadd.f32 %v644, %v764
        %v766 = vpop.f32.mrf.mxu0
        %v767 = vadd.f32 %v644, %v766
        %768 = vmatprep.mubr.bf16.mxu0 0
        %769 = vmatmul.mubr.bf16.gmra.mxu0 %v671
        %v770 = vpop.f32.mrf.mxu0
        %v771 = vadd.f32 %v649, %v770
        %v772 = vpop.f32.mrf.mxu0
        %v773 = vadd.f32 %v649, %v772
        %v774 = vpop.f32.mrf.mxu0
        %v775 = vadd.f32 %v654, %v774
        %v776 = vpop.f32.mrf.mxu0
        %v777 = vadd.f32 %v654, %v776
        %778 = vdwg.mxu0
        %vm779 = vcmp.gt.f32.partialorder %v708, 0.0
        %vm780 = vcmp.gt.f32.partialorder %v710, 0.0
        %vm781 = vcmp.gt.f32.partialorder %v761, 0.0
        %vm782 = vcmp.gt.f32.partialorder %v763, 0.0
        %vm783 = vcmp.gt.f32.partialorder %v712, 0.0
        %vm784 = vcmp.gt.f32.partialorder %v714, 0.0
        %vm785 = vcmp.gt.f32.partialorder %v765, 0.0
        %vm786 = vcmp.gt.f32.partialorder %v767, 0.0
        %vm787 = vcmp.gt.f32.partialorder %v718, 0.0
        %vm788 = vcmp.gt.f32.partialorder %v720, 0.0
        %vm789 = vcmp.gt.f32.partialorder %v771, 0.0
        %vm790 = vcmp.gt.f32.partialorder %v773, 0.0
        %vm791 = vcmp.gt.f32.partialorder %v722, 0.0
        %vm792 = vcmp.gt.f32.partialorder %v724, 0.0
        %vm793 = vcmp.gt.f32.partialorder %v775, 0.0
        %vm794 = vcmp.gt.f32.partialorder %v777, 0.0
        %v795 = vmul.f32 %v708, 1.442695
        %v796 = vpow.pop %v795
        %v797 = vmul.f32 %v710, 1.442695
        %v798 = vpow.pop %v797
        %v799 = vmul.f32 %v761, 1.442695
        %v800 = vpow.pop %v799
        %v801 = vmul.f32 %v763, 1.442695
        %v802 = vpow.pop %v801
        %v803 = vmul.f32 %v712, 1.442695
        %v804 = vpow.pop %v803
        %v805 = vmul.f32 %v714, 1.442695
        %v806 = vpow.pop %v805
        %v807 = vmul.f32 %v765, 1.442695
        %v808 = vpow.pop %v807
        %v809 = vmul.f32 %v767, 1.442695
        %v810 = vpow.pop %v809
        %v811 = vmul.f32 %v718, 1.442695
        %v812 = vpow.pop %v811
        %v813 = vmul.f32 %v720, 1.442695
        %v814 = vpow.pop %v813
        %v815 = vmul.f32 %v771, 1.442695
        %v816 = vpow.pop %v815
        %v817 = vmul.f32 %v773, 1.442695
        %v818 = vpow.pop %v817
        %v819 = vmul.f32 %v722, 1.442695
        %v820 = vpow.pop %v819
        %v821 = vmul.f32 %v724, 1.442695
        %v822 = vpow.pop %v821
        %v823 = vmul.f32 %v775, 1.442695
        %v824 = vpow.pop %v823
        %v825 = vmul.f32 %v777, 1.442695
        %v826 = vpow.pop %v825
        %v827 = vsub.f32 %v796, 1.0
        %v828 = vsub.f32 %v798, 1.0
        %v829 = vsub.f32 %v800, 1.0
        %v830 = vsub.f32 %v802, 1.0
        %v831 = vsub.f32 %v804, 1.0
        %v832 = vsub.f32 %v806, 1.0
        %v833 = vsub.f32 %v808, 1.0
        %v834 = vsub.f32 %v810, 1.0
        %v835 = vsub.f32 %v812, 1.0
        %v836 = vsub.f32 %v814, 1.0
        %v837 = vsub.f32 %v816, 1.0
        %v838 = vsub.f32 %v818, 1.0
        %v839 = vsub.f32 %v820, 1.0
        %v840 = vsub.f32 %v822, 1.0
        %v841 = vsub.f32 %v824, 1.0
        %v842 = vsub.f32 %v826, 1.0
        %v843 = vsel %vm779, %v708, %v827
        %v844 = vsel %vm780, %v710, %v828
        %v845 = vsel %vm781, %v761, %v829
        %v846 = vsel %vm782, %v763, %v830
        %v847 = vsel %vm783, %v712, %v831
        %v848 = vsel %vm784, %v714, %v832
        %v849 = vsel %vm785, %v765, %v833
        %v850 = vsel %vm786, %v767, %v834
        %v851 = vsel %vm787, %v718, %v835
        %v852 = vsel %vm788, %v720, %v836
        %v853 = vsel %vm789, %v771, %v837
        %v854 = vsel %vm790, %v773, %v838
        %v855 = vsel %vm791, %v722, %v839
        %v856 = vsel %vm792, %v724, %v840
        %v857 = vsel %vm793, %v775, %v841
        %v858 = vsel %vm794, %v777, %v842
        %v859 = vpack.c.bf16 %v847, %v843
        %v860 = vpack.c.bf16 %v848, %v844
        %v861 = vpack.c.bf16 %v849, %v845
        %v862 = vpack.c.bf16 %v850, %v846
        %v863 = vpack.c.bf16 %v855, %v851
        %v864 = vpack.c.bf16 %v856, %v852
        %v865 = vpack.c.bf16 %v857, %v853
        %v866 = vpack.c.bf16 %v858, %v854
        %v867 = vld [vmem:[%s3] sm:$0xff]
        %v868 = vld [vmem:[%s3 + $0x8] sm:$0xff]
        %v869 = vld [vmem:[%s3 + $0x10] sm:$0xff]
        %v870 = vld [vmem:[%s3 + $0x18] sm:$0xff]
        %v871 = vld [vmem:[%s3 + $0x20] sm:$0xff]
        %v872 = vld [vmem:[%s3 + $0x28] sm:$0xff]
        %v873 = vld [vmem:[%s3 + $0x30] sm:$0xff]
        %v874 = vld [vmem:[%s3 + $0x38] sm:$0xff]
        %v875 = vld [vmem:[%s3 + $0x40] sm:$0xff]
        %v876 = vld [vmem:[%s3 + $0x48] sm:$0xff]
        %v877 = vld [vmem:[%s3 + $0x50] sm:$0xff]
        %v878 = vld [vmem:[%s3 + $0x58] sm:$0xff]
        %v879 = vld [vmem:[%s3 + $0x60] sm:$0xff]
        %v880 = vld [vmem:[%s3 + $0x68] sm:$0xff]
        %v881 = vld [vmem:[%s3 + $0x70] sm:$0xff]
        %v882 = vld [vmem:[%s3 + $0x78] sm:$0xff]
        %v883 = vld [vmem:[%s3 + $0x80] sm:$0xff]
        %v884 = vld [vmem:[%s3 + $0x88] sm:$0xff]
        %v885 = vld [vmem:[%s3 + $0x90] sm:$0xff]
        %v886 = vld [vmem:[%s3 + $0x98] sm:$0xff]
        %v887 = vld [vmem:[%s3 + $0xa0] sm:$0xff]
        %v888 = vld [vmem:[%s3 + $0xa8] sm:$0xff]
        %v889 = vld [vmem:[%s3 + $0xb0] sm:$0xff]
        %v890 = vld [vmem:[%s3 + $0xb8] sm:$0xff]
        %v891 = vld [vmem:[%s3 + $0xc0] sm:$0xff]
        %v892 = vld [vmem:[%s3 + $0xc8] sm:$0xff]
        %v893 = vld [vmem:[%s3 + $0xd0] sm:$0xff]
        %v894 = vld [vmem:[%s3 + $0xd8] sm:$0xff]
        %v895 = vld [vmem:[%s3 + $0xe0] sm:$0xff]
        %v896 = vld [vmem:[%s3 + $0xe8] sm:$0xff]
        %v897 = vld [vmem:[%s3 + $0xf0] sm:$0xff]
        %v898 = vld [vmem:[%s3 + $0xf8] sm:$0xff]
        %v899 = vld [vmem:[%s3 + $0x100] sm:$0xff]
        %v900 = vld [vmem:[%s3 + $0x108] sm:$0xff]
        %v901 = vld [vmem:[%s3 + $0x110] sm:$0xff]
        %v902 = vld [vmem:[%s3 + $0x118] sm:$0xff]
        %v903 = vld [vmem:[%s3 + $0x120] sm:$0xff]
        %v904 = vld [vmem:[%s3 + $0x128] sm:$0xff]
        %v905 = vld [vmem:[%s3 + $0x130] sm:$0xff]
        %v906 = vld [vmem:[%s3 + $0x138] sm:$0xff]
        %v907 = vld [vmem:[%s3 + $0x140] sm:$0xff]
        %v908 = vld [vmem:[%s3 + $0x148] sm:$0xff]
        %v909 = vld [vmem:[%s3 + $0x150] sm:$0xff]
        %v910 = vld [vmem:[%s3 + $0x158] sm:$0xff]
        %v911 = vld [vmem:[%s3 + $0x160] sm:$0xff]
        %v912 = vld [vmem:[%s3 + $0x168] sm:$0xff]
        %v913 = vld [vmem:[%s3 + $0x170] sm:$0xff]
        %v914 = vld [vmem:[%s3 + $0x178] sm:$0xff]
        %v915 = vld [vmem:[%s3 + $0x180] sm:$0xff]
        %v916 = vld [vmem:[%s3 + $0x188] sm:$0xff]
        %v917 = vld [vmem:[%s3 + $0x190] sm:$0xff]
        %v918 = vld [vmem:[%s3 + $0x198] sm:$0xff]
        %v919 = vld [vmem:[%s3 + $0x1a0] sm:$0xff]
        %v920 = vld [vmem:[%s3 + $0x1a8] sm:$0xff]
        %v921 = vld [vmem:[%s3 + $0x1b0] sm:$0xff]
        %v922 = vld [vmem:[%s3 + $0x1b8] sm:$0xff]
        %v923 = vld [vmem:[%s3 + $0x1c0] sm:$0xff]
        %v924 = vld [vmem:[%s3 + $0x1c8] sm:$0xff]
        %v925 = vld [vmem:[%s3 + $0x1d0] sm:$0xff]
        %v926 = vld [vmem:[%s3 + $0x1d8] sm:$0xff]
        %v927 = vld [vmem:[%s3 + $0x1e0] sm:$0xff]
        %v928 = vld [vmem:[%s3 + $0x1e8] sm:$0xff]
        %v991 = vunpack.c.l.b16 %v867
        %v992 = vunpack.c.h.b16 %v867
        %v993 = vunpack.c.l.b16 %v868
        %v994 = vunpack.c.h.b16 %v868
        %v995 = vunpack.c.l.b16 %v869
        %v996 = vunpack.c.h.b16 %v869
        %v997 = vunpack.c.l.b16 %v870
        %v998 = vunpack.c.h.b16 %v870
        %v999 = vunpack.c.l.b16 %v871
        %v1000 = vunpack.c.h.b16 %v871
        %v1001 = vunpack.c.l.b16 %v872
        %v1002 = vunpack.c.h.b16 %v872
        %v1003 = vunpack.c.l.b16 %v873
        %v1004 = vunpack.c.h.b16 %v873
        %v1005 = vunpack.c.l.b16 %v874
        %v1006 = vunpack.c.h.b16 %v874
        %v1007 = vunpack.c.l.b16 %v875
        %v1008 = vunpack.c.h.b16 %v875
        %v1009 = vunpack.c.l.b16 %v876
        %v1010 = vunpack.c.h.b16 %v876
        %v1011 = vunpack.c.l.b16 %v877
        %v1012 = vunpack.c.h.b16 %v877
        %v1013 = vunpack.c.l.b16 %v878
        %v1014 = vunpack.c.h.b16 %v878
        %v1015 = vunpack.c.l.b16 %v879
        %v1016 = vunpack.c.h.b16 %v879
        %v1017 = vunpack.c.l.b16 %v880
        %v1018 = vunpack.c.h.b16 %v880
        %v1019 = vunpack.c.l.b16 %v881
        %v1020 = vunpack.c.h.b16 %v881
        %v1021 = vunpack.c.l.b16 %v882
        %v1022 = vunpack.c.h.b16 %v882
        %v1023 = vunpack.c.l.b16 %v883
        %v1024 = vunpack.c.h.b16 %v883
        %v1025 = vunpack.c.l.b16 %v884
        %v1026 = vunpack.c.h.b16 %v884
        %v1027 = vunpack.c.l.b16 %v885
        %v1028 = vunpack.c.h.b16 %v885
        %v1029 = vunpack.c.l.b16 %v886
        %v1030 = vunpack.c.h.b16 %v886
        %v1031 = vunpack.c.l.b16 %v887
        %v1032 = vunpack.c.h.b16 %v887
        %v1033 = vunpack.c.l.b16 %v888
        %v1034 = vunpack.c.h.b16 %v888
        %v1035 = vunpack.c.l.b16 %v889
        %v1036 = vunpack.c.h.b16 %v889
        %v1037 = vunpack.c.l.b16 %v890
        %v1038 = vunpack.c.h.b16 %v890
        %v1039 = vunpack.c.l.b16 %v891
        %v1040 = vunpack.c.h.b16 %v891
        %v1041 = vunpack.c.l.b16 %v892
        %v1042 = vunpack.c.h.b16 %v892
        %v1043 = vunpack.c.l.b16 %v893
        %v1044 = vunpack.c.h.b16 %v893
        %v1045 = vunpack.c.l.b16 %v894
        %v1046 = vunpack.c.h.b16 %v894
        %v1047 = vunpack.c.l.b16 %v895
        %v1048 = vunpack.c.h.b16 %v895
        %v1049 = vunpack.c.l.b16 %v896
        %v1050 = vunpack.c.h.b16 %v896
        %v1051 = vunpack.c.l.b16 %v897
        %v1052 = vunpack.c.h.b16 %v897
        %v1053 = vunpack.c.l.b16 %v898
        %v1054 = vunpack.c.h.b16 %v898
        %v1055 = vunpack.c.l.b16 %v899
        %v1056 = vunpack.c.h.b16 %v899
        %v1057 = vunpack.c.l.b16 %v900
        %v1058 = vunpack.c.h.b16 %v900
        %v1059 = vunpack.c.l.b16 %v901
        %v1060 = vunpack.c.h.b16 %v901
        %v1061 = vunpack.c.l.b16 %v902
        %v1062 = vunpack.c.h.b16 %v902
        %v1063 = vunpack.c.l.b16 %v903
        %v1064 = vunpack.c.h.b16 %v903
        %v1065 = vunpack.c.l.b16 %v904
        %v1066 = vunpack.c.h.b16 %v904
        %v1067 = vunpack.c.l.b16 %v905
        %v1068 = vunpack.c.h.b16 %v905
        %v1069 = vunpack.c.l.b16 %v906
        %v1070 = vunpack.c.h.b16 %v906
        %v1071 = vunpack.c.l.b16 %v907
        %v1072 = vunpack.c.h.b16 %v907
        %v1073 = vunpack.c.l.b16 %v908
        %v1074 = vunpack.c.h.b16 %v908
        %v1075 = vunpack.c.l.b16 %v909
        %v1076 = vunpack.c.h.b16 %v909
        %v1077 = vunpack.c.l.b16 %v910
        %v1078 = vunpack.c.h.b16 %v910
        %v1079 = vunpack.c.l.b16 %v911
        %v1080 = vunpack.c.h.b16 %v911
        %v1081 = vunpack.c.l.b16 %v912
        %v1082 = vunpack.c.h.b16 %v912
        %v1083 = vunpack.c.l.b16 %v913
        %v1084 = vunpack.c.h.b16 %v913
        %v1085 = vunpack.c.l.b16 %v914
        %v1086 = vunpack.c.h.b16 %v914
        %v1087 = vunpack.c.l.b16 %v915
        %v1088 = vunpack.c.h.b16 %v915
        %v1089 = vunpack.c.l.b16 %v916
        %v1090 = vunpack.c.h.b16 %v916
        %v1091 = vunpack.c.l.b16 %v917
        %v1092 = vunpack.c.h.b16 %v917
        %v1093 = vunpack.c.l.b16 %v918
        %v1094 = vunpack.c.h.b16 %v918
        %v1095 = vunpack.c.l.b16 %v919
        %v1096 = vunpack.c.h.b16 %v919
        %v1097 = vunpack.c.l.b16 %v920
        %v1098 = vunpack.c.h.b16 %v920
        %v1099 = vunpack.c.l.b16 %v921
        %v1100 = vunpack.c.h.b16 %v921
        %v1101 = vunpack.c.l.b16 %v922
        %v1102 = vunpack.c.h.b16 %v922
        %v1103 = vunpack.c.l.b16 %v923
        %v1104 = vunpack.c.h.b16 %v923
        %v1105 = vunpack.c.l.b16 %v924
        %v1106 = vunpack.c.h.b16 %v924
        %v1107 = vunpack.c.l.b16 %v925
        %v1108 = vunpack.c.h.b16 %v925
        %v1109 = vunpack.c.l.b16 %v926
        %v1110 = vunpack.c.h.b16 %v926
        %v1111 = vunpack.c.l.b16 %v927
        %v1112 = vunpack.c.h.b16 %v927
        %v1113 = vunpack.c.l.b16 %v928
        %v1114 = vunpack.c.h.b16 %v928
        %v1115 = vpack.c.b16 %v993, %v991
        %v1116 = vpack.c.b16 %v994, %v992
        %v1117 = vpack.c.b16 %v997, %v995
        %v1118 = vpack.c.b16 %v998, %v996
        %v1119 = vpack.c.b16 %v1001, %v999
        %v1120 = vpack.c.b16 %v1002, %v1000
        %v1121 = vpack.c.b16 %v1005, %v1003
        %v1122 = vpack.c.b16 %v1006, %v1004
        %v1123 = vpack.c.b16 %v1009, %v1007
        %v1124 = vpack.c.b16 %v1010, %v1008
        %v1125 = vpack.c.b16 %v1013, %v1011
        %v1126 = vpack.c.b16 %v1014, %v1012
        %v1127 = vpack.c.b16 %v1017, %v1015
        %v1128 = vpack.c.b16 %v1018, %v1016
        %v1129 = vpack.c.b16 %v1021, %v1019
        %v1130 = vpack.c.b16 %v1022, %v1020
        %v1131 = vpack.c.b16 %v1025, %v1023
        %v1132 = vpack.c.b16 %v1026, %v1024
        %v1133 = vpack.c.b16 %v1029, %v1027
        %v1134 = vpack.c.b16 %v1030, %v1028
        %v1135 = vpack.c.b16 %v1033, %v1031
        %v1136 = vpack.c.b16 %v1034, %v1032
        %v1137 = vpack.c.b16 %v1037, %v1035
        %v1138 = vpack.c.b16 %v1038, %v1036
        %v1139 = vpack.c.b16 %v1041, %v1039
        %v1140 = vpack.c.b16 %v1042, %v1040
        %v1141 = vpack.c.b16 %v1045, %v1043
        %v1142 = vpack.c.b16 %v1046, %v1044
        %v1143 = vpack.c.b16 %v1049, %v1047
        %v1144 = vpack.c.b16 %v1050, %v1048
        %v1145 = vpack.c.b16 %v1053, %v1051
        %v1146 = vpack.c.b16 %v1054, %v1052
        %v1147 = vpack.c.b16 %v1057, %v1055
        %v1148 = vpack.c.b16 %v1058, %v1056
        %v1149 = vpack.c.b16 %v1061, %v1059
        %v1150 = vpack.c.b16 %v1062, %v1060
        %v1151 = vpack.c.b16 %v1065, %v1063
        %v1152 = vpack.c.b16 %v1066, %v1064
        %v1153 = vpack.c.b16 %v1069, %v1067
        %v1154 = vpack.c.b16 %v1070, %v1068
        %v1155 = vpack.c.b16 %v1073, %v1071
        %v1156 = vpack.c.b16 %v1074, %v1072
        %v1157 = vpack.c.b16 %v1077, %v1075
        %v1158 = vpack.c.b16 %v1078, %v1076
        %v1159 = vpack.c.b16 %v1081, %v1079
        %v1160 = vpack.c.b16 %v1082, %v1080
        %v1161 = vpack.c.b16 %v1085, %v1083
        %v1162 = vpack.c.b16 %v1086, %v1084
        %v1163 = vpack.c.b16 %v1089, %v1087
        %v1164 = vpack.c.b16 %v1090, %v1088
        %v1165 = vpack.c.b16 %v1093, %v1091
        %v1166 = vpack.c.b16 %v1094, %v1092
        %v1167 = vpack.c.b16 %v1097, %v1095
        %v1168 = vpack.c.b16 %v1098, %v1096
        %v1169 = vpack.c.b16 %v1101, %v1099
        %v1170 = vpack.c.b16 %v1102, %v1100
        %v1171 = vpack.c.b16 %v1105, %v1103
        %v1172 = vpack.c.b16 %v1106, %v1104
        %v1173 = vpack.c.b16 %v1109, %v1107
        %v1174 = vpack.c.b16 %v1110, %v1108
        %v1175 = vpack.c.b16 %v1113, %v1111
        %v1176 = vpack.c.b16 %v1114, %v1112
        %vm1239 = vcmask 916480
        %v1241 = vsel %vm1239, %v862, 0
        %v1244 = vsel %vm1239, %v866, 0
        %1246 = vmatprep.subr.bf16.mxu0 %v1130
        %1247 = vmatpush1.bf16.msra.mxu0 %v1129
        %1248 = vmatprep.subr.bf16.mxu0 %v1128
        %1249 = vmatpush1.bf16.msra.mxu0 %v1127
        %1250 = vmatprep.subr.bf16.mxu0 %v1126
        %1251 = vmatpush1.bf16.msra.mxu0 %v1125
        %1252 = vmatprep.subr.bf16.mxu0 %v1124
        %1253 = vmatpush1.bf16.msra.mxu0 %v1123
        %1254 = vmatprep.subr.bf16.mxu0 %v1122
        %1255 = vmatpush1.bf16.msra.mxu0 %v1121
        %1256 = vmatprep.subr.bf16.mxu0 %v1120
        %1257 = vmatpush1.bf16.msra.mxu0 %v1119
        %1258 = vmatprep.subr.bf16.mxu0 %v1118
        %1259 = vmatpush1.bf16.msra.mxu0 %v1117
        %1260 = vmatprep.subr.bf16.mxu0 %v1116
        %1261 = vmatpush1.bf16.msra.mxu0 %v1115
        %1262 = vmatprep.subr.bf16.mxu0 %v1146
        %1263 = vmatpush2.bf16.msra.mxu0 %v1145
        %1264 = vmatprep.subr.bf16.mxu0 %v1144
        %1265 = vmatpush2.bf16.msra.mxu0 %v1143
        %1266 = vmatprep.subr.bf16.mxu0 %v1142
        %1267 = vmatpush2.bf16.msra.mxu0 %v1141
        %1268 = vmatprep.subr.bf16.mxu0 %v1140
        %1269 = vmatpush2.bf16.msra.mxu0 %v1139
        %1270 = vmatprep.subr.bf16.mxu0 %v1138
        %1271 = vmatpush2.bf16.msra.mxu0 %v1137
        %1272 = vmatprep.subr.bf16.mxu0 %v1136
        %1273 = vmatpush2.bf16.msra.mxu0 %v1135
        %1274 = vmatprep.subr.bf16.mxu0 %v1134
        %1275 = vmatpush2.bf16.msra.mxu0 %v1133
        %1276 = vmatprep.subr.bf16.mxu0 %v1132
        %1277 = vmatpush2.bf16.msra.mxu0 %v1131
        %1278 = vmatprep.mubr.bf16.mxu0 %v860
        %1279 = vmatmul.mubr.bf16.gmra.mxu0 %v859
        %v1280 = vpop.f32.mrf.mxu0
        %v1281 = vadd.f32 0.0, %v1280
        %v1282 = vpop.f32.mrf.mxu0
        %v1283 = vadd.f32 0.0, %v1282
        %v1284 = vpop.f32.mrf.mxu0
        %v1285 = vadd.f32 0.0, %v1284
        %v1286 = vpop.f32.mrf.mxu0
        %v1287 = vadd.f32 0.0, %v1286
        %1288 = vmatprep.mubr.bf16.mxu0 %v864
        %1289 = vmatmul.mubr.bf16.gmra.mxu0 %v863
        %v1290 = vpop.f32.mrf.mxu0
        %v1291 = vadd.f32 0.0, %v1290
        %v1292 = vpop.f32.mrf.mxu0
        %v1293 = vadd.f32 0.0, %v1292
        %v1294 = vpop.f32.mrf.mxu0
        %v1295 = vadd.f32 0.0, %v1294
        %v1296 = vpop.f32.mrf.mxu0
        %v1297 = vadd.f32 0.0, %v1296
        %1298 = vdwg.mxu0
        %1299 = vmatprep.subr.bf16.mxu0 %v1162
        %1300 = vmatpush1.bf16.msra.mxu0 %v1161
        %1301 = vmatprep.subr.bf16.mxu0 %v1160
        %1302 = vmatpush1.bf16.msra.mxu0 %v1159
        %1303 = vmatprep.subr.bf16.mxu0 %v1158
        %1304 = vmatpush1.bf16.msra.mxu0 %v1157
        %1305 = vmatprep.subr.bf16.mxu0 %v1156
        %1306 = vmatpush1.bf16.msra.mxu0 %v1155
        %1307 = vmatprep.subr.bf16.mxu0 %v1154
        %1308 = vmatpush1.bf16.msra.mxu0 %v1153
        %1309 = vmatprep.subr.bf16.mxu0 %v1152
        %1310 = vmatpush1.bf16.msra.mxu0 %v1151
        %1311 = vmatprep.subr.bf16.mxu0 %v1150
        %1312 = vmatpush1.bf16.msra.mxu0 %v1149
        %1313 = vmatprep.subr.bf16.mxu0 %v1148
        %1314 = vmatpush1.bf16.msra.mxu0 %v1147
        %1315 = vmatprep.subr.bf16.mxu0 0
        %1316 = vmatpush2.bf16.msra.mxu0 0
        %1317 = vmatprep.subr.bf16.mxu0 %v1176
        %1318 = vmatpush2.bf16.msra.mxu0 %v1175
        %1319 = vmatprep.subr.bf16.mxu0 %v1174
        %1320 = vmatpush2.bf16.msra.mxu0 %v1173
        %1321 = vmatprep.subr.bf16.mxu0 %v1172
        %1322 = vmatpush2.bf16.msra.mxu0 %v1171
        %1323 = vmatprep.subr.bf16.mxu0 %v1170
        %1324 = vmatpush2.bf16.msra.mxu0 %v1169
        %1325 = vmatprep.subr.bf16.mxu0 %v1168
        %1326 = vmatpush2.bf16.msra.mxu0 %v1167
        %1327 = vmatprep.subr.bf16.mxu0 %v1166
        %1328 = vmatpush2.bf16.msra.mxu0 %v1165
        %1329 = vmatprep.subr.bf16.mxu0 %v1164
        %1330 = vmatpush2.bf16.msra.mxu0 %v1163
        %1331 = vmatprep.mubr.bf16.mxu0 %v1241
        %1332 = vmatmul.mubr.bf16.gmra.mxu0 %v861
        %v1333 = vpop.f32.mrf.mxu0
        %v1334 = vadd.f32 %v1281, %v1333
        %v1335 = vpop.f32.mrf.mxu0
        %v1336 = vadd.f32 %v1283, %v1335
        %v1337 = vpop.f32.mrf.mxu0
        %v1338 = vadd.f32 %v1285, %v1337
        %v1339 = vpop.f32.mrf.mxu0
        %v1340 = vadd.f32 %v1287, %v1339
        %1341 = vmatprep.mubr.bf16.mxu0 %v1244
        %1342 = vmatmul.mubr.bf16.gmra.mxu0 %v865
        %v1343 = vpop.f32.mrf.mxu0
        %v1344 = vadd.f32 %v1291, %v1343
        %v1345 = vpop.f32.mrf.mxu0
        %v1346 = vadd.f32 %v1293, %v1345
        %v1347 = vpop.f32.mrf.mxu0
        %v1348 = vadd.f32 %v1295, %v1347
        %v1349 = vpop.f32.mrf.mxu0
        %v1350 = vadd.f32 %v1297, %v1349
        %1351 = vdwg.mxu0
        %v1352 = vpack.c.bf16 %v1338, %v1334
        %v1353 = vpack.c.bf16 %v1340, %v1336
        %v1354 = vpack.c.bf16 %v1348, %v1344
        %v1355 = vpack.c.bf16 %v1350, %v1346
        %v1356 = vld [vmem:[#allocation4] sm:$0xff]
        %v1357 = vld [vmem:[#allocation4 + $0x8] sm:$0xff]
        %v1358 = vld [vmem:[#allocation4 + $0x10] sm:$0xff]
        %v1359 = vld [vmem:[#allocation4 + $0x18] sm:$0xff]
        %v1360 = vld [vmem:[#allocation4 + $0x20] sm:$0xff]
        %v1361 = vld [vmem:[#allocation4 + $0x28] sm:$0xff]
        %v1362 = vld [vmem:[#allocation4 + $0x30] sm:$0xff]
        %v1363 = vld [vmem:[#allocation4 + $0x38] sm:$0xff]
        %v1364 = vld [vmem:[%s5] sm:$0xff]
        %v1365 = vld [vmem:[%s5 + $0x8] sm:$0xff]
        %v1366 = vld [vmem:[%s5 + $0x10] sm:$0xff]
        %v1367 = vld [vmem:[%s5 + $0x18] sm:$0xff]
        %v1368 = vld [vmem:[%s5 + $0x20] sm:$0xff]
        %v1369 = vld [vmem:[%s5 + $0x28] sm:$0xff]
        %v1370 = vld [vmem:[%s5 + $0x30] sm:$0xff]
        %v1371 = vld [vmem:[%s5 + $0x38] sm:$0xff]
        %1376 = vrot.lane.b32.xlu0 %v1352, 127
        %v1377 = vpop.permute.xlu0 %1376
        %1378 = vrot.lane.b32.xlu0 %v1353, 127
        %v1379 = vpop.permute.xlu0 %1378
        %1380 = vrot.lane.b32.xlu0 %v1354, 127
        %v1381 = vpop.permute.xlu0 %1380
        %1382 = vrot.lane.b32.xlu0 %v1355, 127
        %v1383 = vpop.permute.xlu0 %1382
        %v1384 = vsel %vm580, %v1377, %v1379
        %v1385 = vsel %vm580, %v1381, %v1383
        %1390 = vrot.lane.b32.xlu0 %v1352, 126
        %v1391 = vpop.permute.xlu0 %1390
        %1392 = vrot.lane.b32.xlu0 %v1353, 126
        %v1393 = vpop.permute.xlu0 %1392
        %1394 = vrot.lane.b32.xlu0 %v1354, 126
        %v1395 = vpop.permute.xlu0 %1394
        %1396 = vrot.lane.b32.xlu0 %v1355, 126
        %v1397 = vpop.permute.xlu0 %1396
        %v1398 = vsel %vm596, %v1391, %v1393
        %v1399 = vsel %vm596, %v1395, %v1397
        %1404 = vrot.lane.b32.xlu0 %v1352, 125
        %v1405 = vpop.permute.xlu0 %1404
        %1406 = vrot.lane.b32.xlu0 %v1353, 125
        %v1407 = vpop.permute.xlu0 %1406
        %1408 = vrot.lane.b32.xlu0 %v1354, 125
        %v1409 = vpop.permute.xlu0 %1408
        %1410 = vrot.lane.b32.xlu0 %v1355, 125
        %v1411 = vpop.permute.xlu0 %1410
        %v1412 = vsel %vm612, %v1405, %v1407
        %v1413 = vsel %vm612, %v1409, %v1411
        %1418 = vrot.lane.b32.xlu0 %v1352, 124
        %v1419 = vpop.permute.xlu0 %1418
        %1420 = vrot.lane.b32.xlu0 %v1353, 124
        %v1421 = vpop.permute.xlu0 %1420
        %1422 = vrot.lane.b32.xlu0 %v1354, 124
        %v1423 = vpop.permute.xlu0 %1422
        %1424 = vrot.lane.b32.xlu0 %v1355, 124
        %v1425 = vpop.permute.xlu0 %1424
        %v1426 = vsel %vm628, %v1419, %v1421
        %v1427 = vsel %vm628, %v1423, %v1425
        %1433 = vset.pattern.permute.xlu0 0
        %1434 = vperm.xlu0 %1433, %v1364
        %v1435 = vpop.permute.xlu0 %1434
        %1438 = vset.pattern.permute.xlu0 0
        %1439 = vperm.xlu0 %1438, %v1365
        %v1440 = vpop.permute.xlu0 %1439
        %1443 = vset.pattern.permute.xlu0 0
        %1444 = vperm.xlu0 %1443, %v1366
        %v1445 = vpop.permute.xlu0 %1444
        %1448 = vset.pattern.permute.xlu0 0
        %1449 = vperm.xlu0 %1448, %v1367
        %v1450 = vpop.permute.xlu0 %1449
        %1453 = vset.pattern.permute.xlu0 0
        %1454 = vperm.xlu0 %1453, %v1368
        %v1455 = vpop.permute.xlu0 %1454
        %1458 = vset.pattern.permute.xlu0 0
        %1459 = vperm.xlu0 %1458, %v1369
        %v1460 = vpop.permute.xlu0 %1459
        %1463 = vset.pattern.permute.xlu0 0
        %1464 = vperm.xlu0 %1463, %v1370
        %v1465 = vpop.permute.xlu0 %1464
        %1468 = vset.pattern.permute.xlu0 0
        %1469 = vperm.xlu0 %1468, %v1371
        %v1470 = vpop.permute.xlu0 %1469
        %v1480 = vunpack.c.l.b16 %v1356
        %v1481 = vunpack.c.h.b16 %v1356
        %v1482 = vunpack.c.l.b16 %v1357
        %v1483 = vunpack.c.h.b16 %v1357
        %v1484 = vunpack.c.l.b16 %v1358
        %v1485 = vunpack.c.h.b16 %v1358
        %v1486 = vunpack.c.l.b16 %v1359
        %v1487 = vunpack.c.h.b16 %v1359
        %v1488 = vunpack.c.l.b16 %v1360
        %v1489 = vunpack.c.h.b16 %v1360
        %v1490 = vunpack.c.l.b16 %v1361
        %v1491 = vunpack.c.h.b16 %v1361
        %v1492 = vunpack.c.l.b16 %v1362
        %v1493 = vunpack.c.h.b16 %v1362
        %v1494 = vunpack.c.l.b16 %v1363
        %v1495 = vunpack.c.h.b16 %v1363
        %v1496 = vpack.c.b16 %v1482, %v1480
        %v1497 = vpack.c.b16 %v1483, %v1481
        %v1498 = vpack.c.b16 %v1486, %v1484
        %v1499 = vpack.c.b16 %v1487, %v1485
        %v1500 = vpack.c.b16 %v1490, %v1488
        %v1501 = vpack.c.b16 %v1491, %v1489
        %v1502 = vpack.c.b16 %v1494, %v1492
        %v1503 = vpack.c.b16 %v1495, %v1493
        %vm1508 = vcmask 261120
        %v1510 = vsel %vm1508, %v1497, 0
        %v1513 = vsel %vm1508, %v1499, 0
        %v1516 = vsel %vm1508, %v1501, 0
        %v1519 = vsel %vm1508, %v1503, 0
        %1521 = vmatprep.subr.bf16.mxu0 %v1411
        %1522 = vmatpush1.bf16.msra.mxu0 %v1413
        %1523 = vmatprep.subr.bf16.mxu0 %v1407
        %1524 = vmatpush1.bf16.msra.mxu0 %v1412
        %1525 = vmatprep.subr.bf16.mxu0 %v1397
        %1526 = vmatpush1.bf16.msra.mxu0 %v1399
        %1527 = vmatprep.subr.bf16.mxu0 %v1393
        %1528 = vmatpush1.bf16.msra.mxu0 %v1398
        %1529 = vmatprep.subr.bf16.mxu0 %v1383
        %1530 = vmatpush1.bf16.msra.mxu0 %v1385
        %1531 = vmatprep.subr.bf16.mxu0 %v1379
        %1532 = vmatpush1.bf16.msra.mxu0 %v1384
        %1533 = vmatprep.subr.bf16.mxu0 %v1355
        %1534 = vmatpush1.bf16.msra.mxu0 %v1354
        %1535 = vmatprep.subr.bf16.mxu0 %v1353
        %1536 = vmatpush1.bf16.msra.mxu0 %v1352
        %1537 = vmatprep.subr.bf16.mxu0 0
        %1538 = vmatpush2.bf16.msra.mxu0 0
        %1539 = vmatprep.subr.bf16.mxu0 0
        %1540 = vmatpush2.bf16.msra.mxu0 0
        %1541 = vmatprep.subr.bf16.mxu0 0
        %1542 = vmatpush2.bf16.msra.mxu0 0
        %1543 = vmatprep.subr.bf16.mxu0 0
        %1544 = vmatpush2.bf16.msra.mxu0 0
        %1545 = vmatprep.subr.bf16.mxu0 0
        %1546 = vmatpush2.bf16.msra.mxu0 0
        %1547 = vmatprep.subr.bf16.mxu0 0
        %1548 = vmatpush2.bf16.msra.mxu0 0
        %1549 = vmatprep.subr.bf16.mxu0 %v1425
        %1550 = vmatpush2.bf16.msra.mxu0 %v1427
        %1551 = vmatprep.subr.bf16.mxu0 %v1421
        %1552 = vmatpush2.bf16.msra.mxu0 %v1426
        %1553 = vmatprep.mubr.bf16.mxu0 %v1510
        %1554 = vmatmul.mubr.bf16.gmra.mxu0 %v1496
        %v1555 = vpop.f32.mrf.mxu0
        %v1556 = vadd.f32 %v1435, %v1555
        %v1557 = vpop.f32.mrf.mxu0
        %v1558 = vadd.f32 %v1435, %v1557
        %v1559 = vpop.f32.mrf.mxu0
        %v1560 = vadd.f32 %v1440, %v1559
        %v1561 = vpop.f32.mrf.mxu0
        %v1562 = vadd.f32 %v1440, %v1561
        %1563 = vmatprep.mubr.bf16.mxu0 %v1513
        %1564 = vmatmul.mubr.bf16.gmra.mxu0 %v1498
        %v1565 = vpop.f32.mrf.mxu0
        %v1566 = vadd.f32 %v1445, %v1565
        %v1567 = vpop.f32.mrf.mxu0
        %v1568 = vadd.f32 %v1445, %v1567
        %v1569 = vpop.f32.mrf.mxu0
        %v1570 = vadd.f32 %v1450, %v1569
        %v1571 = vpop.f32.mrf.mxu0
        %v1572 = vadd.f32 %v1450, %v1571
        %1573 = vmatprep.mubr.bf16.mxu0 %v1516
        %1574 = vmatmul.mubr.bf16.gmra.mxu0 %v1500
        %v1575 = vpop.f32.mrf.mxu0
        %v1576 = vadd.f32 %v1455, %v1575
        %v1577 = vpop.f32.mrf.mxu0
        %v1578 = vadd.f32 %v1455, %v1577
        %v1579 = vpop.f32.mrf.mxu0
        %v1580 = vadd.f32 %v1460, %v1579
        %v1581 = vpop.f32.mrf.mxu0
        %v1582 = vadd.f32 %v1460, %v1581
        %1583 = vmatprep.mubr.bf16.mxu0 %v1519
        %1584 = vmatmul.mubr.bf16.gmra.mxu0 %v1502
        %v1585 = vpop.f32.mrf.mxu0
        %v1586 = vadd.f32 %v1465, %v1585
        %v1587 = vpop.f32.mrf.mxu0
        %v1588 = vadd.f32 %v1465, %v1587
        %v1589 = vpop.f32.mrf.mxu0
        %v1590 = vadd.f32 %v1470, %v1589
        %v1591 = vpop.f32.mrf.mxu0
        %v1592 = vadd.f32 %v1470, %v1591
        %1593 = vdwg.mxu0
        %vm1594 = vcmp.gt.f32.partialorder %v1556, 0.0
        %vm1595 = vcmp.gt.f32.partialorder %v1558, 0.0
        %vm1596 = vcmp.gt.f32.partialorder %v1560, 0.0
        %vm1597 = vcmp.gt.f32.partialorder %v1562, 0.0
        %vm1598 = vcmp.gt.f32.partialorder %v1566, 0.0
        %vm1599 = vcmp.gt.f32.partialorder %v1568, 0.0
        %vm1600 = vcmp.gt.f32.partialorder %v1570, 0.0
        %vm1601 = vcmp.gt.f32.partialorder %v1572, 0.0
        %vm1602 = vcmp.gt.f32.partialorder %v1576, 0.0
        %vm1603 = vcmp.gt.f32.partialorder %v1578, 0.0
        %vm1604 = vcmp.gt.f32.partialorder %v1580, 0.0
        %vm1605 = vcmp.gt.f32.partialorder %v1582, 0.0
        %vm1606 = vcmp.gt.f32.partialorder %v1586, 0.0
        %vm1607 = vcmp.gt.f32.partialorder %v1588, 0.0
        %vm1608 = vcmp.gt.f32.partialorder %v1590, 0.0
        %vm1609 = vcmp.gt.f32.partialorder %v1592, 0.0
        %v1610 = vmul.f32 %v1556, 1.442695
        %v1611 = vpow.pop %v1610
        %v1612 = vmul.f32 %v1558, 1.442695
        %v1613 = vpow.pop %v1612
        %v1614 = vmul.f32 %v1560, 1.442695
        %v1615 = vpow.pop %v1614
        %v1616 = vmul.f32 %v1562, 1.442695
        %v1617 = vpow.pop %v1616
        %v1618 = vmul.f32 %v1566, 1.442695
        %v1619 = vpow.pop %v1618
        %v1620 = vmul.f32 %v1568, 1.442695
        %v1621 = vpow.pop %v1620
        %v1622 = vmul.f32 %v1570, 1.442695
        %v1623 = vpow.pop %v1622
        %v1624 = vmul.f32 %v1572, 1.442695
        %v1625 = vpow.pop %v1624
        %v1626 = vmul.f32 %v1576, 1.442695
        %v1627 = vpow.pop %v1626
        %v1628 = vmul.f32 %v1578, 1.442695
        %v1629 = vpow.pop %v1628
        %v1630 = vmul.f32 %v1580, 1.442695
        %v1631 = vpow.pop %v1630
        %v1632 = vmul.f32 %v1582, 1.442695
        %v1633 = vpow.pop %v1632
        %v1634 = vmul.f32 %v1586, 1.442695
        %v1635 = vpow.pop %v1634
        %v1636 = vmul.f32 %v1588, 1.442695
        %v1637 = vpow.pop %v1636
        %v1638 = vmul.f32 %v1590, 1.442695
        %v1639 = vpow.pop %v1638
        %v1640 = vmul.f32 %v1592, 1.442695
        %v1641 = vpow.pop %v1640
        %v1642 = vsub.f32 %v1611, 1.0
        %v1643 = vsub.f32 %v1613, 1.0
        %v1644 = vsub.f32 %v1615, 1.0
        %v1645 = vsub.f32 %v1617, 1.0
        %v1646 = vsub.f32 %v1619, 1.0
        %v1647 = vsub.f32 %v1621, 1.0
        %v1648 = vsub.f32 %v1623, 1.0
        %v1649 = vsub.f32 %v1625, 1.0
        %v1650 = vsub.f32 %v1627, 1.0
        %v1651 = vsub.f32 %v1629, 1.0
        %v1652 = vsub.f32 %v1631, 1.0
        %v1653 = vsub.f32 %v1633, 1.0
        %v1654 = vsub.f32 %v1635, 1.0
        %v1655 = vsub.f32 %v1637, 1.0
        %v1656 = vsub.f32 %v1639, 1.0
        %v1657 = vsub.f32 %v1641, 1.0
        %v1658 = vsel %vm1594, %v1556, %v1642
        %v1659 = vsel %vm1595, %v1558, %v1643
        %v1660 = vsel %vm1596, %v1560, %v1644
        %v1661 = vsel %vm1597, %v1562, %v1645
        %v1662 = vsel %vm1598, %v1566, %v1646
        %v1663 = vsel %vm1599, %v1568, %v1647
        %v1664 = vsel %vm1600, %v1570, %v1648
        %v1665 = vsel %vm1601, %v1572, %v1649
        %v1666 = vsel %vm1602, %v1576, %v1650
        %v1667 = vsel %vm1603, %v1578, %v1651
        %v1668 = vsel %vm1604, %v1580, %v1652
        %v1669 = vsel %vm1605, %v1582, %v1653
        %v1670 = vsel %vm1606, %v1586, %v1654
        %v1671 = vsel %vm1607, %v1588, %v1655
        %v1672 = vsel %vm1608, %v1590, %v1656
        %v1673 = vsel %vm1609, %v1592, %v1657
        %v1674 = vpack.c.bf16 %v1660, %v1658
        %v1675 = vpack.c.bf16 %v1661, %v1659
        %v1676 = vpack.c.bf16 %v1664, %v1662
        %v1677 = vpack.c.bf16 %v1665, %v1663
        %v1678 = vpack.c.bf16 %v1668, %v1666
        %v1679 = vpack.c.bf16 %v1669, %v1667
        %v1680 = vpack.c.bf16 %v1672, %v1670
        %v1681 = vpack.c.bf16 %v1673, %v1671
        %v1682 = vld [vmem:[%s6] sm:$0xf]
        %v1683 = vld [vmem:[%s6 + $0x4] sm:$0xf]
        %v1684 = vld [vmem:[%s6 + $0x8] sm:$0xf]
        %v1685 = vld [vmem:[%s6 + $0xc] sm:$0xf]
        %v1686 = vld [vmem:[%s6 + $0x10] sm:$0xf]
        %v1687 = vld [vmem:[%s6 + $0x14] sm:$0xf]
        %v1688 = vld [vmem:[%s6 + $0x18] sm:$0xf]
        %v1689 = vld [vmem:[%s6 + $0x1c] sm:$0xf]
        %v1690 = vld [vmem:[%s6 + $0x20] sm:$0xf]
        %v1691 = vld [vmem:[%s6 + $0x24] sm:$0xf]
        %v1692 = vld [vmem:[%s6 + $0x28] sm:$0xf]
        %v1693 = vld [vmem:[%s6 + $0x2c] sm:$0xf]
        %v1694 = vld [vmem:[%s6 + $0x30] sm:$0xf]
        %v1695 = vld [vmem:[%s6 + $0x34] sm:$0xf]
        %v1696 = vld [vmem:[%s6 + $0x38] sm:$0xf]
        %v1697 = vld [vmem:[%s6 + $0x3c] sm:$0xf]
        %v1698 = vld [vmem:[%s6 + $0x40] sm:$0xf]
        %v1699 = vld [vmem:[%s6 + $0x44] sm:$0xf]
        %v1700 = vld [vmem:[%s6 + $0x48] sm:$0xf]
        %v1701 = vld [vmem:[%s6 + $0x4c] sm:$0xf]
        %v1722 = vunpack.c.l.b16 %v1682
        %v1723 = vunpack.c.l.b16 %v1683
        %v1724 = vunpack.c.l.b16 %v1684
        %v1725 = vunpack.c.l.b16 %v1685
        %v1726 = vunpack.c.l.b16 %v1686
        %v1727 = vunpack.c.l.b16 %v1687
        %v1728 = vunpack.c.l.b16 %v1688
        %v1729 = vunpack.c.l.b16 %v1689
        %v1730 = vunpack.c.l.b16 %v1690
        %v1731 = vunpack.c.l.b16 %v1691
        %v1732 = vunpack.c.l.b16 %v1692
        %v1733 = vunpack.c.l.b16 %v1693
        %v1734 = vunpack.c.l.b16 %v1694
        %v1735 = vunpack.c.l.b16 %v1695
        %v1736 = vunpack.c.l.b16 %v1696
        %v1737 = vunpack.c.l.b16 %v1697
        %v1738 = vunpack.c.l.b16 %v1698
        %v1739 = vunpack.c.l.b16 %v1699
        %v1740 = vunpack.c.l.b16 %v1700
        %v1741 = vunpack.c.l.b16 %v1701
        %v1742 = vpack.c.b16 %v1723, %v1722
        %v1743 = vpack.c.b16 %v1725, %v1724
        %v1744 = vpack.c.b16 %v1727, %v1726
        %v1745 = vpack.c.b16 %v1729, %v1728
        %v1746 = vpack.c.b16 %v1731, %v1730
        %v1747 = vpack.c.b16 %v1733, %v1732
        %v1748 = vpack.c.b16 %v1735, %v1734
        %v1749 = vpack.c.b16 %v1737, %v1736
        %v1750 = vpack.c.b16 %v1739, %v1738
        %v1751 = vpack.c.b16 %v1741, %v1740
        %v1763 = vsel %vm1508, %v1675, 0
        %v1766 = vsel %vm1508, %v1677, 0
        %v1769 = vsel %vm1508, %v1679, 0
        %v1772 = vsel %vm1508, %v1681, 0
        %1774 = vmatprep.subr.bf16.mxu0 0
        %1775 = vmatpush1.bf16.msra.mxu0 %v1749
        %1776 = vmatprep.subr.bf16.mxu0 0
        %1777 = vmatpush1.bf16.msra.mxu0 %v1748
        %1778 = vmatprep.subr.bf16.mxu0 0
        %1779 = vmatpush1.bf16.msra.mxu0 %v1747
        %1780 = vmatprep.subr.bf16.mxu0 0
        %1781 = vmatpush1.bf16.msra.mxu0 %v1746
        %1782 = vmatprep.subr.bf16.mxu0 0
        %1783 = vmatpush1.bf16.msra.mxu0 %v1745
        %1784 = vmatprep.subr.bf16.mxu0 0
        %1785 = vmatpush1.bf16.msra.mxu0 %v1744
        %1786 = vmatprep.subr.bf16.mxu0 0
        %1787 = vmatpush1.bf16.msra.mxu0 %v1743
        %1788 = vmatprep.subr.bf16.mxu0 0
        %1789 = vmatpush1.bf16.msra.mxu0 %v1742
        %1790 = vmatprep.subr.bf16.mxu0 0
        %1791 = vmatpush2.bf16.msra.mxu0 0
        %1792 = vmatprep.subr.bf16.mxu0 0
        %1793 = vmatpush2.bf16.msra.mxu0 0
        %1794 = vmatprep.subr.bf16.mxu0 0
        %1795 = vmatpush2.bf16.msra.mxu0 0
        %1796 = vmatprep.subr.bf16.mxu0 0
        %1797 = vmatpush2.bf16.msra.mxu0 0
        %1798 = vmatprep.subr.bf16.mxu0 0
        %1799 = vmatpush2.bf16.msra.mxu0 0
        %1800 = vmatprep.subr.bf16.mxu0 0
        %1801 = vmatpush2.bf16.msra.mxu0 0
        %1802 = vmatprep.subr.bf16.mxu0 0
        %1803 = vmatpush2.bf16.msra.mxu0 %v1751
        %1804 = vmatprep.subr.bf16.mxu0 0
        %1805 = vmatpush2.bf16.msra.mxu0 %v1750
        %1806 = vmatprep.mubr.bf16.mxu0 %v1763
        %1807 = vmatmul.mubr.bf16.gmra.mxu0 %v1674
        %v1808 = vpop.f32.mrf.mxu0
        %v1809 = vadd.f32 0.0, %v1808
        %v1810 = vpop.f32.mrf.mxu0
        %v1811 = vpop.f32.mrf.mxu0
        %v1812 = vadd.f32 0.0, %v1811
        %v1813 = vpop.f32.mrf.mxu0
        %1814 = vmatprep.mubr.bf16.mxu0 %v1766
        %1815 = vmatmul.mubr.bf16.gmra.mxu0 %v1676
        %v1816 = vpop.f32.mrf.mxu0
        %v1817 = vadd.f32 0.0, %v1816
        %v1818 = vpop.f32.mrf.mxu0
        %v1819 = vpop.f32.mrf.mxu0
        %v1820 = vadd.f32 0.0, %v1819
        %v1821 = vpop.f32.mrf.mxu0
        %1822 = vmatprep.mubr.bf16.mxu0 %v1769
        %1823 = vmatmul.mubr.bf16.gmra.mxu0 %v1678
        %v1824 = vpop.f32.mrf.mxu0
        %v1825 = vadd.f32 0.0, %v1824
        %v1826 = vpop.f32.mrf.mxu0
        %v1827 = vpop.f32.mrf.mxu0
        %v1828 = vadd.f32 0.0, %v1827
        %v1829 = vpop.f32.mrf.mxu0
        %1830 = vmatprep.mubr.bf16.mxu0 %v1772
        %1831 = vmatmul.mubr.bf16.gmra.mxu0 %v1680
        %v1832 = vpop.f32.mrf.mxu0
        %v1833 = vadd.f32 0.0, %v1832
        %v1834 = vpop.f32.mrf.mxu0
        %v1835 = vpop.f32.mrf.mxu0
        %v1836 = vadd.f32 0.0, %v1835
        %v1837 = vpop.f32.mrf.mxu0
        %1838 = vdwg.mxu0
        %v1839 = vpack.c.bf16 %v1812, %v1809
        %v1840 = vpack.c.bf16 %v1820, %v1817
        %v1841 = vpack.c.bf16 %v1828, %v1825
        %v1842 = vpack.c.bf16 %v1836, %v1833
        %v1843 = vld [vmem:[#allocation6] sm:$0xff]
        %v1844 = vld [vmem:[#allocation6 + $0x8] sm:$0xf]
        %v1845 = vld [vmem:[#allocation6 + $0xc] sm:$0xff]
        %v1846 = vld [vmem:[#allocation6 + $0x14] sm:$0xf]
        %v1847 = vld [vmem:[#allocation6 + $0x18] sm:$0xff]
        %v1848 = vld [vmem:[#allocation6 + $0x20] sm:$0xf]
        %v1849 = vld [vmem:[#allocation6 + $0x24] sm:$0xff]
        %v1850 = vld [vmem:[#allocation6 + $0x2c] sm:$0xf]
        %v1851 = vld [vmem:[#allocation6 + $0x30] sm:$0xff]
        %v1852 = vld [vmem:[#allocation6 + $0x38] sm:$0xf]
        %v1853 = vld [vmem:[#allocation6 + $0x3c] sm:$0xff]
        %v1854 = vld [vmem:[#allocation6 + $0x44] sm:$0xf]
        %v1855 = vld [vmem:[#allocation6 + $0x48] sm:$0xff]
        %v1856 = vld [vmem:[#allocation6 + $0x50] sm:$0xf]
        %v1857 = vld [vmem:[#allocation6 + $0x54] sm:$0xff]
        %v1858 = vld [vmem:[#allocation6 + $0x5c] sm:$0xf]
        %v1859 = vld [vmem:[%s8] sm:$0xff]
        %v1860 = vld [vmem:[%s8 + $0x8] sm:$0xff]
        %v1861 = vld [vmem:[%s8 + $0x10] sm:$0xff]
        %v1862 = vld [vmem:[%s8 + $0x18] sm:$0xff]
        %v1863 = vld [vmem:[%s8 + $0x20] sm:$0xff]
        %v1864 = vld [vmem:[%s8 + $0x28] sm:$0xff]
        %v1865 = vld [vmem:[%s8 + $0x30] sm:$0xff]
        %v1866 = vld [vmem:[%s8 + $0x38] sm:$0xff]
        %1871 = vrot.lane.b32.xlu0 %v1839, 127
        %v1872 = vpop.permute.xlu0 %1871
        %1873 = vrot.lane.b32.xlu0 %v1840, 127
        %v1874 = vpop.permute.xlu0 %1873
        %1875 = vrot.lane.b32.xlu0 %v1841, 127
        %v1876 = vpop.permute.xlu0 %1875
        %1877 = vrot.lane.b32.xlu0 %v1842, 127
        %v1878 = vpop.permute.xlu0 %1877
        %1883 = vrot.lane.b32.xlu0 %v1839, 126
        %v1884 = vpop.permute.xlu0 %1883
        %1885 = vrot.lane.b32.xlu0 %v1840, 126
        %v1886 = vpop.permute.xlu0 %1885
        %1887 = vrot.lane.b32.xlu0 %v1841, 126
        %v1888 = vpop.permute.xlu0 %1887
        %1889 = vrot.lane.b32.xlu0 %v1842, 126
        %v1890 = vpop.permute.xlu0 %1889
        %1895 = vrot.lane.b32.xlu0 %v1839, 125
        %v1896 = vpop.permute.xlu0 %1895
        %1897 = vrot.lane.b32.xlu0 %v1840, 125
        %v1898 = vpop.permute.xlu0 %1897
        %1899 = vrot.lane.b32.xlu0 %v1841, 125
        %v1900 = vpop.permute.xlu0 %1899
        %1901 = vrot.lane.b32.xlu0 %v1842, 125
        %v1902 = vpop.permute.xlu0 %1901
        %1907 = vrot.lane.b32.xlu0 %v1839, 124
        %v1908 = vpop.permute.xlu0 %1907
        %1909 = vrot.lane.b32.xlu0 %v1840, 124
        %v1910 = vpop.permute.xlu0 %1909
        %1911 = vrot.lane.b32.xlu0 %v1841, 124
        %v1912 = vpop.permute.xlu0 %1911
        %1913 = vrot.lane.b32.xlu0 %v1842, 124
        %v1914 = vpop.permute.xlu0 %1913
        %1920 = vset.pattern.permute.xlu0 0
        %1921 = vperm.xlu0 %1920, %v1859
        %v1922 = vpop.permute.xlu0 %1921
        %1925 = vset.pattern.permute.xlu0 0
        %1926 = vperm.xlu0 %1925, %v1860
        %v1927 = vpop.permute.xlu0 %1926
        %1930 = vset.pattern.permute.xlu0 0
        %1931 = vperm.xlu0 %1930, %v1861
        %v1932 = vpop.permute.xlu0 %1931
        %1935 = vset.pattern.permute.xlu0 0
        %1936 = vperm.xlu0 %1935, %v1862
        %v1937 = vpop.permute.xlu0 %1936
        %1940 = vset.pattern.permute.xlu0 0
        %1941 = vperm.xlu0 %1940, %v1863
        %v1942 = vpop.permute.xlu0 %1941
        %1945 = vset.pattern.permute.xlu0 0
        %1946 = vperm.xlu0 %1945, %v1864
        %v1947 = vpop.permute.xlu0 %1946
        %1950 = vset.pattern.permute.xlu0 0
        %1951 = vperm.xlu0 %1950, %v1865
        %v1952 = vpop.permute.xlu0 %1951
        %1955 = vset.pattern.permute.xlu0 0
        %1956 = vperm.xlu0 %1955, %v1866
        %v1957 = vpop.permute.xlu0 %1956
        %v1975 = vunpack.c.l.b16 %v1843
        %v1976 = vunpack.c.h.b16 %v1843
        %v1977 = vunpack.c.l.b16 %v1844
        %v1978 = vunpack.c.l.b16 %v1845
        %v1979 = vunpack.c.h.b16 %v1845
        %v1980 = vunpack.c.l.b16 %v1846
        %v1981 = vunpack.c.l.b16 %v1847
        %v1982 = vunpack.c.h.b16 %v1847
        %v1983 = vunpack.c.l.b16 %v1848
        %v1984 = vunpack.c.l.b16 %v1849
        %v1985 = vunpack.c.h.b16 %v1849
        %v1986 = vunpack.c.l.b16 %v1850
        %v1987 = vunpack.c.l.b16 %v1851
        %v1988 = vunpack.c.h.b16 %v1851
        %v1989 = vunpack.c.l.b16 %v1852
        %v1990 = vunpack.c.l.b16 %v1853
        %v1991 = vunpack.c.h.b16 %v1853
        %v1992 = vunpack.c.l.b16 %v1854
        %v1993 = vunpack.c.l.b16 %v1855
        %v1994 = vunpack.c.h.b16 %v1855
        %v1995 = vunpack.c.l.b16 %v1856
        %v1996 = vunpack.c.l.b16 %v1857
        %v1997 = vunpack.c.h.b16 %v1857
        %v1998 = vunpack.c.l.b16 %v1858
        %v1999 = vpack.c.b16 %v1978, %v1975
        %v2000 = vpack.c.b16 %v1979, %v1976
        %v2001 = vpack.c.b16 %v1980, %v1977
        %v2002 = vpack.c.b16 %v1984, %v1981
        %v2003 = vpack.c.b16 %v1985, %v1982
        %v2004 = vpack.c.b16 %v1986, %v1983
        %v2005 = vpack.c.b16 %v1990, %v1987
        %v2006 = vpack.c.b16 %v1991, %v1988
        %v2007 = vpack.c.b16 %v1992, %v1989
        %v2008 = vpack.c.b16 %v1996, %v1993
        %v2009 = vpack.c.b16 %v1997, %v1994
        %v2010 = vpack.c.b16 %v1998, %v1995
        %vm2019 = vcmask 523264
        %v2021 = vsel %vm2019, %v2001, 0
        %v2024 = vsel %vm2019, %v2004, 0
        %v2027 = vsel %vm2019, %v2007, 0
        %v2030 = vsel %vm2019, %v2010, 0
        %2032 = vmatprep.subr.bf16.mxu0 0
        %2033 = vmatpush1.bf16.msra.mxu0 %v1878
        %2034 = vmatprep.subr.bf16.mxu0 0
        %2035 = vmatpush1.bf16.msra.mxu0 %v1876
        %2036 = vmatprep.subr.bf16.mxu0 0
        %2037 = vmatpush1.bf16.msra.mxu0 %v1874
        %2038 = vmatprep.subr.bf16.mxu0 0
        %2039 = vmatpush1.bf16.msra.mxu0 %v1872
        %2040 = vmatprep.subr.bf16.mxu0 0
        %2041 = vmatpush1.bf16.msra.mxu0 %v1842
        %2042 = vmatprep.subr.bf16.mxu0 0
        %2043 = vmatpush1.bf16.msra.mxu0 %v1841
        %2044 = vmatprep.subr.bf16.mxu0 0
        %2045 = vmatpush1.bf16.msra.mxu0 %v1840
        %2046 = vmatprep.subr.bf16.mxu0 0
        %2047 = vmatpush1.bf16.msra.mxu0 %v1839
        %2048 = vmatprep.subr.bf16.mxu0 0
        %2049 = vmatpush2.bf16.msra.mxu0 %v1902
        %2050 = vmatprep.subr.bf16.mxu0 0
        %2051 = vmatpush2.bf16.msra.mxu0 %v1900
        %2052 = vmatprep.subr.bf16.mxu0 0
        %2053 = vmatpush2.bf16.msra.mxu0 %v1898
        %2054 = vmatprep.subr.bf16.mxu0 0
        %2055 = vmatpush2.bf16.msra.mxu0 %v1896
        %2056 = vmatprep.subr.bf16.mxu0 0
        %2057 = vmatpush2.bf16.msra.mxu0 %v1890
        %2058 = vmatprep.subr.bf16.mxu0 0
        %2059 = vmatpush2.bf16.msra.mxu0 %v1888
        %2060 = vmatprep.subr.bf16.mxu0 0
        %2061 = vmatpush2.bf16.msra.mxu0 %v1886
        %2062 = vmatprep.subr.bf16.mxu0 0
        %2063 = vmatpush2.bf16.msra.mxu0 %v1884
        %2064 = vmatprep.mubr.bf16.mxu0 %v2000
        %2065 = vmatmul.mubr.bf16.gmra.mxu0 %v1999
        %v2066 = vpop.f32.mrf.mxu0
        %v2067 = vadd.f32 %v1922, %v2066
        %v2068 = vpop.f32.mrf.mxu0
        %v2069 = vpop.f32.mrf.mxu0
        %v2070 = vadd.f32 %v1927, %v2069
        %v2071 = vpop.f32.mrf.mxu0
        %2072 = vmatprep.mubr.bf16.mxu0 %v2003
        %2073 = vmatmul.mubr.bf16.gmra.mxu0 %v2002
        %v2074 = vpop.f32.mrf.mxu0
        %v2075 = vadd.f32 %v1932, %v2074
        %v2076 = vpop.f32.mrf.mxu0
        %v2077 = vpop.f32.mrf.mxu0
        %v2078 = vadd.f32 %v1937, %v2077
        %v2079 = vpop.f32.mrf.mxu0
        %2080 = vmatprep.mubr.bf16.mxu0 %v2006
        %2081 = vmatmul.mubr.bf16.gmra.mxu0 %v2005
        %v2082 = vpop.f32.mrf.mxu0
        %v2083 = vadd.f32 %v1942, %v2082
        %v2084 = vpop.f32.mrf.mxu0
        %v2085 = vpop.f32.mrf.mxu0
        %v2086 = vadd.f32 %v1947, %v2085
        %v2087 = vpop.f32.mrf.mxu0
        %2088 = vmatprep.mubr.bf16.mxu0 %v2009
        %2089 = vmatmul.mubr.bf16.gmra.mxu0 %v2008
        %v2090 = vpop.f32.mrf.mxu0
        %v2091 = vadd.f32 %v1952, %v2090
        %v2092 = vpop.f32.mrf.mxu0
        %v2093 = vpop.f32.mrf.mxu0
        %v2094 = vadd.f32 %v1957, %v2093
        %v2095 = vpop.f32.mrf.mxu0
        %2096 = vdwg.mxu0
        %2097 = vmatprep.subr.bf16.mxu0 0
        %2098 = vmatpush1.bf16.msra.mxu0 0
        %2099 = vmatprep.subr.bf16.mxu0 0
        %2100 = vmatpush1.bf16.msra.mxu0 0
        %2101 = vmatprep.subr.bf16.mxu0 0
        %2102 = vmatpush1.bf16.msra.mxu0 0
        %2103 = vmatprep.subr.bf16.mxu0 0
        %2104 = vmatpush1.bf16.msra.mxu0 0
        %2105 = vmatprep.subr.bf16.mxu0 0
        %2106 = vmatpush1.bf16.msra.mxu0 %v1914
        %2107 = vmatprep.subr.bf16.mxu0 0
        %2108 = vmatpush1.bf16.msra.mxu0 %v1912
        %2109 = vmatprep.subr.bf16.mxu0 0
        %2110 = vmatpush1.bf16.msra.mxu0 %v1910
        %2111 = vmatprep.subr.bf16.mxu0 0
        %2112 = vmatpush1.bf16.msra.mxu0 %v1908
        %2113 = vmatprep.subr.bf16.mxu0 0
        %2114 = vmatpush2.bf16.msra.mxu0 0
        %2115 = vmatprep.subr.bf16.mxu0 0
        %2116 = vmatpush2.bf16.msra.mxu0 0
        %2117 = vmatprep.subr.bf16.mxu0 0
        %2118 = vmatpush2.bf16.msra.mxu0 0
        %2119 = vmatprep.subr.bf16.mxu0 0
        %2120 = vmatpush2.bf16.msra.mxu0 0
        %2121 = vmatprep.subr.bf16.mxu0 0
        %2122 = vmatpush2.bf16.msra.mxu0 0
        %2123 = vmatprep.subr.bf16.mxu0 0
        %2124 = vmatpush2.bf16.msra.mxu0 0
        %2125 = vmatprep.subr.bf16.mxu0 0
        %2126 = vmatpush2.bf16.msra.mxu0 0
        %2127 = vmatprep.subr.bf16.mxu0 0
        %2128 = vmatpush2.bf16.msra.mxu0 0
        %2129 = vmatprep.mubr.bf16.mxu0 0
        %2130 = vmatmul.mubr.bf16.gmra.mxu0 %v2021
        %v2131 = vpop.f32.mrf.mxu0
        %v2132 = vadd.f32 %v2067, %v2131
        %v2133 = vpop.f32.mrf.mxu0
        %v2134 = vpop.f32.mrf.mxu0
        %v2135 = vadd.f32 %v2070, %v2134
        %v2136 = vpop.f32.mrf.mxu0
        %2137 = vmatprep.mubr.bf16.mxu0 0
        %2138 = vmatmul.mubr.bf16.gmra.mxu0 %v2024
        %v2139 = vpop.f32.mrf.mxu0
        %v2140 = vadd.f32 %v2075, %v2139
        %v2141 = vpop.f32.mrf.mxu0
        %v2142 = vpop.f32.mrf.mxu0
        %v2143 = vadd.f32 %v2078, %v2142
        %v2144 = vpop.f32.mrf.mxu0
        %2145 = vmatprep.mubr.bf16.mxu0 0
        %2146 = vmatmul.mubr.bf16.gmra.mxu0 %v2027
        %v2147 = vpop.f32.mrf.mxu0
        %v2148 = vadd.f32 %v2083, %v2147
        %v2149 = vpop.f32.mrf.mxu0
        %v2150 = vpop.f32.mrf.mxu0
        %v2151 = vadd.f32 %v2086, %v2150
        %v2152 = vpop.f32.mrf.mxu0
        %2153 = vmatprep.mubr.bf16.mxu0 0
        %2154 = vmatmul.mubr.bf16.gmra.mxu0 %v2030
        %v2155 = vpop.f32.mrf.mxu0
        %v2156 = vadd.f32 %v2091, %v2155
        %v2157 = vpop.f32.mrf.mxu0
        %v2158 = vpop.f32.mrf.mxu0
        %v2159 = vadd.f32 %v2094, %v2158
        %v2160 = vpop.f32.mrf.mxu0
        %2161 = vdwg.mxu0
        %vm2162 = vcmp.gt.f32.partialorder %v2132, 0.0
        %vm2163 = vcmp.gt.f32.partialorder %v2135, 0.0
        %vm2164 = vcmp.gt.f32.partialorder %v2140, 0.0
        %vm2165 = vcmp.gt.f32.partialorder %v2143, 0.0
        %vm2166 = vcmp.gt.f32.partialorder %v2148, 0.0
        %vm2167 = vcmp.gt.f32.partialorder %v2151, 0.0
        %vm2168 = vcmp.gt.f32.partialorder %v2156, 0.0
        %vm2169 = vcmp.gt.f32.partialorder %v2159, 0.0
        %v2170 = vmul.f32 %v2132, 1.442695
        %v2171 = vpow.pop %v2170
        %v2172 = vmul.f32 %v2135, 1.442695
        %v2173 = vpow.pop %v2172
        %v2174 = vmul.f32 %v2140, 1.442695
        %v2175 = vpow.pop %v2174
        %v2176 = vmul.f32 %v2143, 1.442695
        %v2177 = vpow.pop %v2176
        %v2178 = vmul.f32 %v2148, 1.442695
        %v2179 = vpow.pop %v2178
        %v2180 = vmul.f32 %v2151, 1.442695
        %v2181 = vpow.pop %v2180
        %v2182 = vmul.f32 %v2156, 1.442695
        %v2183 = vpow.pop %v2182
        %v2184 = vmul.f32 %v2159, 1.442695
        %v2185 = vpow.pop %v2184
        %v2186 = vsub.f32 %v2171, 1.0
        %v2187 = vsub.f32 %v2173, 1.0
        %v2188 = vsub.f32 %v2175, 1.0
        %v2189 = vsub.f32 %v2177, 1.0
        %v2190 = vsub.f32 %v2179, 1.0
        %v2191 = vsub.f32 %v2181, 1.0
        %v2192 = vsub.f32 %v2183, 1.0
        %v2193 = vsub.f32 %v2185, 1.0
        %v2194 = vsel %vm2162, %v2132, %v2186
        %v2195 = vsel %vm2163, %v2135, %v2187
        %v2196 = vsel %vm2164, %v2140, %v2188
        %v2197 = vsel %vm2165, %v2143, %v2189
        %v2198 = vsel %vm2166, %v2148, %v2190
        %v2199 = vsel %vm2167, %v2151, %v2191
        %v2200 = vsel %vm2168, %v2156, %v2192
        %v2201 = vsel %vm2169, %v2159, %v2193
        %v2202 = vpack.c.bf16 %v2195, %v2194
        %v2203 = vpack.c.bf16 %v2197, %v2196
        %v2204 = vpack.c.bf16 %v2199, %v2198
        %v2205 = vpack.c.bf16 %v2201, %v2200
        %v2206 = vld [vmem:[#allocation7] sm:$0xf]
        %v2207 = vld [vmem:[#allocation7 + $0x4] sm:$0xf]
        %v2208 = vld [vmem:[#allocation7 + $0x8] sm:$0xf]
        %v2209 = vld [vmem:[#allocation7 + $0xc] sm:$0xf]
        %v2210 = vld [vmem:[#allocation7 + $0x10] sm:$0xf]
        %v2211 = vld [vmem:[#allocation7 + $0x14] sm:$0xf]
        %v2218 = vunpack.c.l.b16 %v2206
        %v2219 = vunpack.c.l.b16 %v2207
        %v2220 = vunpack.c.l.b16 %v2208
        %v2221 = vunpack.c.l.b16 %v2209
        %v2222 = vunpack.c.l.b16 %v2210
        %v2223 = vunpack.c.l.b16 %v2211
        %v2224 = vpack.c.b16 %v2219, %v2218
        %v2225 = vpack.c.b16 %v2221, %v2220
        %v2226 = vpack.c.b16 %v2223, %v2222
        %vm2230 = vcmask 392192
        %v2232 = vsel %vm2230, %v2202, 0
        %v2235 = vsel %vm2230, %v2203, 0
        %v2238 = vsel %vm2230, %v2204, 0
        %v2241 = vsel %vm2230, %v2205, 0
        %2243 = vmatprep.subr.bf16.mxu0 0
        %2244 = vmatpush1.bf16.msra.mxu0 0
        %2245 = vmatprep.subr.bf16.mxu0 0
        %2246 = vmatpush1.bf16.msra.mxu0 0
        %2247 = vmatprep.subr.bf16.mxu0 0
        %2248 = vmatpush1.bf16.msra.mxu0 0
        %2249 = vmatprep.subr.bf16.mxu0 0
        %2250 = vmatpush1.bf16.msra.mxu0 0
        %2251 = vmatprep.subr.bf16.mxu0 0
        %2252 = vmatpush1.bf16.msra.mxu0 0
        %2253 = vmatprep.subr.bf16.mxu0 0
        %2254 = vmatpush1.bf16.msra.mxu0 %v2226
        %2255 = vmatprep.subr.bf16.mxu0 0
        %2256 = vmatpush1.bf16.msra.mxu0 %v2225
        %2257 = vmatprep.subr.bf16.mxu0 0
        %2258 = vmatpush1.bf16.msra.mxu0 %v2224
        %2259 = vmatprep.subr.bf16.mxu0 0
        %2260 = vmatpush2.bf16.msra.mxu0 0
        %2261 = vmatprep.subr.bf16.mxu0 0
        %2262 = vmatpush2.bf16.msra.mxu0 0
        %2263 = vmatprep.subr.bf16.mxu0 0
        %2264 = vmatpush2.bf16.msra.mxu0 0
        %2265 = vmatprep.subr.bf16.mxu0 0
        %2266 = vmatpush2.bf16.msra.mxu0 0
        %2267 = vmatprep.subr.bf16.mxu0 0
        %2268 = vmatpush2.bf16.msra.mxu0 0
        %2269 = vmatprep.subr.bf16.mxu0 0
        %2270 = vmatpush2.bf16.msra.mxu0 0
        %2271 = vmatprep.subr.bf16.mxu0 0
        %2272 = vmatpush2.bf16.msra.mxu0 0
        %2273 = vmatprep.subr.bf16.mxu0 0
        %2274 = vmatpush2.bf16.msra.mxu0 0
        %2275 = vmatprep.mubr.bf16.mxu0 0
        %2276 = vmatmul.mubr.bf16.gmra.mxu0 %v2232
        %v2277 = vpop.f32.mrf.mxu0
        %v2278 = vadd.f32 0.0, %v2277
        %v2279 = vpop.f32.mrf.mxu0
        %v2280 = vpop.f32.mrf.mxu0
        %v2281 = vadd.f32 0.0, %v2280
        %v2282 = vpop.f32.mrf.mxu0
        %2283 = vmatprep.mubr.bf16.mxu0 0
        %2284 = vmatmul.mubr.bf16.gmra.mxu0 %v2235
        %v2285 = vpop.f32.mrf.mxu0
        %v2286 = vadd.f32 0.0, %v2285
        %v2287 = vpop.f32.mrf.mxu0
        %v2288 = vpop.f32.mrf.mxu0
        %v2289 = vadd.f32 0.0, %v2288
        %v2290 = vpop.f32.mrf.mxu0
        %2291 = vmatprep.mubr.bf16.mxu0 0
        %2292 = vmatmul.mubr.bf16.gmra.mxu0 %v2238
        %v2293 = vpop.f32.mrf.mxu0
        %v2294 = vadd.f32 0.0, %v2293
        %v2295 = vpop.f32.mrf.mxu0
        %v2296 = vpop.f32.mrf.mxu0
        %v2297 = vadd.f32 0.0, %v2296
        %v2298 = vpop.f32.mrf.mxu0
        %2299 = vmatprep.mubr.bf16.mxu0 0
        %2300 = vmatmul.mubr.bf16.gmra.mxu0 %v2241
        %v2301 = vpop.f32.mrf.mxu0
        %v2302 = vadd.f32 0.0, %v2301
        %v2303 = vpop.f32.mrf.mxu0
        %v2304 = vpop.f32.mrf.mxu0
        %v2305 = vadd.f32 0.0, %v2304
        %v2306 = vpop.f32.mrf.mxu0
        %2307 = vdwg.mxu0
        %v2308 = vpack.c.bf16 %v2281, %v2278
        %v2309 = vpack.c.bf16 %v2289, %v2286
        %v2310 = vpack.c.bf16 %v2297, %v2294
        %v2311 = vpack.c.bf16 %v2305, %v2302
        %v2312 = vld [vmem:[%s10] sm:$0xff]
        %v2313 = vld [vmem:[%s10 + $0x8] sm:$0xf]
        %v2314 = vld [vmem:[%s10 + $0xc] sm:$0xff]
        %v2315 = vld [vmem:[%s10 + $0x14] sm:$0xf]
        %v2316 = vld [vmem:[%s10 + $0x18] sm:$0xff]
        %v2317 = vld [vmem:[%s10 + $0x20] sm:$0xf]
        %v2318 = vld [vmem:[%s10 + $0x24] sm:$0xff]
        %v2319 = vld [vmem:[%s10 + $0x2c] sm:$0xf]
        %v2320 = vld [vmem:[%s10 + $0x30] sm:$0xff]
        %v2321 = vld [vmem:[%s10 + $0x38] sm:$0xf]
        %v2322 = vld [vmem:[%s10 + $0x3c] sm:$0xff]
        %v2323 = vld [vmem:[%s10 + $0x44] sm:$0xf]
        %v2324 = vld [vmem:[%s10 + $0x48] sm:$0xff]
        %v2325 = vld [vmem:[%s10 + $0x50] sm:$0xf]
        %v2326 = vld [vmem:[%s10 + $0x54] sm:$0xff]
        %v2327 = vld [vmem:[%s10 + $0x5c] sm:$0xf]
        %v2328 = vld [vmem:[%s10 + $0x60] sm:$0xff]
        %v2329 = vld [vmem:[%s10 + $0x68] sm:$0xf]
        %v2330 = vld [vmem:[%s10 + $0x6c] sm:$0xff]
        %v2331 = vld [vmem:[%s10 + $0x74] sm:$0xf]
        %v2332 = vld [vmem:[%s10 + $0x78] sm:$0xff]
        %v2333 = vld [vmem:[%s10 + $0x80] sm:$0xf]
        %v2334 = vld [vmem:[%s10 + $0x84] sm:$0xff]
        %v2335 = vld [vmem:[%s10 + $0x8c] sm:$0xf]
        %v2336 = vld [vmem:[%s10 + $0x90] sm:$0xff]
        %v2337 = vld [vmem:[%s10 + $0x98] sm:$0xf]
        %v2338 = vld [vmem:[%s10 + $0x9c] sm:$0xff]
        %v2339 = vld [vmem:[%s10 + $0xa4] sm:$0xf]
        %v2340 = vld [vmem:[%s11] sm:$0xff]
        %v2341 = vld [vmem:[%s11 + $0x8] sm:$0xff]
        %v2342 = vld [vmem:[%s11 + $0x10] sm:$0xff]
        %v2343 = vld [vmem:[%s11 + $0x18] sm:$0xff]
        %v2344 = vld [vmem:[%s11 + $0x20] sm:$0xff]
        %v2345 = vld [vmem:[%s11 + $0x28] sm:$0xff]
        %v2346 = vld [vmem:[%s11 + $0x30] sm:$0xff]
        %v2347 = vld [vmem:[%s11 + $0x38] sm:$0xff]
        %v2348 = vld [vmem:[%s11 + $0x40] sm:$0xff]
        %v2349 = vld [vmem:[%s11 + $0x48] sm:$0xff]
        %v2350 = vld [vmem:[%s11 + $0x50] sm:$0xff]
        %v2351 = vld [vmem:[%s11 + $0x58] sm:$0xff]
        %v2352 = vld [vmem:[%s11 + $0x60] sm:$0xff]
        %v2353 = vld [vmem:[%s11 + $0x68] sm:$0xff]
        %2358 = vrot.lane.b32.xlu0 %v2308, 127
        %v2359 = vpop.permute.xlu0 %2358
        %2360 = vrot.lane.b32.xlu0 %v2309, 127
        %v2361 = vpop.permute.xlu0 %2360
        %2362 = vrot.lane.b32.xlu0 %v2310, 127
        %v2363 = vpop.permute.xlu0 %2362
        %2364 = vrot.lane.b32.xlu0 %v2311, 127
        %v2365 = vpop.permute.xlu0 %2364
        %2370 = vrot.lane.b32.xlu0 %v2308, 126
        %v2371 = vpop.permute.xlu0 %2370
        %2372 = vrot.lane.b32.xlu0 %v2309, 126
        %v2373 = vpop.permute.xlu0 %2372
        %2374 = vrot.lane.b32.xlu0 %v2310, 126
        %v2375 = vpop.permute.xlu0 %2374
        %2376 = vrot.lane.b32.xlu0 %v2311, 126
        %v2377 = vpop.permute.xlu0 %2376
        %2382 = vrot.lane.b32.xlu0 %v2308, 125
        %v2383 = vpop.permute.xlu0 %2382
        %2384 = vrot.lane.b32.xlu0 %v2309, 125
        %v2385 = vpop.permute.xlu0 %2384
        %2386 = vrot.lane.b32.xlu0 %v2310, 125
        %v2387 = vpop.permute.xlu0 %2386
        %2388 = vrot.lane.b32.xlu0 %v2311, 125
        %v2389 = vpop.permute.xlu0 %2388
        %2394 = vrot.lane.b32.xlu0 %v2308, 124
        %v2395 = vpop.permute.xlu0 %2394
        %2396 = vrot.lane.b32.xlu0 %v2309, 124
        %v2397 = vpop.permute.xlu0 %2396
        %2398 = vrot.lane.b32.xlu0 %v2310, 124
        %v2399 = vpop.permute.xlu0 %2398
        %2400 = vrot.lane.b32.xlu0 %v2311, 124
        %v2401 = vpop.permute.xlu0 %2400
        %2407 = vset.pattern.permute.xlu0 0
        %2408 = vperm.xlu0 %2407, %v2340
        %v2409 = vpop.permute.xlu0 %2408
        %2412 = vset.pattern.permute.xlu0 0
        %2413 = vperm.xlu0 %2412, %v2341
        %v2414 = vpop.permute.xlu0 %2413
        %2417 = vset.pattern.permute.xlu0 0
        %2418 = vperm.xlu0 %2417, %v2342
        %v2419 = vpop.permute.xlu0 %2418
        %2422 = vset.pattern.permute.xlu0 0
        %2423 = vperm.xlu0 %2422, %v2343
        %v2424 = vpop.permute.xlu0 %2423
        %2427 = vset.pattern.permute.xlu0 0
        %2428 = vperm.xlu0 %2427, %v2344
        %v2429 = vpop.permute.xlu0 %2428
        %2432 = vset.pattern.permute.xlu0 0
        %2433 = vperm.xlu0 %2432, %v2345
        %v2434 = vpop.permute.xlu0 %2433
        %2437 = vset.pattern.permute.xlu0 0
        %2438 = vperm.xlu0 %2437, %v2346
        %v2439 = vpop.permute.xlu0 %2438
        %2442 = vset.pattern.permute.xlu0 0
        %2443 = vperm.xlu0 %2442, %v2347
        %v2444 = vpop.permute.xlu0 %2443
        %2447 = vset.pattern.permute.xlu0 0
        %2448 = vperm.xlu0 %2447, %v2348
        %v2449 = vpop.permute.xlu0 %2448
        %2452 = vset.pattern.permute.xlu0 0
        %2453 = vperm.xlu0 %2452, %v2349
        %v2454 = vpop.permute.xlu0 %2453
        %2457 = vset.pattern.permute.xlu0 0
        %2458 = vperm.xlu0 %2457, %v2350
        %v2459 = vpop.permute.xlu0 %2458
        %2462 = vset.pattern.permute.xlu0 0
        %2463 = vperm.xlu0 %2462, %v2351
        %v2464 = vpop.permute.xlu0 %2463
        %2467 = vset.pattern.permute.xlu0 0
        %2468 = vperm.xlu0 %2467, %v2352
        %v2469 = vpop.permute.xlu0 %2468
        %2472 = vset.pattern.permute.xlu0 0
        %2473 = vperm.xlu0 %2472, %v2353
        %v2474 = vpop.permute.xlu0 %2473
        %v2504 = vunpack.c.l.b16 %v2312
        %v2505 = vunpack.c.h.b16 %v2312
        %v2506 = vunpack.c.l.b16 %v2313
        %v2507 = vunpack.c.l.b16 %v2314
        %v2508 = vunpack.c.h.b16 %v2314
        %v2509 = vunpack.c.l.b16 %v2315
        %v2510 = vunpack.c.l.b16 %v2316
        %v2511 = vunpack.c.h.b16 %v2316
        %v2512 = vunpack.c.l.b16 %v2317
        %v2513 = vunpack.c.l.b16 %v2318
        %v2514 = vunpack.c.h.b16 %v2318
        %v2515 = vunpack.c.l.b16 %v2319
        %v2516 = vunpack.c.l.b16 %v2320
        %v2517 = vunpack.c.h.b16 %v2320
        %v2518 = vunpack.c.l.b16 %v2321
        %v2519 = vunpack.c.l.b16 %v2322
        %v2520 = vunpack.c.h.b16 %v2322
        %v2521 = vunpack.c.l.b16 %v2323
        %v2522 = vunpack.c.l.b16 %v2324
        %v2523 = vunpack.c.h.b16 %v2324
        %v2524 = vunpack.c.l.b16 %v2325
        %v2525 = vunpack.c.l.b16 %v2326
        %v2526 = vunpack.c.h.b16 %v2326
        %v2527 = vunpack.c.l.b16 %v2327
        %v2528 = vunpack.c.l.b16 %v2328
        %v2529 = vunpack.c.h.b16 %v2328
        %v2530 = vunpack.c.l.b16 %v2329
        %v2531 = vunpack.c.l.b16 %v2330
        %v2532 = vunpack.c.h.b16 %v2330
        %v2533 = vunpack.c.l.b16 %v2331
        %v2534 = vunpack.c.l.b16 %v2332
        %v2535 = vunpack.c.h.b16 %v2332
        %v2536 = vunpack.c.l.b16 %v2333
        %v2537 = vunpack.c.l.b16 %v2334
        %v2538 = vunpack.c.h.b16 %v2334
        %v2539 = vunpack.c.l.b16 %v2335
        %v2540 = vunpack.c.l.b16 %v2336
        %v2541 = vunpack.c.h.b16 %v2336
        %v2542 = vunpack.c.l.b16 %v2337
        %v2543 = vunpack.c.l.b16 %v2338
        %v2544 = vunpack.c.h.b16 %v2338
        %v2545 = vunpack.c.l.b16 %v2339
        %v2546 = vpack.c.b16 %v2507, %v2504
        %v2547 = vpack.c.b16 %v2508, %v2505
        %v2548 = vpack.c.b16 %v2509, %v2506
        %v2549 = vpack.c.b16 %v2513, %v2510
        %v2550 = vpack.c.b16 %v2514, %v2511
        %v2551 = vpack.c.b16 %v2515, %v2512
        %v2552 = vpack.c.b16 %v2519, %v2516
        %v2553 = vpack.c.b16 %v2520, %v2517
        %v2554 = vpack.c.b16 %v2521, %v2518
        %v2555 = vpack.c.b16 %v2525, %v2522
        %v2556 = vpack.c.b16 %v2526, %v2523
        %v2557 = vpack.c.b16 %v2527, %v2524
        %v2558 = vpack.c.b16 %v2531, %v2528
        %v2559 = vpack.c.b16 %v2532, %v2529
        %v2560 = vpack.c.b16 %v2533, %v2530
        %v2561 = vpack.c.b16 %v2537, %v2534
        %v2562 = vpack.c.b16 %v2538, %v2535
        %v2563 = vpack.c.b16 %v2539, %v2536
        %v2564 = vpack.c.b16 %v2543, %v2540
        %v2565 = vpack.c.b16 %v2544, %v2541
        %v2566 = vpack.c.b16 %v2545, %v2542
        %v2582 = vsel %vm2019, %v2548, 0
        %v2585 = vsel %vm2019, %v2551, 0
        %v2588 = vsel %vm2019, %v2554, 0
        %v2591 = vsel %vm2019, %v2557, 0
        %v2594 = vsel %vm2019, %v2560, 0
        %v2597 = vsel %vm2019, %v2563, 0
        %v2600 = vsel %vm2019, %v2566, 0
        %2602 = vmatprep.subr.bf16.mxu0 0
        %2603 = vmatpush1.bf16.msra.mxu0 %v2365
        %2604 = vmatprep.subr.bf16.mxu0 0
        %2605 = vmatpush1.bf16.msra.mxu0 %v2363
        %2606 = vmatprep.subr.bf16.mxu0 0
        %2607 = vmatpush1.bf16.msra.mxu0 %v2361
        %2608 = vmatprep.subr.bf16.mxu0 0
        %2609 = vmatpush1.bf16.msra.mxu0 %v2359
        %2610 = vmatprep.subr.bf16.mxu0 0
        %2611 = vmatpush1.bf16.msra.mxu0 %v2311
        %2612 = vmatprep.subr.bf16.mxu0 0
        %2613 = vmatpush1.bf16.msra.mxu0 %v2310
        %2614 = vmatprep.subr.bf16.mxu0 0
        %2615 = vmatpush1.bf16.msra.mxu0 %v2309
        %2616 = vmatprep.subr.bf16.mxu0 0
        %2617 = vmatpush1.bf16.msra.mxu0 %v2308
        %2618 = vmatprep.subr.bf16.mxu0 0
        %2619 = vmatpush2.bf16.msra.mxu0 %v2389
        %2620 = vmatprep.subr.bf16.mxu0 0
        %2621 = vmatpush2.bf16.msra.mxu0 %v2387
        %2622 = vmatprep.subr.bf16.mxu0 0
        %2623 = vmatpush2.bf16.msra.mxu0 %v2385
        %2624 = vmatprep.subr.bf16.mxu0 0
        %2625 = vmatpush2.bf16.msra.mxu0 %v2383
        %2626 = vmatprep.subr.bf16.mxu0 0
        %2627 = vmatpush2.bf16.msra.mxu0 %v2377
        %2628 = vmatprep.subr.bf16.mxu0 0
        %2629 = vmatpush2.bf16.msra.mxu0 %v2375
        %2630 = vmatprep.subr.bf16.mxu0 0
        %2631 = vmatpush2.bf16.msra.mxu0 %v2373
        %2632 = vmatprep.subr.bf16.mxu0 0
        %2633 = vmatpush2.bf16.msra.mxu0 %v2371
        %2634 = vmatprep.mubr.bf16.mxu0 %v2547
        %2635 = vmatmul.mubr.bf16.gmra.mxu0 %v2546
        %v2636 = vpop.f32.mrf.mxu0
        %v2637 = vadd.f32 %v2409, %v2636
        %v2638 = vpop.f32.mrf.mxu0
        %v2639 = vpop.f32.mrf.mxu0
        %v2640 = vadd.f32 %v2414, %v2639
        %v2641 = vpop.f32.mrf.mxu0
        %2642 = vmatprep.mubr.bf16.mxu0 %v2550
        %2643 = vmatmul.mubr.bf16.gmra.mxu0 %v2549
        %v2644 = vpop.f32.mrf.mxu0
        %v2645 = vadd.f32 %v2419, %v2644
        %v2646 = vpop.f32.mrf.mxu0
        %v2647 = vpop.f32.mrf.mxu0
        %v2648 = vadd.f32 %v2424, %v2647
        %v2649 = vpop.f32.mrf.mxu0
        %2650 = vmatprep.mubr.bf16.mxu0 %v2553
        %2651 = vmatmul.mubr.bf16.gmra.mxu0 %v2552
        %v2652 = vpop.f32.mrf.mxu0
        %v2653 = vadd.f32 %v2429, %v2652
        %v2654 = vpop.f32.mrf.mxu0
        %v2655 = vpop.f32.mrf.mxu0
        %v2656 = vadd.f32 %v2434, %v2655
        %v2657 = vpop.f32.mrf.mxu0
        %2658 = vmatprep.mubr.bf16.mxu0 %v2556
        %2659 = vmatmul.mubr.bf16.gmra.mxu0 %v2555
        %v2660 = vpop.f32.mrf.mxu0
        %v2661 = vadd.f32 %v2439, %v2660
        %v2662 = vpop.f32.mrf.mxu0
        %v2663 = vpop.f32.mrf.mxu0
        %v2664 = vadd.f32 %v2444, %v2663
        %v2665 = vpop.f32.mrf.mxu0
        %2666 = vmatprep.mubr.bf16.mxu0 %v2559
        %2667 = vmatmul.mubr.bf16.gmra.mxu0 %v2558
        %v2668 = vpop.f32.mrf.mxu0
        %v2669 = vadd.f32 %v2449, %v2668
        %v2670 = vpop.f32.mrf.mxu0
        %v2671 = vpop.f32.mrf.mxu0
        %v2672 = vadd.f32 %v2454, %v2671
        %v2673 = vpop.f32.mrf.mxu0
        %2674 = vmatprep.mubr.bf16.mxu0 %v2562
        %2675 = vmatmul.mubr.bf16.gmra.mxu0 %v2561
        %v2676 = vpop.f32.mrf.mxu0
        %v2677 = vadd.f32 %v2459, %v2676
        %v2678 = vpop.f32.mrf.mxu0
        %v2679 = vpop.f32.mrf.mxu0
        %v2680 = vadd.f32 %v2464, %v2679
        %v2681 = vpop.f32.mrf.mxu0
        %2682 = vmatprep.mubr.bf16.mxu0 %v2565
        %2683 = vmatmul.mubr.bf16.gmra.mxu0 %v2564
        %v2684 = vpop.f32.mrf.mxu0
        %v2685 = vadd.f32 %v2469, %v2684
        %v2686 = vpop.f32.mrf.mxu0
        %v2687 = vpop.f32.mrf.mxu0
        %v2688 = vadd.f32 %v2474, %v2687
        %v2689 = vpop.f32.mrf.mxu0
        %2690 = vdwg.mxu0
        %2691 = vmatprep.subr.bf16.mxu0 0
        %2692 = vmatpush1.bf16.msra.mxu0 0
        %2693 = vmatprep.subr.bf16.mxu0 0
        %2694 = vmatpush1.bf16.msra.mxu0 0
        %2695 = vmatprep.subr.bf16.mxu0 0
        %2696 = vmatpush1.bf16.msra.mxu0 0
        %2697 = vmatprep.subr.bf16.mxu0 0
        %2698 = vmatpush1.bf16.msra.mxu0 0
        %2699 = vmatprep.subr.bf16.mxu0 0
        %2700 = vmatpush1.bf16.msra.mxu0 %v2401
        %2701 = vmatprep.subr.bf16.mxu0 0
        %2702 = vmatpush1.bf16.msra.mxu0 %v2399
        %2703 = vmatprep.subr.bf16.mxu0 0
        %2704 = vmatpush1.bf16.msra.mxu0 %v2397
        %2705 = vmatprep.subr.bf16.mxu0 0
        %2706 = vmatpush1.bf16.msra.mxu0 %v2395
        %2707 = vmatprep.subr.bf16.mxu0 0
        %2708 = vmatpush2.bf16.msra.mxu0 0
        %2709 = vmatprep.subr.bf16.mxu0 0
        %2710 = vmatpush2.bf16.msra.mxu0 0
        %2711 = vmatprep.subr.bf16.mxu0 0
        %2712 = vmatpush2.bf16.msra.mxu0 0
        %2713 = vmatprep.subr.bf16.mxu0 0
        %2714 = vmatpush2.bf16.msra.mxu0 0
        %2715 = vmatprep.subr.bf16.mxu0 0
        %2716 = vmatpush2.bf16.msra.mxu0 0
        %2717 = vmatprep.subr.bf16.mxu0 0
        %2718 = vmatpush2.bf16.msra.mxu0 0
        %2719 = vmatprep.subr.bf16.mxu0 0
        %2720 = vmatpush2.bf16.msra.mxu0 0
        %2721 = vmatprep.subr.bf16.mxu0 0
        %2722 = vmatpush2.bf16.msra.mxu0 0
        %2723 = vmatprep.mubr.bf16.mxu0 0
        %2724 = vmatmul.mubr.bf16.gmra.mxu0 %v2582
        %v2725 = vpop.f32.mrf.mxu0
        %v2726 = vadd.f32 %v2637, %v2725
        %v2727 = vpop.f32.mrf.mxu0
        %v2728 = vpop.f32.mrf.mxu0
        %v2729 = vadd.f32 %v2640, %v2728
        %v2730 = vpop.f32.mrf.mxu0
        %2731 = vmatprep.mubr.bf16.mxu0 0
        %2732 = vmatmul.mubr.bf16.gmra.mxu0 %v2585
        %v2733 = vpop.f32.mrf.mxu0
        %v2734 = vadd.f32 %v2645, %v2733
        %v2735 = vpop.f32.mrf.mxu0
        %v2736 = vpop.f32.mrf.mxu0
        %v2737 = vadd.f32 %v2648, %v2736
        %v2738 = vpop.f32.mrf.mxu0
        %2739 = vmatprep.mubr.bf16.mxu0 0
        %2740 = vmatmul.mubr.bf16.gmra.mxu0 %v2588
        %v2741 = vpop.f32.mrf.mxu0
        %v2742 = vadd.f32 %v2653, %v2741
        %v2743 = vpop.f32.mrf.mxu0
        %v2744 = vpop.f32.mrf.mxu0
        %v2745 = vadd.f32 %v2656, %v2744
        %v2746 = vpop.f32.mrf.mxu0
        %2747 = vmatprep.mubr.bf16.mxu0 0
        %2748 = vmatmul.mubr.bf16.gmra.mxu0 %v2591
        %v2749 = vpop.f32.mrf.mxu0
        %v2750 = vadd.f32 %v2661, %v2749
        %v2751 = vpop.f32.mrf.mxu0
        %v2752 = vpop.f32.mrf.mxu0
        %v2753 = vadd.f32 %v2664, %v2752
        %v2754 = vpop.f32.mrf.mxu0
        %2755 = vmatprep.mubr.bf16.mxu0 0
        %2756 = vmatmul.mubr.bf16.gmra.mxu0 %v2594
        %v2757 = vpop.f32.mrf.mxu0
        %v2758 = vadd.f32 %v2669, %v2757
        %v2759 = vpop.f32.mrf.mxu0
        %v2760 = vpop.f32.mrf.mxu0
        %v2761 = vadd.f32 %v2672, %v2760
        %v2762 = vpop.f32.mrf.mxu0
        %2763 = vmatprep.mubr.bf16.mxu0 0
        %2764 = vmatmul.mubr.bf16.gmra.mxu0 %v2597
        %v2765 = vpop.f32.mrf.mxu0
        %v2766 = vadd.f32 %v2677, %v2765
        %v2767 = vpop.f32.mrf.mxu0
        %v2768 = vpop.f32.mrf.mxu0
        %v2769 = vadd.f32 %v2680, %v2768
        %v2770 = vpop.f32.mrf.mxu0
        %2771 = vmatprep.mubr.bf16.mxu0 0
        %2772 = vmatmul.mubr.bf16.gmra.mxu0 %v2600
        %v2773 = vpop.f32.mrf.mxu0
        %v2774 = vadd.f32 %v2685, %v2773
        %v2775 = vpop.f32.mrf.mxu0
        %v2776 = vpop.f32.mrf.mxu0
        %v2777 = vadd.f32 %v2688, %v2776
        %v2778 = vpop.f32.mrf.mxu0
        %2779 = vdwg.mxu0
        %vm2780 = vcmp.gt.f32.partialorder %v2726, 0.0
        %vm2781 = vcmp.gt.f32.partialorder %v2729, 0.0
        %vm2782 = vcmp.gt.f32.partialorder %v2734, 0.0
        %vm2783 = vcmp.gt.f32.partialorder %v2737, 0.0
        %vm2784 = vcmp.gt.f32.partialorder %v2742, 0.0
        %vm2785 = vcmp.gt.f32.partialorder %v2745, 0.0
        %vm2786 = vcmp.gt.f32.partialorder %v2750, 0.0
        %vm2787 = vcmp.gt.f32.partialorder %v2753, 0.0
        %vm2788 = vcmp.gt.f32.partialorder %v2758, 0.0
        %vm2789 = vcmp.gt.f32.partialorder %v2761, 0.0
        %vm2790 = vcmp.gt.f32.partialorder %v2766, 0.0
        %vm2791 = vcmp.gt.f32.partialorder %v2769, 0.0
        %vm2792 = vcmp.gt.f32.partialorder %v2774, 0.0
        %vm2793 = vcmp.gt.f32.partialorder %v2777, 0.0
        %v2794 = vmul.f32 %v2726, 1.442695
        %v2795 = vpow.pop %v2794
        %v2796 = vmul.f32 %v2729, 1.442695
        %v2797 = vpow.pop %v2796
        %v2798 = vmul.f32 %v2734, 1.442695
        %v2799 = vpow.pop %v2798
        %v2800 = vmul.f32 %v2737, 1.442695
        %v2801 = vpow.pop %v2800
        %v2802 = vmul.f32 %v2742, 1.442695
        %v2803 = vpow.pop %v2802
        %v2804 = vmul.f32 %v2745, 1.442695
        %v2805 = vpow.pop %v2804
        %v2806 = vmul.f32 %v2750, 1.442695
        %v2807 = vpow.pop %v2806
        %v2808 = vmul.f32 %v2753, 1.442695
        %v2809 = vpow.pop %v2808
        %v2810 = vmul.f32 %v2758, 1.442695
        %v2811 = vpow.pop %v2810
        %v2812 = vmul.f32 %v2761, 1.442695
        %v2813 = vpow.pop %v2812
        %v2814 = vmul.f32 %v2766, 1.442695
        %v2815 = vpow.pop %v2814
        %v2816 = vmul.f32 %v2769, 1.442695
        %v2817 = vpow.pop %v2816
        %v2818 = vmul.f32 %v2774, 1.442695
        %v2819 = vpow.pop %v2818
        %v2820 = vmul.f32 %v2777, 1.442695
        %v2821 = vpow.pop %v2820
        %v2822 = vsub.f32 %v2795, 1.0
        %v2823 = vsub.f32 %v2797, 1.0
        %v2824 = vsub.f32 %v2799, 1.0
        %v2825 = vsub.f32 %v2801, 1.0
        %v2826 = vsub.f32 %v2803, 1.0
        %v2827 = vsub.f32 %v2805, 1.0
        %v2828 = vsub.f32 %v2807, 1.0
        %v2829 = vsub.f32 %v2809, 1.0
        %v2830 = vsub.f32 %v2811, 1.0
        %v2831 = vsub.f32 %v2813, 1.0
        %v2832 = vsub.f32 %v2815, 1.0
        %v2833 = vsub.f32 %v2817, 1.0
        %v2834 = vsub.f32 %v2819, 1.0
        %v2835 = vsub.f32 %v2821, 1.0
        %v2836 = vsel %vm2780, %v2726, %v2822
        %v2837 = vsel %vm2781, %v2729, %v2823
        %v2838 = vsel %vm2782, %v2734, %v2824
        %v2839 = vsel %vm2783, %v2737, %v2825
        %v2840 = vsel %vm2784, %v2742, %v2826
        %v2841 = vsel %vm2785, %v2745, %v2827
        %v2842 = vsel %vm2786, %v2750, %v2828
        %v2843 = vsel %vm2787, %v2753, %v2829
        %v2844 = vsel %vm2788, %v2758, %v2830
        %v2845 = vsel %vm2789, %v2761, %v2831
        %v2846 = vsel %vm2790, %v2766, %v2832
        %v2847 = vsel %vm2791, %v2769, %v2833
        %v2848 = vsel %vm2792, %v2774, %v2834
        %v2849 = vsel %vm2793, %v2777, %v2835
        %v2850 = vpack.c.bf16 %v2837, %v2836
        %v2851 = vpack.c.bf16 %v2839, %v2838
        %v2852 = vpack.c.bf16 %v2841, %v2840
        %v2853 = vpack.c.bf16 %v2843, %v2842
        %v2854 = vpack.c.bf16 %v2845, %v2844
        %v2855 = vpack.c.bf16 %v2847, %v2846
        %v2856 = vpack.c.bf16 %v2849, %v2848
        %v2857 = vld [vmem:[#allocation9] sm:$0xff]
        %v2858 = vld [vmem:[#allocation9 + $0x8] sm:$0x11]
        %v2861 = vunpack.c.l.b16 %v2857
        %v2862 = vunpack.c.h.b16 %v2857
        %v2863 = vunpack.c.l.b16 %v2858
        %v2864 = vunpack.c.h.b16 %v2858
        %v2865 = vpack.c.b16 %v2863, %v2861
        %v2866 = vpack.c.b16 %v2864, %v2862
        %vm2867 = vcmask 80896
        %v2869 = vsel %vm2867, %v2850, 0
        %v2872 = vsel %vm2867, %v2851, 0
        %v2875 = vsel %vm2867, %v2852, 0
        %v2878 = vsel %vm2867, %v2853, 0
        %v2881 = vsel %vm2867, %v2854, 0
        %v2884 = vsel %vm2867, %v2855, 0
        %v2887 = vsel %vm2867, %v2856, 0
        %vm2889 = vcmask 1044480
        %v2891 = vsel %vm2889, %v2865, 0
        %v2894 = vsel %vm2889, %v2866, 0
        %2896 = vmatprep.subr.bf16.mxu0 0
        %2897 = vmatpush1.bf16.msra.mxu0 0
        %2898 = vmatprep.subr.bf16.mxu0 0
        %2899 = vmatpush1.bf16.msra.mxu0 0
        %2900 = vmatprep.subr.bf16.mxu0 0
        %2901 = vmatpush1.bf16.msra.mxu0 0
        %2902 = vmatprep.subr.bf16.mxu0 0
        %2903 = vmatpush1.bf16.msra.mxu0 0
        %2904 = vmatprep.subr.bf16.mxu0 0
        %2905 = vmatpush1.bf16.msra.mxu0 0
        %2906 = vmatprep.subr.bf16.mxu0 0
        %2907 = vmatpush1.bf16.msra.mxu0 0
        %2908 = vmatprep.subr.bf16.mxu0 0
        %2909 = vmatpush1.bf16.msra.mxu0 0
        %2910 = vmatprep.subr.bf16.mxu0 %v2894
        %2911 = vmatpush1.bf16.msra.mxu0 %v2891
        %2912 = vmatprep.subr.bf16.mxu0 0
        %2913 = vmatpush2.bf16.msra.mxu0 0
        %2914 = vmatprep.subr.bf16.mxu0 0
        %2915 = vmatpush2.bf16.msra.mxu0 0
        %2916 = vmatprep.subr.bf16.mxu0 0
        %2917 = vmatpush2.bf16.msra.mxu0 0
        %2918 = vmatprep.subr.bf16.mxu0 0
        %2919 = vmatpush2.bf16.msra.mxu0 0
        %2920 = vmatprep.subr.bf16.mxu0 0
        %2921 = vmatpush2.bf16.msra.mxu0 0
        %2922 = vmatprep.subr.bf16.mxu0 0
        %2923 = vmatpush2.bf16.msra.mxu0 0
        %2924 = vmatprep.subr.bf16.mxu0 0
        %2925 = vmatpush2.bf16.msra.mxu0 0
        %2926 = vmatprep.subr.bf16.mxu0 0
        %2927 = vmatpush2.bf16.msra.mxu0 0
        %2928 = vmatprep.mubr.bf16.mxu0 0
        %2929 = vmatmul.mubr.bf16.gmra.mxu0 %v2869
        %v2930 = vpop.f32.mrf.mxu0
        %v2931 = vadd.f32 0.0, %v2930
        %v2932 = vpop.f32.mrf.mxu0
        %v2933 = vadd.f32 0.0, %v2932
        %v2934 = vpop.f32.mrf.mxu0
        %v2935 = vadd.f32 0.0, %v2934
        %v2936 = vpop.f32.mrf.mxu0
        %v2937 = vadd.f32 0.0, %v2936
        %2938 = vmatprep.mubr.bf16.mxu0 0
        %2939 = vmatmul.mubr.bf16.gmra.mxu0 %v2872
        %v2940 = vpop.f32.mrf.mxu0
        %v2941 = vadd.f32 0.0, %v2940
        %v2942 = vpop.f32.mrf.mxu0
        %v2943 = vadd.f32 0.0, %v2942
        %v2944 = vpop.f32.mrf.mxu0
        %v2945 = vadd.f32 0.0, %v2944
        %v2946 = vpop.f32.mrf.mxu0
        %v2947 = vadd.f32 0.0, %v2946
        %2948 = vmatprep.mubr.bf16.mxu0 0
        %2949 = vmatmul.mubr.bf16.gmra.mxu0 %v2875
        %v2950 = vpop.f32.mrf.mxu0
        %v2951 = vadd.f32 0.0, %v2950
        %v2952 = vpop.f32.mrf.mxu0
        %v2953 = vadd.f32 0.0, %v2952
        %v2954 = vpop.f32.mrf.mxu0
        %v2955 = vadd.f32 0.0, %v2954
        %v2956 = vpop.f32.mrf.mxu0
        %v2957 = vadd.f32 0.0, %v2956
        %2958 = vmatprep.mubr.bf16.mxu0 0
        %2959 = vmatmul.mubr.bf16.gmra.mxu0 %v2878
        %v2960 = vpop.f32.mrf.mxu0
        %v2961 = vadd.f32 0.0, %v2960
        %v2962 = vpop.f32.mrf.mxu0
        %v2963 = vadd.f32 0.0, %v2962
        %v2964 = vpop.f32.mrf.mxu0
        %v2965 = vadd.f32 0.0, %v2964
        %v2966 = vpop.f32.mrf.mxu0
        %v2967 = vadd.f32 0.0, %v2966
        %2968 = vmatprep.mubr.bf16.mxu0 0
        %2969 = vmatmul.mubr.bf16.gmra.mxu0 %v2881
        %v2970 = vpop.f32.mrf.mxu0
        %v2971 = vadd.f32 0.0, %v2970
        %v2972 = vpop.f32.mrf.mxu0
        %v2973 = vadd.f32 0.0, %v2972
        %v2974 = vpop.f32.mrf.mxu0
        %v2975 = vadd.f32 0.0, %v2974
        %v2976 = vpop.f32.mrf.mxu0
        %v2977 = vadd.f32 0.0, %v2976
        %2978 = vmatprep.mubr.bf16.mxu0 0
        %2979 = vmatmul.mubr.bf16.gmra.mxu0 %v2884
        %v2980 = vpop.f32.mrf.mxu0
        %v2981 = vadd.f32 0.0, %v2980
        %v2982 = vpop.f32.mrf.mxu0
        %v2983 = vadd.f32 0.0, %v2982
        %v2984 = vpop.f32.mrf.mxu0
        %v2985 = vadd.f32 0.0, %v2984
        %v2986 = vpop.f32.mrf.mxu0
        %v2987 = vadd.f32 0.0, %v2986
        %2988 = vmatprep.mubr.bf16.mxu0 0
        %2989 = vmatmul.mubr.bf16.gmra.mxu0 %v2887
        %v2990 = vpop.f32.mrf.mxu0
        %v2991 = vadd.f32 0.0, %v2990
        %v2992 = vpop.f32.mrf.mxu0
        %v2993 = vadd.f32 0.0, %v2992
        %v2994 = vpop.f32.mrf.mxu0
        %v2995 = vadd.f32 0.0, %v2994
        %v2996 = vpop.f32.mrf.mxu0
        %v2997 = vadd.f32 0.0, %v2996
        %2998 = vdwg.mxu0
        %v2999 = vld [vmem:[%s13] sm:$0xff]
        %v3000 = vld [vmem:[%s13 + $0x8] sm:$0xff]
        %v3001 = vld [vmem:[%s13 + $0x10] sm:$0xff]
        %v3002 = vld [vmem:[%s13 + $0x18] sm:$0xff]
        %v3003 = vld [vmem:[%s13 + $0x20] sm:$0xff]
        %v3004 = vld [vmem:[%s13 + $0x28] sm:$0xff]
        %v3005 = vld [vmem:[%s13 + $0x30] sm:$0xff]
        %v3006 = vld [vmem:[%s13 + $0x38] sm:$0xff]
        %v3007 = vld [vmem:[%s13 + $0x40] sm:$0xff]
        %v3008 = vld [vmem:[%s13 + $0x48] sm:$0xff]
        %v3009 = vld [vmem:[%s13 + $0x50] sm:$0xff]
        %v3010 = vld [vmem:[%s13 + $0x58] sm:$0xff]
        %v3011 = vld [vmem:[%s13 + $0x60] sm:$0xff]
        %v3012 = vld [vmem:[%s13 + $0x68] sm:$0xff]
        %v3013 = vld [vmem:[%s13 + $0x70] sm:$0xff]
        %v3014 = vld [vmem:[%s13 + $0x78] sm:$0xff]
        %v3015 = vld [vmem:[%s13 + $0x80] sm:$0xff]
        %v3016 = vld [vmem:[%s13 + $0x88] sm:$0xff]
        %v3017 = vld [vmem:[%s13 + $0x90] sm:$0xff]
        %v3018 = vld [vmem:[%s13 + $0x98] sm:$0xff]
        %v3019 = vld [vmem:[%s13 + $0xa0] sm:$0xff]
        %v3020 = vld [vmem:[%s13 + $0xa8] sm:$0xff]
        %v3021 = vld [vmem:[%s13 + $0xb0] sm:$0xff]
        %v3022 = vld [vmem:[%s13 + $0xb8] sm:$0xff]
        %v3023 = vld [vmem:[%s13 + $0xc0] sm:$0xff]
        %v3024 = vld [vmem:[%s13 + $0xc8] sm:$0xff]
        %v3025 = vld [vmem:[%s13 + $0xd0] sm:$0xff]
        %v3026 = vld [vmem:[%s13 + $0xd8] sm:$0xff]
        %v3027 = vmul.f32 %v2931, %v2999
        %v3028 = vmul.f32 %v2933, %v3000
        %v3029 = vmul.f32 %v2935, %v3001
        %v3030 = vmul.f32 %v2937, %v3002
        %v3031 = vmul.f32 %v2941, %v3003
        %v3032 = vmul.f32 %v2943, %v3004
        %v3033 = vmul.f32 %v2945, %v3005
        %v3034 = vmul.f32 %v2947, %v3006
        %v3035 = vmul.f32 %v2951, %v3007
        %v3036 = vmul.f32 %v2953, %v3008
        %v3037 = vmul.f32 %v2955, %v3009
        %v3038 = vmul.f32 %v2957, %v3010
        %v3039 = vmul.f32 %v2961, %v3011
        %v3040 = vmul.f32 %v2963, %v3012
        %v3041 = vmul.f32 %v2965, %v3013
        %v3042 = vmul.f32 %v2967, %v3014
        %v3043 = vmul.f32 %v2971, %v3015
        %v3044 = vmul.f32 %v2973, %v3016
        %v3045 = vmul.f32 %v2975, %v3017
        %v3046 = vmul.f32 %v2977, %v3018
        %v3047 = vmul.f32 %v2981, %v3019
        %v3048 = vmul.f32 %v2983, %v3020
        %v3049 = vmul.f32 %v2985, %v3021
        %v3050 = vmul.f32 %v2987, %v3022
        %v3051 = vmul.f32 %v2991, %v3023
        %v3052 = vmul.f32 %v2993, %v3024
        %v3053 = vmul.f32 %v2995, %v3025
        %v3054 = vmul.f32 %v2997, %v3026
        %v3055 = vadd.f32 %v3027, %v3029
        %v3056 = vadd.f32 %v3055, %v3031
        %v3057 = vadd.f32 %v3056, %v3033
        %v3058 = vadd.f32 %v3057, %v3035
        %v3059 = vadd.f32 %v3058, %v3037
        %v3060 = vadd.f32 %v3059, %v3039
        %v3061 = vadd.f32 %v3060, %v3041
        %v3062 = vadd.f32 %v3061, %v3043
        %v3063 = vadd.f32 %v3062, %v3045
        %v3064 = vadd.f32 %v3063, %v3047
        %v3065 = vadd.f32 %v3064, %v3049
        %v3066 = vadd.f32 %v3065, %v3051
        %v3067 = vadd.f32 %v3066, %v3053
        %v3068 = vrot.slane %v3067, 4
        %v3069 = vadd.f32 %v3067, %v3068
        %v3070 = vrot.slane %v3069, 2
        %v3071 = vadd.f32 %v3069, %v3070
        %v3072 = vrot.slane %v3071, 1
        %v3073 = vadd.f32 %v3071, %v3072
        %vm3074 = vcmask 588800
        %v3075 = vsel %vm3074, %v3028, 0.0
        %v3076 = vsel %vm3074, %v3030, 0.0
        %v3077 = vadd.f32 %v3075, %v3076
        %v3078 = vsel %vm3074, %v3032, 0.0
        %v3079 = vadd.f32 %v3077, %v3078
        %v3080 = vsel %vm3074, %v3034, 0.0
        %v3081 = vadd.f32 %v3079, %v3080
        %v3082 = vsel %vm3074, %v3036, 0.0
        %v3083 = vadd.f32 %v3081, %v3082
        %v3084 = vsel %vm3074, %v3038, 0.0
        %v3085 = vadd.f32 %v3083, %v3084
        %v3086 = vsel %vm3074, %v3040, 0.0
        %v3087 = vadd.f32 %v3085, %v3086
        %v3088 = vsel %vm3074, %v3042, 0.0
        %v3089 = vadd.f32 %v3087, %v3088
        %v3090 = vsel %vm3074, %v3044, 0.0
        %v3091 = vadd.f32 %v3089, %v3090
        %v3092 = vsel %vm3074, %v3046, 0.0
        %v3093 = vadd.f32 %v3091, %v3092
        %v3094 = vsel %vm3074, %v3048, 0.0
        %v3095 = vadd.f32 %v3093, %v3094
        %v3096 = vsel %vm3074, %v3050, 0.0
        %v3097 = vadd.f32 %v3095, %v3096
        %v3098 = vsel %vm3074, %v3052, 0.0
        %v3099 = vadd.f32 %v3097, %v3098
        %v3100 = vsel %vm3074, %v3054, 0.0
        %v3101 = vadd.f32 %v3099, %v3100
        %v3102 = vrot.slane %v3101, 4
        %v3103 = vadd.f32 %v3101, %v3102
        %v3104 = vrot.slane %v3103, 2
        %v3105 = vadd.f32 %v3103, %v3104
        %v3106 = vrot.slane %v3105, 1
        %v3107 = vadd.f32 %v3105, %v3106
        %v3108 = vmul.f32 %v3073, 0.14285715
        %v3109 = vmul.f32 %v3107, 0.14285715
        %v3112 = vcombine.low %v3108, %v3109
        %v3114 = vunpack.c.l.s4 1966171168
        %v3115 = vunpack.c.0.s8 %v3114
        %v3116 = vlaneseq
        %v3117 = vshrl.u32 %v3116, 7
        %v3118 = vsub.s32 %v3115, %v3117
        %v3119 = vrot.slane %v3112, %v3118
        %v3121 = vunpack.c.l.s4 1966171168
        %v3122 = vunpack.c.0.s8 %v3121
        %v3123 = vlaneseq
        %v3124 = vshrl.u32 %v3123, 7
        %v3125 = vsub.s32 %v3122, %v3124
        %v3126 = vrot.slane %v3119, %v3125
        %v3128 = vlaneseq
        %vm3129 = vcmp.ge.s32.totalorder %v3128, 0
        %vm3130 = vcmp.lt.s32.totalorder %v3128, 200
        %vm3131 = vmand %vm3129, %vm3130
        %3132 = vst.msk [vmem:[%s538] sm:$0x3] %vm3131, %v3126
        %p3133 = scmp.lt.s32.totalorder %s28, 1
        %s3134 = scalar_select %p3133, %s28, 1
        %s3135 = smul.addr %s3134, 2
        %s3136 = scalar_lea.vmem %s14, %s3135
        // Predicated region
        $region97: #{_dcn_forward.1} parent=75 // pred_check
          %p3137 = pneg %p345
        $region98: #{_dcn_forward.1} parent=75 // pred_check_branch
          %3139 = sbr.rel (%p3137) target = $region100
        $region99: #{_dcn_forward.1} parent=75 // pred_region
          _
        $region100: #{_dcn_forward.1} parent=75 // pred_fallthru
          _
      $region76: #{_dcn_forward.1} parent=5 // pred_fallthru
        _
      %p3140 = scmp.le.s32.totalorder 2, %s23
      // Predicated region
      $region101: #{_dcn_forward.1} parent=5 // pred_check
        %p3141 = pneg %p3140
      $region102: #{_dcn_forward.1} parent=5 // pred_check_branch
        %3143 = sbr.rel (%p3141) target = $region104
      $region103: #{_dcn_forward.1} parent=5 // pred_region
        %s3144 = ssub.s32 %s23, 2
        // Predicated region
        $region105: #{_dcn_forward.1} parent=103 // pred_check
          %p3145 = pneg %p351
        $region106: #{_dcn_forward.1} parent=103 // pred_check_branch
          %3147 = sbr.rel (%p3145) target = $region108
        $region107: #{_dcn_forward.1} parent=103 // pred_region
          %p3148 = scmp.lt.s32.totalorder %s29, 1
          %s3149 = scalar_select %p3148, %s29, 1
          %s3150 = smul.addr %s3149, 2
          %s3151 = scalar_lea.vmem %s14, %s3150
        $region108: #{_dcn_forward.1} parent=103 // pred_fallthru
          _
      $region104: #{_dcn_forward.1} parent=5 // pred_fallthru
        _
    $region6: #{_dcn_forward.1} parent=1 // loop_footer
      %s27 = sadd.s32 1, %s23
    $region7: #{_dcn_forward.1} parent=1 // loop_footer_branch
      %22 = sbr.rel target = $region3
    $region8: #{_dcn_forward.1} parent=1 // loop_exit
      _
    %3152 = vsyncpa [#allocation3], 1
    %s3153 = scalar_lea.sflag [#allocation3], 1
    %3154 = vsyncpa %s3153, 1
    %3155 = vsyncpa [#allocation5], 1
    %3156 = vsyncpa [#allocation8], 1

</llo_original>
